<compile_context>
chip_gen: v6e
topology: v6e:2x2x1
jax: 0.10.0
libtpu: 0.0.40
codegen_flags: <defaults>
</compile_context>

<pallas_src>
import math

import jax
import jax.numpy as jnp
from jax import lax
from jax.experimental import pallas as pl
from jax.experimental.pallas import tpu as pltpu


# ----------------------------------------------------------------------------
# Fused Pallas kernel: qkv projection -> cosine window attention -> projection
# ----------------------------------------------------------------------------
def _fused_window_attn_kernel(
    x_ref,        # (WB, L, C)  f32
    wqkv_ref,     # (C, 3C)     bf16  (pre-transposed)
    qkvb_ref,     # (1, 3C)     f32   (q_bias | 0 | v_bias)
    wproj_ref,    # (C, C)      bf16  (pre-transposed)
    projb_ref,    # (1, C)      f32
    bias16_ref,   # (H, L, L)   f32   (already 16*sigmoid(raw bias))
    scale_ref,    # (H,)        f32   SMEM (already exp(clamp(logit_scale)))
    o_ref,        # (WB, L, C)  f32
):
    WB, L, C = x_ref.shape
    H = bias16_ref.shape[0]
    hd = C // H
    M = WB * L

    # ---- fused QKV projection: one (M, C) x (C, 3C) matmul, bf16 on the MXU ----
    x2 = x_ref[...].reshape(M, C)
    qkv = (
        jnp.dot(x2.astype(jnp.bfloat16), wqkv_ref[...],
                preferred_element_type=jnp.float32)
        + qkvb_ref[...]
    )  # (M, 3C) f32

    head_outs = []
    for h in range(H):  # static unroll, H is small
        # static lane slices of the packed qkv activation (q | k | v layout)
        q = qkv[:, h * hd:(h + 1) * hd].reshape(WB, L, hd)
        k = qkv[:, C + h * hd:C + (h + 1) * hd].reshape(WB, L, hd)
        v = qkv[:, 2 * C + h * hd:2 * C + (h + 1) * hd].reshape(WB, L, hd)

        # F.normalize(dim=-1): x / max(||x||, 1e-12)   (f32, EUP rsqrt)
        qn = q * lax.rsqrt(jnp.maximum(jnp.sum(q * q, -1, keepdims=True), 1e-24))
        kn = k * lax.rsqrt(jnp.maximum(jnp.sum(k * k, -1, keepdims=True), 1e-24))

        # cosine attention logits, batched over the window axis (f32)
        s = jnp.einsum("bqd,bkd->bqk", qn, kn,
                       preferred_element_type=jnp.float32)        # (WB, L, L)
        # precomputed logit scale (SMEM scalar) + precomputed 16*sigmoid bias
        s = s * scale_ref[h] + bias16_ref[h]

        # numerically-stable softmax; approx reciprocal lands on the EUP slot
        s = s - jnp.max(s, axis=-1, keepdims=True)
        p = jnp.exp(s)
        p = p * pl.reciprocal(jnp.sum(p, axis=-1, keepdims=True), approx=True)

        # attn @ v   (bf16 operands, f32 accumulation)
        o_h = jnp.einsum("bqk,bkd->bqd",
                         p.astype(jnp.bfloat16), v.astype(jnp.bfloat16),
                         preferred_element_type=jnp.float32)      # (WB, L, hd)
        head_outs.append(o_h.reshape(M, hd))

    # lane-dense (M, C) activation; heads concatenated on the lane axis, stays in VMEM
    o_cat = jnp.concatenate(head_outs, axis=-1)                    # (M, C) f32

    # fused output projection
    out = (
        jnp.dot(o_cat.astype(jnp.bfloat16), wproj_ref[...],
                preferred_element_type=jnp.float32)
        + projb_ref[...]
    )                                                              # (M, C) f32
    o_ref[...] = out.reshape(WB, L, C).astype(o_ref.dtype)


# ----------------------------------------------------------------------------
# Parameter-side buffers (relative coords table / index) — plain JAX glue
# ----------------------------------------------------------------------------
def build_relative_tables(window_size):
    Wh, Ww, Wd = window_size
    rch = jnp.arange(-(Wh - 1), Wh, dtype=jnp.float32)
    rcw = jnp.arange(-(Ww - 1), Ww, dtype=jnp.float32)
    rcd = jnp.arange(-(Wd - 1), Wd, dtype=jnp.float32)
    table = jnp.stack(jnp.meshgrid(rch, rcw, rcd, indexing="ij"), axis=-1)
    table = table / jnp.array([Wh - 1, Ww - 1, Wd - 1], jnp.float32)
    table = table * 8.0
    table = jnp.sign(table) * jnp.log2(jnp.abs(table) + 1.0) / math.log2(8)
    table_flat = table.reshape(-1, 3)  # ((2Wh-1)(2Ww-1)(2Wd-1), 3)

    coords = jnp.stack(
        jnp.meshgrid(jnp.arange(Wh), jnp.arange(Ww), jnp.arange(Wd), indexing="ij")
    )  # (3, Wh, Ww, Wd)
    cf = coords.reshape(3, -1)
    rel = cf[:, :, None] - cf[:, None, :]  # (3, L, L)
    rel = jnp.transpose(rel, (1, 2, 0))
    rel = rel + jnp.array([Wh - 1, Ww - 1, Wd - 1])
    rel = rel * jnp.array([(2 * Ww - 1) * (2 * Wd - 1), 2 * Wd - 1, 1])
    rpi = rel.sum(-1).astype(jnp.int32)  # (L, L)
    return table_flat, rpi


def relative_position_bias_raw(params, table_flat, rpi, num_heads, L):
    # cpb_mlp: Linear(3,512)+ReLU+Linear(512,H, no bias), then gather by index.
    h = jax.nn.relu(table_flat @ params["w_cpb1"].T + params["b_cpb1"])
    tbl = h @ params["w_cpb2"].T  # (T, H)
    bias = tbl[rpi.reshape(-1)].reshape(L, L, num_heads)
    return jnp.transpose(bias, (2, 0, 1))  # (H, L, L) raw bias (before 16*sigmoid)


# ----------------------------------------------------------------------------
# Forward (single fused pallas_call) and pure-JAX reference
# ----------------------------------------------------------------------------
def window_attention_pseudo3d(x, params, window_size, num_heads):
    # TODO(synk): shifted-window `mask` path not implemented; forward uses mask=None.
    B_, D, N, C = x.shape
    L = D * N
    H = num_heads

    # --- parameter-side preprocessing (tiny, runs once / fused by XLA) ---
    table_flat, rpi = build_relative_tables(window_size)
    bias_raw = relative_position_bias_raw(params, table_flat, rpi, H, L)   # (H, L, L)
    bias16 = (16.0 * jax.nn.sigmoid(bias_raw)).astype(jnp.float32)
    scale = jnp.exp(
        jnp.minimum(params["logit_scale"].reshape(H), math.log(1.0 / 0.01))
    ).astype(jnp.float32)                                                  # (H,)

    w_qkv_t = params["w_qkv"].T.astype(jnp.bfloat16)                       # (C, 3C)
    qkv_bias = jnp.concatenate(
        [params["q_bias"], jnp.zeros((C,), jnp.float32), params["v_bias"]]
    ).reshape(1, 3 * C).astype(jnp.float32)
    w_proj_t = params["w_proj"].T.astype(jnp.bfloat16)                     # (C, C)
    b_proj = params["b_proj"].reshape(1, C).astype(jnp.float32)

    x3 = x.reshape(B_, L, C).astype(jnp.float32)

    # windows per grid step (amortize ~600-cycle per-step overhead); must divide B_
    WB = next(w for w in (64, 32, 16, 8, 4, 2, 1) if B_ % w == 0)

    out = pl.pallas_call(
        _fused_window_attn_kernel,
        out_shape=jax.ShapeDtypeStruct((B_, L, C), jnp.float32),
        grid=(B_ // WB,),
        in_specs=[
            pl.BlockSpec((WB, L, C), lambda i: (i, 0, 0)),          # x block
            pl.BlockSpec((C, 3 * C), lambda i: (0, 0)),             # w_qkv^T (bf16)
            pl.BlockSpec((1, 3 * C), lambda i: (0, 0)),             # qkv bias
            pl.BlockSpec((C, C), lambda i: (0, 0)),                 # w_proj^T (bf16)
            pl.BlockSpec((1, C), lambda i: (0, 0)),                 # proj bias
            pl.BlockSpec((H, L, L), lambda i: (0, 0, 0)),           # 16*sigmoid bias
            pl.BlockSpec(memory_space=pltpu.MemorySpace.SMEM),      # logit scales
        ],
        out_specs=pl.BlockSpec((WB, L, C), lambda i: (i, 0, 0)),
        compiler_params=pltpu.CompilerParams(
            dimension_semantics=("parallel",)),
    )(x3, w_qkv_t, qkv_bias, w_proj_t, b_proj, bias16, scale)
    return out


def reference_forward(x, params, window_size, num_heads):
    B_, D, N, C = x.shape
    L = D * N
    hd = C // num_heads
    table_flat, rpi = build_relative_tables(window_size)
    bias_raw = relative_position_bias_raw(params, table_flat, rpi, num_heads, L)

    xr = x.reshape(B_, L, C)
    qkv_bias = jnp.concatenate(
        [params["q_bias"], jnp.zeros((C,), jnp.float32), params["v_bias"]]
    )
    qkv = xr @ params["w_qkv"].T + qkv_bias
    qkv = jnp.transpose(qkv.reshape(B_, L, 3, num_heads, hd), (2, 0, 3, 1, 4))
    q, k, v = qkv[0], qkv[1], qkv[2]
    qn = q / jnp.maximum(jnp.sqrt(jnp.sum(q * q, -1, keepdims=True)), 1e-12)
    kn = k / jnp.maximum(jnp.sqrt(jnp.sum(k * k, -1, keepdims=True)), 1e-12)
    attn = jnp.einsum("bhld,bhmd->bhlm", qn, kn, precision=jax.lax.Precision.HIGHEST)
    scale = jnp.exp(jnp.minimum(params["logit_scale"], math.log(1.0 / 0.01)))
    attn = attn * scale[None]
    attn = attn + (16.0 * jax.nn.sigmoid(bias_raw))[None]
    attn = jax.nn.softmax(attn, axis=-1)
    out = jnp.einsum("bhlm,bhmd->bhld", attn, v, precision=jax.lax.Precision.HIGHEST)
    out = jnp.transpose(out, (0, 2, 1, 3)).reshape(B_, L, C)
    return out @ params["w_proj"].T + params["b_proj"]


# ----------------------------------------------------------------------------
if __name__ == "__main__":
    dim = 32
    num_heads = 4
    window_size = (4, 4, 2)  # (Wh, Ww, Wd)
    Wh, Ww, Wd = window_size
    N = Wh * Ww   # tokens per depth slice
    D = Wd        # depth slices
    B_ = 2        # num_windows * batch

    key = jax.random.PRNGKey(0)
    ks = jax.random.split(key, 8)
    params = {
        "w_qkv": 0.1 * jax.random.normal(ks[0], (3 * dim, dim), jnp.float32),
        "q_bias": 0.1 * jax.random.normal(ks[1], (dim,), jnp.float32),
        "v_bias": 0.1 * jax.random.normal(ks[2], (dim,), jnp.float32),
        "logit_scale": jnp.log(10.0 * jnp.ones((num_heads, 1, 1), jnp.float32)),
        "w_cpb1": 0.1 * jax.random.normal(ks[3], (512, 3), jnp.float32),
        "b_cpb1": 0.1 * jax.random.normal(ks[4], (512,), jnp.float32),
        "w_cpb2": 0.1 * jax.random.normal(ks[5], (num_heads, 512), jnp.float32),
        "w_proj": 0.1 * jax.random.normal(ks[6], (dim, dim), jnp.float32),
        "b_proj": 0.1 * jax.random.normal(ks[7], (dim,), jnp.float32),
    }

    x = jax.random.normal(jax.random.PRNGKey(0), (B_, D, N, dim), jnp.float32)

    fwd = jax.jit(window_attention_pseudo3d,
                  static_argnames=("window_size", "num_heads"))
    out = fwd(x, params, window_size=window_size, num_heads=num_heads)
    out = jax.block_until_ready(out)

    ref = reference_forward(x, params, window_size, num_heads)
    assert out.shape == (B_, N * D, dim)
    # bf16 MXU operands (f32 accumulation); observed max-abs error is well
    # below this bf16-sized tolerance.
    assert float(jnp.max(jnp.abs(out - ref))) < 2e-2

    print("KERNEL_OK")
</pallas_src>

<mosaic_0001>
module attributes {stable_mosaic.version = 11 : i64} {
  func.func @_fused_window_attn_kernel(%arg0: i32, %arg1: memref<2x32x32xf32, #tpu.memory_space<vmem>>, %arg2: memref<32x96xbf16, #tpu.memory_space<vmem>>, %arg3: memref<1x96xf32, #tpu.memory_space<vmem>>, %arg4: memref<32x32xbf16, #tpu.memory_space<vmem>>, %arg5: memref<1x32xf32, #tpu.memory_space<vmem>>, %arg6: memref<4x32x32xf32, #tpu.memory_space<vmem>>, %arg7: memref<4xf32, #tpu.memory_space<smem>>, %arg8: memref<2x32x32xf32, #tpu.memory_space<vmem>>) attributes {dimension_semantics = [#tpu.dimension_semantics<parallel>], iteration_bounds = array<i64: 1>, scalar_prefetch = 0 : i64, scratch_operands = 0 : i64, tpu.core_type = #tpu.core_type<tc>, window_params = [{transform_indices = @transform_0, window_bounds = array<i64: 2, 32, 32>}, {pipeline_mode = #tpu.pipeline_mode<synchronous>, transform_indices = @transform_1, window_bounds = array<i64: 32, 96>}, {pipeline_mode = #tpu.pipeline_mode<synchronous>, transform_indices = @transform_2, window_bounds = array<i64: 1, 96>}, {pipeline_mode = #tpu.pipeline_mode<synchronous>, transform_indices = @transform_3, window_bounds = array<i64: 32, 32>}, {pipeline_mode = #tpu.pipeline_mode<synchronous>, transform_indices = @transform_4, window_bounds = array<i64: 1, 32>}, {pipeline_mode = #tpu.pipeline_mode<synchronous>, transform_indices = @transform_5, window_bounds = array<i64: 4, 32, 32>}, {transform_indices = @transform_6, window_bounds = array<i64: 4>}, {transform_indices = @transform_7, window_bounds = array<i64: 2, 32, 32>}]} {
    %c0 = arith.constant 0 : index
    %c0_0 = arith.constant 0 : index
    %c0_1 = arith.constant 0 : index
    %0 = vector.load %arg1[%c0, %c0_0, %c0_1] : memref<2x32x32xf32, #tpu.memory_space<vmem>>, vector<2x32x32xf32>
    %1 = vector.shape_cast %0 : vector<2x32x32xf32> to vector<64x32xf32>
    %2 = arith.truncf %1 : vector<64x32xf32> to vector<64x32xbf16>
    %c0_2 = arith.constant 0 : index
    %c0_3 = arith.constant 0 : index
    %3 = vector.load %arg2[%c0_2, %c0_3] : memref<32x96xbf16, #tpu.memory_space<vmem>>, vector<32x96xbf16>
    %cst = arith.constant dense<0.000000e+00> : vector<64x96xf32>
    %4 = tpu.matmul %2, %3, %cst {dimension_numbers = #tpu.dot_dimension_numbers<[1], [0], [0], [1], [0, 0, 1, 1], [], []>} : vector<64x32xbf16>, vector<32x96xbf16>, vector<64x96xf32> -> vector<64x96xf32>
    %c0_4 = arith.constant 0 : index
    %c0_5 = arith.constant 0 : index
    %5 = vector.load %arg3[%c0_4, %c0_5] : memref<1x96xf32, #tpu.memory_space<vmem>>, vector<1x96xf32>
    %6 = vector.broadcast %5 : vector<1x96xf32> to vector<64x96xf32>
    %7 = arith.addf %4, %6 : vector<64x96xf32>
    %8 = vector.extract_strided_slice %7 {offsets = [0, 0], sizes = [64, 8], strides = [1, 1]} : vector<64x96xf32> to vector<64x8xf32>
    %9 = vector.shape_cast %8 : vector<64x8xf32> to vector<2x32x8xf32>
    %10 = vector.extract_strided_slice %7 {offsets = [0, 32], sizes = [64, 8], strides = [1, 1]} : vector<64x96xf32> to vector<64x8xf32>
    %11 = vector.shape_cast %10 : vector<64x8xf32> to vector<2x32x8xf32>
    %12 = vector.extract_strided_slice %7 {offsets = [0, 64], sizes = [64, 8], strides = [1, 1]} : vector<64x96xf32> to vector<64x8xf32>
    %13 = vector.shape_cast %12 : vector<64x8xf32> to vector<2x32x8xf32>
    %14 = arith.mulf %9, %9 : vector<2x32x8xf32>
    %cst_6 = arith.constant dense<0.000000e+00> : vector<2x32xf32>
    %15 = vector.multi_reduction <add>, %14, %cst_6 [2] : vector<2x32x8xf32> to vector<2x32xf32>
    %16 = vector.shape_cast %15 : vector<2x32xf32> to vector<2x32x1xf32>
    %cst_7 = arith.constant 1.000000e-24 : f32
    %17 = vector.broadcast %cst_7 : f32 to vector<2x32x1xf32>
    %18 = arith.maximumf %16, %17 : vector<2x32x1xf32>
    %19 = math.rsqrt %18 : vector<2x32x1xf32>
    %20 = vector.broadcast %19 : vector<2x32x1xf32> to vector<2x32x8xf32>
    %21 = arith.mulf %9, %20 : vector<2x32x8xf32>
    %22 = arith.mulf %11, %11 : vector<2x32x8xf32>
    %cst_8 = arith.constant dense<0.000000e+00> : vector<2x32xf32>
    %23 = vector.multi_reduction <add>, %22, %cst_8 [2] : vector<2x32x8xf32> to vector<2x32xf32>
    %24 = vector.shape_cast %23 : vector<2x32xf32> to vector<2x32x1xf32>
    %cst_9 = arith.constant 1.000000e-24 : f32
    %25 = vector.broadcast %cst_9 : f32 to vector<2x32x1xf32>
    %26 = arith.maximumf %24, %25 : vector<2x32x1xf32>
    %27 = math.rsqrt %26 : vector<2x32x1xf32>
    %28 = vector.broadcast %27 : vector<2x32x1xf32> to vector<2x32x8xf32>
    %29 = arith.mulf %11, %28 : vector<2x32x8xf32>
    "tpu.trace_start"() <{level = 10 : i32, message = "bqd,bkd->bqk"}> : () -> ()
    %cst_10 = arith.constant dense<0.000000e+00> : vector<2x32x32xf32>
    %30 = tpu.matmul %21, %29, %cst_10 {dimension_numbers = #tpu.dot_dimension_numbers<[2], [2], [1], [1], [0, 0, 0, 1, 1, 1], [0], [0]>} : vector<2x32x8xf32>, vector<2x32x8xf32>, vector<2x32x32xf32> -> vector<2x32x32xf32>
    "tpu.trace_stop"() : () -> ()
    %c0_11 = arith.constant 0 : index
    %31 = memref.load %arg7[%c0_11] : memref<4xf32, #tpu.memory_space<smem>>
    %32 = vector.broadcast %31 : f32 to vector<2x32x32xf32>
    %33 = arith.mulf %30, %32 : vector<2x32x32xf32>
    %c0_12 = arith.constant 0 : index
    %c0_13 = arith.constant 0 : index
    %c0_14 = arith.constant 0 : index
    %34 = vector.load %arg6[%c0_12, %c0_13, %c0_14] : memref<4x32x32xf32, #tpu.memory_space<vmem>>, vector<1x32x32xf32>
    %35 = vector.shape_cast %34 : vector<1x32x32xf32> to vector<32x32xf32>
    %36 = vector.shape_cast %35 : vector<32x32xf32> to vector<1x32x32xf32>
    %37 = vector.broadcast %36 : vector<1x32x32xf32> to vector<2x32x32xf32>
    %38 = arith.addf %33, %37 : vector<2x32x32xf32>
    %cst_15 = arith.constant dense<0xFF800000> : vector<2x32xf32>
    %39 = vector.multi_reduction <maximumf>, %38, %cst_15 [2] : vector<2x32x32xf32> to vector<2x32xf32>
    %40 = vector.shape_cast %39 : vector<2x32xf32> to vector<2x32x1xf32>
    %41 = vector.broadcast %40 : vector<2x32x1xf32> to vector<2x32x32xf32>
    %42 = arith.subf %38, %41 : vector<2x32x32xf32>
    %43 = math.exp %42 : vector<2x32x32xf32>
    %cst_16 = arith.constant dense<0.000000e+00> : vector<2x32xf32>
    %44 = vector.multi_reduction <add>, %43, %cst_16 [2] : vector<2x32x32xf32> to vector<2x32xf32>
    %45 = vector.shape_cast %44 : vector<2x32xf32> to vector<2x32x1xf32>
    %46 = tpu.reciprocal %45 {approx = true} : vector<2x32x1xf32> -> vector<2x32x1xf32>
    %47 = vector.broadcast %46 : vector<2x32x1xf32> to vector<2x32x32xf32>
    %48 = arith.mulf %43, %47 : vector<2x32x32xf32>
    %49 = arith.truncf %48 : vector<2x32x32xf32> to vector<2x32x32xbf16>
    %50 = arith.truncf %13 : vector<2x32x8xf32> to vector<2x32x8xbf16>
    "tpu.trace_start"() <{level = 10 : i32, message = "bqk,bkd->bqd"}> : () -> ()
    %cst_17 = arith.constant dense<0.000000e+00> : vector<2x32x8xf32>
    %51 = tpu.matmul %49, %50, %cst_17 {dimension_numbers = #tpu.dot_dimension_numbers<[2], [1], [1], [2], [0, 0, 0, 1, 1, 2], [0], [0]>} : vector<2x32x32xbf16>, vector<2x32x8xbf16>, vector<2x32x8xf32> -> vector<2x32x8xf32>
    "tpu.trace_stop"() : () -> ()
    %52 = vector.shape_cast %51 : vector<2x32x8xf32> to vector<64x8xf32>
    %53 = vector.extract_strided_slice %7 {offsets = [0, 8], sizes = [64, 8], strides = [1, 1]} : vector<64x96xf32> to vector<64x8xf32>
    %54 = vector.shape_cast %53 : vector<64x8xf32> to vector<2x32x8xf32>
    %55 = vector.extract_strided_slice %7 {offsets = [0, 40], sizes = [64, 8], strides = [1, 1]} : vector<64x96xf32> to vector<64x8xf32>
    %56 = vector.shape_cast %55 : vector<64x8xf32> to vector<2x32x8xf32>
    %57 = vector.extract_strided_slice %7 {offsets = [0, 72], sizes = [64, 8], strides = [1, 1]} : vector<64x96xf32> to vector<64x8xf32>
    %58 = vector.shape_cast %57 : vector<64x8xf32> to vector<2x32x8xf32>
    %59 = arith.mulf %54, %54 : vector<2x32x8xf32>
    %cst_18 = arith.constant dense<0.000000e+00> : vector<2x32xf32>
    %60 = vector.multi_reduction <add>, %59, %cst_18 [2] : vector<2x32x8xf32> to vector<2x32xf32>
    %61 = vector.shape_cast %60 : vector<2x32xf32> to vector<2x32x1xf32>
    %cst_19 = arith.constant 1.000000e-24 : f32
    %62 = vector.broadcast %cst_19 : f32 to vector<2x32x1xf32>
    %63 = arith.maximumf %61, %62 : vector<2x32x1xf32>
    %64 = math.rsqrt %63 : vector<2x32x1xf32>
    %65 = vector.broadcast %64 : vector<2x32x1xf32> to vector<2x32x8xf32>
    %66 = arith.mulf %54, %65 : vector<2x32x8xf32>
    %67 = arith.mulf %56, %56 : vector<2x32x8xf32>
    %cst_20 = arith.constant dense<0.000000e+00> : vector<2x32xf32>
    %68 = vector.multi_reduction <add>, %67, %cst_20 [2] : vector<2x32x8xf32> to vector<2x32xf32>
    %69 = vector.shape_cast %68 : vector<2x32xf32> to vector<2x32x1xf32>
    %cst_21 = arith.constant 1.000000e-24 : f32
    %70 = vector.broadcast %cst_21 : f32 to vector<2x32x1xf32>
    %71 = arith.maximumf %69, %70 : vector<2x32x1xf32>
    %72 = math.rsqrt %71 : vector<2x32x1xf32>
    %73 = vector.broadcast %72 : vector<2x32x1xf32> to vector<2x32x8xf32>
    %74 = arith.mulf %56, %73 : vector<2x32x8xf32>
    "tpu.trace_start"() <{level = 10 : i32, message = "bqd,bkd->bqk"}> : () -> ()
    %cst_22 = arith.constant dense<0.000000e+00> : vector<2x32x32xf32>
    %75 = tpu.matmul %66, %74, %cst_22 {dimension_numbers = #tpu.dot_dimension_numbers<[2], [2], [1], [1], [0, 0, 0, 1, 1, 1], [0], [0]>} : vector<2x32x8xf32>, vector<2x32x8xf32>, vector<2x32x32xf32> -> vector<2x32x32xf32>
    "tpu.trace_stop"() : () -> ()
    %c1 = arith.constant 1 : index
    %76 = memref.load %arg7[%c1] : memref<4xf32, #tpu.memory_space<smem>>
    %77 = vector.broadcast %76 : f32 to vector<2x32x32xf32>
    %78 = arith.mulf %75, %77 : vector<2x32x32xf32>
    %c1_23 = arith.constant 1 : index
    %c0_24 = arith.constant 0 : index
    %c0_25 = arith.constant 0 : index
    %79 = vector.load %arg6[%c1_23, %c0_24, %c0_25] : memref<4x32x32xf32, #tpu.memory_space<vmem>>, vector<1x32x32xf32>
    %80 = vector.shape_cast %79 : vector<1x32x32xf32> to vector<32x32xf32>
    %81 = vector.shape_cast %80 : vector<32x32xf32> to vector<1x32x32xf32>
    %82 = vector.broadcast %81 : vector<1x32x32xf32> to vector<2x32x32xf32>
    %83 = arith.addf %78, %82 : vector<2x32x32xf32>
    %cst_26 = arith.constant dense<0xFF800000> : vector<2x32xf32>
    %84 = vector.multi_reduction <maximumf>, %83, %cst_26 [2] : vector<2x32x32xf32> to vector<2x32xf32>
    %85 = vector.shape_cast %84 : vector<2x32xf32> to vector<2x32x1xf32>
    %86 = vector.broadcast %85 : vector<2x32x1xf32> to vector<2x32x32xf32>
    %87 = arith.subf %83, %86 : vector<2x32x32xf32>
    %88 = math.exp %87 : vector<2x32x32xf32>
    %cst_27 = arith.constant dense<0.000000e+00> : vector<2x32xf32>
    %89 = vector.multi_reduction <add>, %88, %cst_27 [2] : vector<2x32x32xf32> to vector<2x32xf32>
    %90 = vector.shape_cast %89 : vector<2x32xf32> to vector<2x32x1xf32>
    %91 = tpu.reciprocal %90 {approx = true} : vector<2x32x1xf32> -> vector<2x32x1xf32>
    %92 = vector.broadcast %91 : vector<2x32x1xf32> to vector<2x32x32xf32>
    %93 = arith.mulf %88, %92 : vector<2x32x32xf32>
    %94 = arith.truncf %93 : vector<2x32x32xf32> to vector<2x32x32xbf16>
    %95 = arith.truncf %58 : vector<2x32x8xf32> to vector<2x32x8xbf16>
    "tpu.trace_start"() <{level = 10 : i32, message = "bqk,bkd->bqd"}> : () -> ()
    %cst_28 = arith.constant dense<0.000000e+00> : vector<2x32x8xf32>
    %96 = tpu.matmul %94, %95, %cst_28 {dimension_numbers = #tpu.dot_dimension_numbers<[2], [1], [1], [2], [0, 0, 0, 1, 1, 2], [0], [0]>} : vector<2x32x32xbf16>, vector<2x32x8xbf16>, vector<2x32x8xf32> -> vector<2x32x8xf32>
    "tpu.trace_stop"() : () -> ()
    %97 = vector.shape_cast %96 : vector<2x32x8xf32> to vector<64x8xf32>
    %98 = vector.extract_strided_slice %7 {offsets = [0, 16], sizes = [64, 8], strides = [1, 1]} : vector<64x96xf32> to vector<64x8xf32>
    %99 = vector.shape_cast %98 : vector<64x8xf32> to vector<2x32x8xf32>
    %100 = vector.extract_strided_slice %7 {offsets = [0, 48], sizes = [64, 8], strides = [1, 1]} : vector<64x96xf32> to vector<64x8xf32>
    %101 = vector.shape_cast %100 : vector<64x8xf32> to vector<2x32x8xf32>
    %102 = vector.extract_strided_slice %7 {offsets = [0, 80], sizes = [64, 8], strides = [1, 1]} : vector<64x96xf32> to vector<64x8xf32>
    %103 = vector.shape_cast %102 : vector<64x8xf32> to vector<2x32x8xf32>
    %104 = arith.mulf %99, %99 : vector<2x32x8xf32>
    %cst_29 = arith.constant dense<0.000000e+00> : vector<2x32xf32>
    %105 = vector.multi_reduction <add>, %104, %cst_29 [2] : vector<2x32x8xf32> to vector<2x32xf32>
    %106 = vector.shape_cast %105 : vector<2x32xf32> to vector<2x32x1xf32>
    %cst_30 = arith.constant 1.000000e-24 : f32
    %107 = vector.broadcast %cst_30 : f32 to vector<2x32x1xf32>
    %108 = arith.maximumf %106, %107 : vector<2x32x1xf32>
    %109 = math.rsqrt %108 : vector<2x32x1xf32>
    %110 = vector.broadcast %109 : vector<2x32x1xf32> to vector<2x32x8xf32>
    %111 = arith.mulf %99, %110 : vector<2x32x8xf32>
    %112 = arith.mulf %101, %101 : vector<2x32x8xf32>
    %cst_31 = arith.constant dense<0.000000e+00> : vector<2x32xf32>
    %113 = vector.multi_reduction <add>, %112, %cst_31 [2] : vector<2x32x8xf32> to vector<2x32xf32>
    %114 = vector.shape_cast %113 : vector<2x32xf32> to vector<2x32x1xf32>
    %cst_32 = arith.constant 1.000000e-24 : f32
    %115 = vector.broadcast %cst_32 : f32 to vector<2x32x1xf32>
    %116 = arith.maximumf %114, %115 : vector<2x32x1xf32>
    %117 = math.rsqrt %116 : vector<2x32x1xf32>
    %118 = vector.broadcast %117 : vector<2x32x1xf32> to vector<2x32x8xf32>
    %119 = arith.mulf %101, %118 : vector<2x32x8xf32>
    "tpu.trace_start"() <{level = 10 : i32, message = "bqd,bkd->bqk"}> : () -> ()
    %cst_33 = arith.constant dense<0.000000e+00> : vector<2x32x32xf32>
    %120 = tpu.matmul %111, %119, %cst_33 {dimension_numbers = #tpu.dot_dimension_numbers<[2], [2], [1], [1], [0, 0, 0, 1, 1, 1], [0], [0]>} : vector<2x32x8xf32>, vector<2x32x8xf32>, vector<2x32x32xf32> -> vector<2x32x32xf32>
    "tpu.trace_stop"() : () -> ()
    %c2 = arith.constant 2 : index
    %121 = memref.load %arg7[%c2] : memref<4xf32, #tpu.memory_space<smem>>
    %122 = vector.broadcast %121 : f32 to vector<2x32x32xf32>
    %123 = arith.mulf %120, %122 : vector<2x32x32xf32>
    %c2_34 = arith.constant 2 : index
    %c0_35 = arith.constant 0 : index
    %c0_36 = arith.constant 0 : index
    %124 = vector.load %arg6[%c2_34, %c0_35, %c0_36] : memref<4x32x32xf32, #tpu.memory_space<vmem>>, vector<1x32x32xf32>
    %125 = vector.shape_cast %124 : vector<1x32x32xf32> to vector<32x32xf32>
    %126 = vector.shape_cast %125 : vector<32x32xf32> to vector<1x32x32xf32>
    %127 = vector.broadcast %126 : vector<1x32x32xf32> to vector<2x32x32xf32>
    %128 = arith.addf %123, %127 : vector<2x32x32xf32>
    %cst_37 = arith.constant dense<0xFF800000> : vector<2x32xf32>
    %129 = vector.multi_reduction <maximumf>, %128, %cst_37 [2] : vector<2x32x32xf32> to vector<2x32xf32>
    %130 = vector.shape_cast %129 : vector<2x32xf32> to vector<2x32x1xf32>
    %131 = vector.broadcast %130 : vector<2x32x1xf32> to vector<2x32x32xf32>
    %132 = arith.subf %128, %131 : vector<2x32x32xf32>
    %133 = math.exp %132 : vector<2x32x32xf32>
    %cst_38 = arith.constant dense<0.000000e+00> : vector<2x32xf32>
    %134 = vector.multi_reduction <add>, %133, %cst_38 [2] : vector<2x32x32xf32> to vector<2x32xf32>
    %135 = vector.shape_cast %134 : vector<2x32xf32> to vector<2x32x1xf32>
    %136 = tpu.reciprocal %135 {approx = true} : vector<2x32x1xf32> -> vector<2x32x1xf32>
    %137 = vector.broadcast %136 : vector<2x32x1xf32> to vector<2x32x32xf32>
    %138 = arith.mulf %133, %137 : vector<2x32x32xf32>
    %139 = arith.truncf %138 : vector<2x32x32xf32> to vector<2x32x32xbf16>
    %140 = arith.truncf %103 : vector<2x32x8xf32> to vector<2x32x8xbf16>
    "tpu.trace_start"() <{level = 10 : i32, message = "bqk,bkd->bqd"}> : () -> ()
    %cst_39 = arith.constant dense<0.000000e+00> : vector<2x32x8xf32>
    %141 = tpu.matmul %139, %140, %cst_39 {dimension_numbers = #tpu.dot_dimension_numbers<[2], [1], [1], [2], [0, 0, 0, 1, 1, 2], [0], [0]>} : vector<2x32x32xbf16>, vector<2x32x8xbf16>, vector<2x32x8xf32> -> vector<2x32x8xf32>
    "tpu.trace_stop"() : () -> ()
    %142 = vector.shape_cast %141 : vector<2x32x8xf32> to vector<64x8xf32>
    %143 = vector.extract_strided_slice %7 {offsets = [0, 24], sizes = [64, 8], strides = [1, 1]} : vector<64x96xf32> to vector<64x8xf32>
    %144 = vector.shape_cast %143 : vector<64x8xf32> to vector<2x32x8xf32>
    %145 = vector.extract_strided_slice %7 {offsets = [0, 56], sizes = [64, 8], strides = [1, 1]} : vector<64x96xf32> to vector<64x8xf32>
    %146 = vector.shape_cast %145 : vector<64x8xf32> to vector<2x32x8xf32>
    %147 = vector.extract_strided_slice %7 {offsets = [0, 88], sizes = [64, 8], strides = [1, 1]} : vector<64x96xf32> to vector<64x8xf32>
    %148 = vector.shape_cast %147 : vector<64x8xf32> to vector<2x32x8xf32>
    %149 = arith.mulf %144, %144 : vector<2x32x8xf32>
    %cst_40 = arith.constant dense<0.000000e+00> : vector<2x32xf32>
    %150 = vector.multi_reduction <add>, %149, %cst_40 [2] : vector<2x32x8xf32> to vector<2x32xf32>
    %151 = vector.shape_cast %150 : vector<2x32xf32> to vector<2x32x1xf32>
    %cst_41 = arith.constant 1.000000e-24 : f32
    %152 = vector.broadcast %cst_41 : f32 to vector<2x32x1xf32>
    %153 = arith.maximumf %151, %152 : vector<2x32x1xf32>
    %154 = math.rsqrt %153 : vector<2x32x1xf32>
    %155 = vector.broadcast %154 : vector<2x32x1xf32> to vector<2x32x8xf32>
    %156 = arith.mulf %144, %155 : vector<2x32x8xf32>
    %157 = arith.mulf %146, %146 : vector<2x32x8xf32>
    %cst_42 = arith.constant dense<0.000000e+00> : vector<2x32xf32>
    %158 = vector.multi_reduction <add>, %157, %cst_42 [2] : vector<2x32x8xf32> to vector<2x32xf32>
    %159 = vector.shape_cast %158 : vector<2x32xf32> to vector<2x32x1xf32>
    %cst_43 = arith.constant 1.000000e-24 : f32
    %160 = vector.broadcast %cst_43 : f32 to vector<2x32x1xf32>
    %161 = arith.maximumf %159, %160 : vector<2x32x1xf32>
    %162 = math.rsqrt %161 : vector<2x32x1xf32>
    %163 = vector.broadcast %162 : vector<2x32x1xf32> to vector<2x32x8xf32>
    %164 = arith.mulf %146, %163 : vector<2x32x8xf32>
    "tpu.trace_start"() <{level = 10 : i32, message = "bqd,bkd->bqk"}> : () -> ()
    %cst_44 = arith.constant dense<0.000000e+00> : vector<2x32x32xf32>
    %165 = tpu.matmul %156, %164, %cst_44 {dimension_numbers = #tpu.dot_dimension_numbers<[2], [2], [1], [1], [0, 0, 0, 1, 1, 1], [0], [0]>} : vector<2x32x8xf32>, vector<2x32x8xf32>, vector<2x32x32xf32> -> vector<2x32x32xf32>
    "tpu.trace_stop"() : () -> ()
    %c3 = arith.constant 3 : index
    %166 = memref.load %arg7[%c3] : memref<4xf32, #tpu.memory_space<smem>>
    %167 = vector.broadcast %166 : f32 to vector<2x32x32xf32>
    %168 = arith.mulf %165, %167 : vector<2x32x32xf32>
    %c3_45 = arith.constant 3 : index
    %c0_46 = arith.constant 0 : index
    %c0_47 = arith.constant 0 : index
    %169 = vector.load %arg6[%c3_45, %c0_46, %c0_47] : memref<4x32x32xf32, #tpu.memory_space<vmem>>, vector<1x32x32xf32>
    %170 = vector.shape_cast %169 : vector<1x32x32xf32> to vector<32x32xf32>
    %171 = vector.shape_cast %170 : vector<32x32xf32> to vector<1x32x32xf32>
    %172 = vector.broadcast %171 : vector<1x32x32xf32> to vector<2x32x32xf32>
    %173 = arith.addf %168, %172 : vector<2x32x32xf32>
    %cst_48 = arith.constant dense<0xFF800000> : vector<2x32xf32>
    %174 = vector.multi_reduction <maximumf>, %173, %cst_48 [2] : vector<2x32x32xf32> to vector<2x32xf32>
    %175 = vector.shape_cast %174 : vector<2x32xf32> to vector<2x32x1xf32>
    %176 = vector.broadcast %175 : vector<2x32x1xf32> to vector<2x32x32xf32>
    %177 = arith.subf %173, %176 : vector<2x32x32xf32>
    %178 = math.exp %177 : vector<2x32x32xf32>
    %cst_49 = arith.constant dense<0.000000e+00> : vector<2x32xf32>
    %179 = vector.multi_reduction <add>, %178, %cst_49 [2] : vector<2x32x32xf32> to vector<2x32xf32>
    %180 = vector.shape_cast %179 : vector<2x32xf32> to vector<2x32x1xf32>
    %181 = tpu.reciprocal %180 {approx = true} : vector<2x32x1xf32> -> vector<2x32x1xf32>
    %182 = vector.broadcast %181 : vector<2x32x1xf32> to vector<2x32x32xf32>
    %183 = arith.mulf %178, %182 : vector<2x32x32xf32>
    %184 = arith.truncf %183 : vector<2x32x32xf32> to vector<2x32x32xbf16>
    %185 = arith.truncf %148 : vector<2x32x8xf32> to vector<2x32x8xbf16>
    "tpu.trace_start"() <{level = 10 : i32, message = "bqk,bkd->bqd"}> : () -> ()
    %cst_50 = arith.constant dense<0.000000e+00> : vector<2x32x8xf32>
    %186 = tpu.matmul %184, %185, %cst_50 {dimension_numbers = #tpu.dot_dimension_numbers<[2], [1], [1], [2], [0, 0, 0, 1, 1, 2], [0], [0]>} : vector<2x32x32xbf16>, vector<2x32x8xbf16>, vector<2x32x8xf32> -> vector<2x32x8xf32>
    "tpu.trace_stop"() : () -> ()
    %187 = vector.shape_cast %186 : vector<2x32x8xf32> to vector<64x8xf32>
    %188 = tpu.concatenate %52, %97, %142, %187 in 1 : vector<64x8xf32>, vector<64x8xf32>, vector<64x8xf32>, vector<64x8xf32> -> vector<64x32xf32>
    %189 = arith.truncf %188 : vector<64x32xf32> to vector<64x32xbf16>
    %c0_51 = arith.constant 0 : index
    %c0_52 = arith.constant 0 : index
    %190 = vector.load %arg4[%c0_51, %c0_52] : memref<32x32xbf16, #tpu.memory_space<vmem>>, vector<32x32xbf16>
    %cst_53 = arith.constant dense<0.000000e+00> : vector<64x32xf32>
    %191 = tpu.matmul %189, %190, %cst_53 {dimension_numbers = #tpu.dot_dimension_numbers<[1], [0], [0], [1], [0, 0, 1, 1], [], []>} : vector<64x32xbf16>, vector<32x32xbf16>, vector<64x32xf32> -> vector<64x32xf32>
    %c0_54 = arith.constant 0 : index
    %c0_55 = arith.constant 0 : index
    %192 = vector.load %arg5[%c0_54, %c0_55] : memref<1x32xf32, #tpu.memory_space<vmem>>, vector<1x32xf32>
    %193 = vector.broadcast %192 : vector<1x32xf32> to vector<64x32xf32>
    %194 = arith.addf %191, %193 : vector<64x32xf32>
    %195 = vector.shape_cast %194 : vector<64x32xf32> to vector<2x32x32xf32>
    %c0_56 = arith.constant 0 : index
    %c0_57 = arith.constant 0 : index
    %c0_58 = arith.constant 0 : index
    %196 = vector.load %arg8[%c0_56, %c0_57, %c0_58] : memref<2x32x32xf32, #tpu.memory_space<vmem>>, vector<2x32x32xf32>
    tpu.vector_store %arg8[%c0_56, %c0_57, %c0_58], %195 {strides = array<i32>} : memref<2x32x32xf32, #tpu.memory_space<vmem>>, vector<2x32x32xf32>,
    return
  }
  func.func @transform_0(%arg0: i32) -> (i32, i32, i32) {
    %c0_i32 = arith.constant 0 : i32
    %c0_i32_0 = arith.constant 0 : i32
    %c0_i32_1 = arith.constant 0 : i32
    return %arg0, %c0_i32, %c0_i32_0 : i32, i32, i32
  }
  func.func @transform_1(%arg0: i32) -> (i32, i32) {
    %c0_i32 = arith.constant 0 : i32
    %c0_i32_0 = arith.constant 0 : i32
    %c0_i32_1 = arith.constant 0 : i32
    return %c0_i32, %c0_i32_0 : i32, i32
  }
  func.func @transform_2(%arg0: i32) -> (i32, i32) {
    %c0_i32 = arith.constant 0 : i32
    %c0_i32_0 = arith.constant 0 : i32
    %c0_i32_1 = arith.constant 0 : i32
    return %c0_i32, %c0_i32_0 : i32, i32
  }
  func.func @transform_3(%arg0: i32) -> (i32, i32) {
    %c0_i32 = arith.constant 0 : i32
    %c0_i32_0 = arith.constant 0 : i32
    %c0_i32_1 = arith.constant 0 : i32
    return %c0_i32, %c0_i32_0 : i32, i32
  }
  func.func @transform_4(%arg0: i32) -> (i32, i32) {
    %c0_i32 = arith.constant 0 : i32
    %c0_i32_0 = arith.constant 0 : i32
    %c0_i32_1 = arith.constant 0 : i32
    return %c0_i32, %c0_i32_0 : i32, i32
  }
  func.func @transform_5(%arg0: i32) -> (i32, i32, i32) {
    %c0_i32 = arith.constant 0 : i32
    %c0_i32_0 = arith.constant 0 : i32
    %c0_i32_1 = arith.constant 0 : i32
    %c0_i32_2 = arith.constant 0 : i32
    return %c0_i32, %c0_i32_0, %c0_i32_1 : i32, i32, i32
  }
  func.func @transform_6(%arg0: i32) -> i32 {
    %c0_i32 = arith.constant 0 : i32
    %c0_i32_0 = arith.constant 0 : i32
    return %c0_i32 : i32
  }
  func.func @transform_7(%arg0: i32) -> (i32, i32, i32) {
    %c0_i32 = arith.constant 0 : i32
    %c0_i32_0 = arith.constant 0 : i32
    %c0_i32_1 = arith.constant 0 : i32
    return %arg0, %c0_i32, %c0_i32_0 : i32, i32, i32
  }
}

</mosaic_0001>

<llo_original>
// kernel: sub.8
$region0: #{sub.8}
  %s0 = inlined_call_operand.vmem [shape: s32[3,4,4,2], index: 0, kind: input, shape index: {}]
  %s1 = inlined_call_operand.vmem [shape: s32[3,32], index: 1, kind: output, shape index: {}]
  $region1: #{sub.8} parent=0
    #allocation0 [shape = 'u8[4096]{0}', space=vmem, size = 0x1000, scoped, tag = 'scoped mem for output reshape']
    #allocation1 [shape = 'u8[49152]{0}', space=vmem, size = 0xc000, scoped, tag = 'scoped mem for input reshape']
    %s3 = sshll.u32 1, 4
    %s4 = ssub.s32 %s3, 1
    %s5 = smul.addr 4, 11
    %s6 = scalar_lea.vmem %s0, %s5
    %v7 = vld [vmem:[%s6] sm:%s4]
    %s8 = scalar_lea.vmem [#allocation1], 88
    %9 = vst [vmem:[%s8] sm:%s4] %v7
    %s10 = smul.addr 4, 10
    %s11 = scalar_lea.vmem %s0, %s10
    %v12 = vld [vmem:[%s11] sm:%s4]
    %s13 = scalar_lea.vmem [#allocation1], 80
    %14 = vst [vmem:[%s13] sm:%s4] %v12
    %s15 = smul.addr 4, 9
    %s16 = scalar_lea.vmem %s0, %s15
    %v17 = vld [vmem:[%s16] sm:%s4]
    %s18 = scalar_lea.vmem [#allocation1], 72
    %19 = vst [vmem:[%s18] sm:%s4] %v17
    %s20 = smul.addr 4, 8
    %s21 = scalar_lea.vmem %s0, %s20
    %v22 = vld [vmem:[%s21] sm:%s4]
    %s23 = scalar_lea.vmem [#allocation1], 64
    %24 = vst [vmem:[%s23] sm:%s4] %v22
    %s25 = smul.addr 4, 7
    %s26 = scalar_lea.vmem %s0, %s25
    %v27 = vld [vmem:[%s26] sm:%s4]
    %s28 = scalar_lea.vmem [#allocation1], 56
    %29 = vst [vmem:[%s28] sm:%s4] %v27
    %s30 = smul.addr 4, 6
    %s31 = scalar_lea.vmem %s0, %s30
    %v32 = vld [vmem:[%s31] sm:%s4]
    %s33 = scalar_lea.vmem [#allocation1], 48
    %34 = vst [vmem:[%s33] sm:%s4] %v32
    %s35 = smul.addr 4, 5
    %s36 = scalar_lea.vmem %s0, %s35
    %v37 = vld [vmem:[%s36] sm:%s4]
    %s38 = scalar_lea.vmem [#allocation1], 40
    %39 = vst [vmem:[%s38] sm:%s4] %v37
    %s40 = smul.addr 4, 4
    %s41 = scalar_lea.vmem %s0, %s40
    %v42 = vld [vmem:[%s41] sm:%s4]
    %s43 = scalar_lea.vmem [#allocation1], 32
    %44 = vst [vmem:[%s43] sm:%s4] %v42
    %s45 = smul.addr 4, 3
    %s46 = scalar_lea.vmem %s0, %s45
    %v47 = vld [vmem:[%s46] sm:%s4]
    %s48 = scalar_lea.vmem [#allocation1], 24
    %49 = vst [vmem:[%s48] sm:%s4] %v47
    %s50 = smul.addr 4, 2
    %s51 = scalar_lea.vmem %s0, %s50
    %v52 = vld [vmem:[%s51] sm:%s4]
    %s53 = scalar_lea.vmem [#allocation1], 16
    %54 = vst [vmem:[%s53] sm:%s4] %v52
    %s55 = scalar_lea.vmem %s0, 4
    %v56 = vld [vmem:[%s55] sm:%s4]
    %s57 = scalar_lea.vmem [#allocation1], 8
    %58 = vst [vmem:[%s57] sm:%s4] %v56
    %v59 = vld [vmem:[%s0] sm:%s4]
    %60 = vst [vmem:[#allocation1] sm:%s4] %v59
    %v61 = vld [vmem:[#allocation1] sm:$0x1]
    %s62 = scalar_lea.vmem [#allocation1], 31
    %v63 = vld [vmem:[%s62] sm:$0x2]
    %vm64 = vcmask 1041409
    %v65 = vsel %vm64, %v63, %v61
    %s66 = scalar_lea.vmem [#allocation1], 62
    %v67 = vld [vmem:[%s66] sm:$0x4]
    %vm68 = vcmask 1042434
    %v69 = vsel %vm68, %v67, %v65
    %vm70 = vcmask 15360
    %71 = vst.msk [vmem:[#allocation0] sm:$0x7] %vm70, %v69
    %s72 = scalar_lea.vmem [#allocation1], 27
    %v73 = vld [vmem:[%s72] sm:$0x1]
    %s74 = scalar_lea.vmem [#allocation1], 58
    %v75 = vld [vmem:[%s74] sm:$0x2]
    %vm76 = vcmask 1041409
    %v77 = vsel %vm76, %v75, %v73
    %s78 = scalar_lea.vmem [#allocation1], 89
    %v79 = vld [vmem:[%s78] sm:$0x4]
    %vm80 = vcmask 1042434
    %v81 = vsel %vm80, %v79, %v77
    %82 = vrot.lane.b32.xlu0 %v81, 30
    %v83 = vpop.permute.xlu0 %82
    %vm84 = vcmask 261360
    %85 = vst.msk [vmem:[#allocation0] sm:$0x7] %vm84, %v83
    %s86 = scalar_lea.vmem [#allocation1], 26
    %v87 = vld [vmem:[%s86] sm:$0x1]
    %s88 = scalar_lea.vmem [#allocation1], 57
    %v89 = vld [vmem:[%s88] sm:$0x2]
    %vm90 = vcmask 1041409
    %v91 = vsel %vm90, %v89, %v87
    %s92 = scalar_lea.vmem [#allocation1], 88
    %v93 = vld [vmem:[%s92] sm:$0x4]
    %vm94 = vcmask 1042434
    %v95 = vsel %vm94, %v93, %v91
    %96 = vrot.lane.b32.xlu0 %v95, 28
    %v97 = vpop.permute.xlu0 %96
    %vm98 = vcmask 244960
    %99 = vst.msk [vmem:[#allocation0] sm:$0x7] %vm98, %v97
    %s100 = scalar_lea.vmem [#allocation1], 25
    %v101 = vld [vmem:[%s100] sm:$0x1]
    %s102 = scalar_lea.vmem [#allocation1], 56
    %v103 = vld [vmem:[%s102] sm:$0x2]
    %vm104 = vcmask 1041409
    %v105 = vsel %vm104, %v103, %v101
    %s106 = scalar_lea.vmem [#allocation1], 87
    %v107 = vld [vmem:[%s106] sm:$0x4]
    %vm108 = vcmask 1042434
    %v109 = vsel %vm108, %v107, %v105
    %110 = vrot.lane.b32.xlu0 %v109, 26
    %v111 = vpop.permute.xlu0 %110
    %vm112 = vcmask 228560
    %113 = vst.msk [vmem:[#allocation0] sm:$0x7] %vm112, %v111
    %s114 = scalar_lea.vmem [#allocation1], 24
    %v115 = vld [vmem:[%s114] sm:$0x1]
    %s116 = scalar_lea.vmem [#allocation1], 55
    %v117 = vld [vmem:[%s116] sm:$0x2]
    %vm118 = vcmask 1041409
    %v119 = vsel %vm118, %v117, %v115
    %s120 = scalar_lea.vmem [#allocation1], 86
    %v121 = vld [vmem:[%s120] sm:$0x4]
    %vm122 = vcmask 1042434
    %v123 = vsel %vm122, %v121, %v119
    %124 = vrot.lane.b32.xlu0 %v123, 24
    %v125 = vpop.permute.xlu0 %124
    %vm126 = vcmask 212160
    %127 = vst.msk [vmem:[#allocation0] sm:$0x7] %vm126, %v125
    %s128 = scalar_lea.vmem [#allocation1], 19
    %v129 = vld [vmem:[%s128] sm:$0x1]
    %s130 = scalar_lea.vmem [#allocation1], 50
    %v131 = vld [vmem:[%s130] sm:$0x2]
    %vm132 = vcmask 1041409
    %v133 = vsel %vm132, %v131, %v129
    %s134 = scalar_lea.vmem [#allocation1], 81
    %v135 = vld [vmem:[%s134] sm:$0x4]
    %vm136 = vcmask 1042434
    %v137 = vsel %vm136, %v135, %v133
    %138 = vrot.lane.b32.xlu0 %v137, 22
    %v139 = vpop.permute.xlu0 %138
    %vm140 = vcmask 195760
    %141 = vst.msk [vmem:[#allocation0] sm:$0x7] %vm140, %v139
    %s142 = scalar_lea.vmem [#allocation1], 18
    %v143 = vld [vmem:[%s142] sm:$0x1]
    %s144 = scalar_lea.vmem [#allocation1], 49
    %v145 = vld [vmem:[%s144] sm:$0x2]
    %vm146 = vcmask 1041409
    %v147 = vsel %vm146, %v145, %v143
    %s148 = scalar_lea.vmem [#allocation1], 80
    %v149 = vld [vmem:[%s148] sm:$0x4]
    %vm150 = vcmask 1042434
    %v151 = vsel %vm150, %v149, %v147
    %152 = vrot.lane.b32.xlu0 %v151, 20
    %v153 = vpop.permute.xlu0 %152
    %vm154 = vcmask 179360
    %155 = vst.msk [vmem:[#allocation0] sm:$0x7] %vm154, %v153
    %s156 = scalar_lea.vmem [#allocation1], 17
    %v157 = vld [vmem:[%s156] sm:$0x1]
    %s158 = scalar_lea.vmem [#allocation1], 48
    %v159 = vld [vmem:[%s158] sm:$0x2]
    %vm160 = vcmask 1041409
    %v161 = vsel %vm160, %v159, %v157
    %s162 = scalar_lea.vmem [#allocation1], 79
    %v163 = vld [vmem:[%s162] sm:$0x4]
    %vm164 = vcmask 1042434
    %v165 = vsel %vm164, %v163, %v161
    %166 = vrot.lane.b32.xlu0 %v165, 18
    %v167 = vpop.permute.xlu0 %166
    %vm168 = vcmask 162960
    %169 = vst.msk [vmem:[#allocation0] sm:$0x7] %vm168, %v167
    %s170 = scalar_lea.vmem [#allocation1], 16
    %v171 = vld [vmem:[%s170] sm:$0x1]
    %s172 = scalar_lea.vmem [#allocation1], 47
    %v173 = vld [vmem:[%s172] sm:$0x2]
    %vm174 = vcmask 1041409
    %v175 = vsel %vm174, %v173, %v171
    %s176 = scalar_lea.vmem [#allocation1], 78
    %v177 = vld [vmem:[%s176] sm:$0x4]
    %vm178 = vcmask 1042434
    %v179 = vsel %vm178, %v177, %v175
    %180 = vrot.lane.b32.xlu0 %v179, 16
    %v181 = vpop.permute.xlu0 %180
    %vm182 = vcmask 146560
    %183 = vst.msk [vmem:[#allocation0] sm:$0x7] %vm182, %v181
    %s184 = scalar_lea.vmem [#allocation1], 11
    %v185 = vld [vmem:[%s184] sm:$0x1]
    %s186 = scalar_lea.vmem [#allocation1], 42
    %v187 = vld [vmem:[%s186] sm:$0x2]
    %vm188 = vcmask 1041409
    %v189 = vsel %vm188, %v187, %v185
    %s190 = scalar_lea.vmem [#allocation1], 73
    %v191 = vld [vmem:[%s190] sm:$0x4]
    %vm192 = vcmask 1042434
    %v193 = vsel %vm192, %v191, %v189
    %194 = vrot.lane.b32.xlu0 %v193, 14
    %v195 = vpop.permute.xlu0 %194
    %vm196 = vcmask 130160
    %197 = vst.msk [vmem:[#allocation0] sm:$0x7] %vm196, %v195
    %s198 = scalar_lea.vmem [#allocation1], 10
    %v199 = vld [vmem:[%s198] sm:$0x1]
    %s200 = scalar_lea.vmem [#allocation1], 41
    %v201 = vld [vmem:[%s200] sm:$0x2]
    %vm202 = vcmask 1041409
    %v203 = vsel %vm202, %v201, %v199
    %s204 = scalar_lea.vmem [#allocation1], 72
    %v205 = vld [vmem:[%s204] sm:$0x4]
    %vm206 = vcmask 1042434
    %v207 = vsel %vm206, %v205, %v203
    %208 = vrot.lane.b32.xlu0 %v207, 12
    %v209 = vpop.permute.xlu0 %208
    %vm210 = vcmask 113760
    %211 = vst.msk [vmem:[#allocation0] sm:$0x7] %vm210, %v209
    %s212 = scalar_lea.vmem [#allocation1], 9
    %v213 = vld [vmem:[%s212] sm:$0x1]
    %s214 = scalar_lea.vmem [#allocation1], 40
    %v215 = vld [vmem:[%s214] sm:$0x2]
    %vm216 = vcmask 1041409
    %v217 = vsel %vm216, %v215, %v213
    %s218 = scalar_lea.vmem [#allocation1], 71
    %v219 = vld [vmem:[%s218] sm:$0x4]
    %vm220 = vcmask 1042434
    %v221 = vsel %vm220, %v219, %v217
    %222 = vrot.lane.b32.xlu0 %v221, 10
    %v223 = vpop.permute.xlu0 %222
    %vm224 = vcmask 97360
    %225 = vst.msk [vmem:[#allocation0] sm:$0x7] %vm224, %v223
    %s226 = scalar_lea.vmem [#allocation1], 8
    %v227 = vld [vmem:[%s226] sm:$0x1]
    %s228 = scalar_lea.vmem [#allocation1], 39
    %v229 = vld [vmem:[%s228] sm:$0x2]
    %vm230 = vcmask 1041409
    %v231 = vsel %vm230, %v229, %v227
    %s232 = scalar_lea.vmem [#allocation1], 70
    %v233 = vld [vmem:[%s232] sm:$0x4]
    %vm234 = vcmask 1042434
    %v235 = vsel %vm234, %v233, %v231
    %236 = vrot.lane.b32.xlu0 %v235, 8
    %v237 = vpop.permute.xlu0 %236
    %vm238 = vcmask 80960
    %239 = vst.msk [vmem:[#allocation0] sm:$0x7] %vm238, %v237
    %s240 = scalar_lea.vmem [#allocation1], 3
    %v241 = vld [vmem:[%s240] sm:$0x1]
    %s242 = scalar_lea.vmem [#allocation1], 34
    %v243 = vld [vmem:[%s242] sm:$0x2]
    %vm244 = vcmask 1041409
    %v245 = vsel %vm244, %v243, %v241
    %s246 = scalar_lea.vmem [#allocation1], 65
    %v247 = vld [vmem:[%s246] sm:$0x4]
    %vm248 = vcmask 1042434
    %v249 = vsel %vm248, %v247, %v245
    %250 = vrot.lane.b32.xlu0 %v249, 6
    %v251 = vpop.permute.xlu0 %250
    %vm252 = vcmask 64560
    %253 = vst.msk [vmem:[#allocation0] sm:$0x7] %vm252, %v251
    %s254 = scalar_lea.vmem [#allocation1], 2
    %v255 = vld [vmem:[%s254] sm:$0x1]
    %s256 = scalar_lea.vmem [#allocation1], 33
    %v257 = vld [vmem:[%s256] sm:$0x2]
    %vm258 = vcmask 1041409
    %v259 = vsel %vm258, %v257, %v255
    %s260 = scalar_lea.vmem [#allocation1], 64
    %v261 = vld [vmem:[%s260] sm:$0x4]
    %vm262 = vcmask 1042434
    %v263 = vsel %vm262, %v261, %v259
    %264 = vrot.lane.b32.xlu0 %v263, 4
    %v265 = vpop.permute.xlu0 %264
    %vm266 = vcmask 48160
    %267 = vst.msk [vmem:[#allocation0] sm:$0x7] %vm266, %v265
    %s268 = scalar_lea.vmem [#allocation1], 1
    %v269 = vld [vmem:[%s268] sm:$0x1]
    %s270 = scalar_lea.vmem [#allocation1], 32
    %v271 = vld [vmem:[%s270] sm:$0x2]
    %vm272 = vcmask 1041409
    %v273 = vsel %vm272, %v271, %v269
    %s274 = scalar_lea.vmem [#allocation1], 63
    %v275 = vld [vmem:[%s274] sm:$0x4]
    %vm276 = vcmask 1042434
    %v277 = vsel %vm276, %v275, %v273
    %278 = vrot.lane.b32.xlu0 %v277, 2
    %v279 = vpop.permute.xlu0 %278
    %vm280 = vcmask 31760
    %281 = vst.msk [vmem:[#allocation0] sm:$0x7] %vm280, %v279
    %s283 = sshll.u32 1, 4
    %s284 = ssub.s32 %s283, 1
    %v286 = vld [vmem:[#allocation0] sm:%s284]
    %s287 = sshll.u32 1, 4
    %s288 = ssub.s32 %s287, 1
    %289 = vst [vmem:[%s1] sm:%s288] %v286

// kernel: window_attention_pseudo3d.1
$region0: #{window_attention_pseudo3d.1}
  #allocation0 [shape = 'u32[]', space=smem, size = 0x4, offset = 0x4, fixed_abs, tag = 'smem constant byte address 0x4 - core index']
  #allocation1 [shape = 'u32[144,128]{1,0:T(1,128)}', space=vmem, size = 0x12000, scoped, tag = 'internal scratch']
  %s0 = inlined_call_operand.vmem [shape: f32[2,32,32], index: 0, kind: input, shape index: {}]
  %s1 = inlined_call_operand.vmem [shape: bf16[32,96], index: 1, kind: input, shape index: {}]
  %s2 = inlined_call_operand.vmem [shape: f32[1,96], index: 2, kind: input, shape index: {}]
  %s3 = inlined_call_operand.vmem [shape: bf16[32,32], index: 3, kind: input, shape index: {}]
  %s4 = inlined_call_operand.vmem [shape: f32[1,32], index: 4, kind: input, shape index: {}]
  %s5 = inlined_call_operand.vmem [shape: f32[4,32,32], index: 5, kind: input, shape index: {}]
  %s6 = inlined_call_operand.vmem [shape: f32[4], index: 6, kind: input, shape index: {}]
  %s7 = inlined_call_operand.hbm [shape: f32[2,32,32], index: 7, kind: output, shape index: {}]
  %s8 = sld [smem:[#allocation0]]
  $region42: #{window_attention_pseudo3d.1} parent=0
    _
  %s10 = ssub.s32 1, %s8
  %s11 = scalar_select 0, %s10, %s8
  $region1: #{window_attention_pseudo3d.1} parent=0
    #allocation2 [shape = 'u8[512]{0}', space=smem, size = 0x200, scoped, tag = 'input window, operand 6, single buffered']
    #allocation3 [shape = 's32[1]{0}', space=sflag, size = 0x4, scoped, tag = 'scoped memory for window_attention_pseudo3d.1']
    #allocation4 [shape = 's32[1]{0}', space=sflag, size = 0x4, scoped, tag = 'scoped memory for window_attention_pseudo3d.1']
    #allocation5 [shape = 'u8[32768]{0}', space=vmem, size = 0x8000, scoped, tag = 'output window, operand 0, single buffered']
    %12 = vsyncpa [#allocation4], 0
    %13 = vsyncpa [#allocation3], 0
    // Predicated region
    $region2: #{window_attention_pseudo3d.1} parent=1 // pred_check
      _
    $region3: #{window_attention_pseudo3d.1} parent=1 // pred_check_branch
      %15 = sbr.rel (0) target = $region5
    $region4: #{window_attention_pseudo3d.1} parent=1 // pred_region
      _
    $region5: #{window_attention_pseudo3d.1} parent=1 // pred_fallthru
      _
    // Predicated region
    $region6: #{window_attention_pseudo3d.1} parent=1 // pred_check
      _
    $region7: #{window_attention_pseudo3d.1} parent=1 // pred_check_branch
      %17 = sbr.rel (0) target = $region9
    $region8: #{window_attention_pseudo3d.1} parent=1 // pred_region
      _
    $region9: #{window_attention_pseudo3d.1} parent=1 // pred_fallthru
      _
    // Predicated region
    $region10: #{window_attention_pseudo3d.1} parent=1 // pred_check
      _
    $region11: #{window_attention_pseudo3d.1} parent=1 // pred_check_branch
      %19 = sbr.rel (0) target = $region13
    $region12: #{window_attention_pseudo3d.1} parent=1 // pred_region
      _
    $region13: #{window_attention_pseudo3d.1} parent=1 // pred_fallthru
      _
    // Predicated region
    $region14: #{window_attention_pseudo3d.1} parent=1 // pred_check
      _
    $region15: #{window_attention_pseudo3d.1} parent=1 // pred_check_branch
      %21 = sbr.rel (0) target = $region17
    $region16: #{window_attention_pseudo3d.1} parent=1 // pred_region
      _
    $region17: #{window_attention_pseudo3d.1} parent=1 // pred_fallthru
      _
    // Predicated region
    $region18: #{window_attention_pseudo3d.1} parent=1 // pred_check
      _
    $region19: #{window_attention_pseudo3d.1} parent=1 // pred_check_branch
      %23 = sbr.rel (0) target = $region21
    $region20: #{window_attention_pseudo3d.1} parent=1 // pred_region
      _
    $region21: #{window_attention_pseudo3d.1} parent=1 // pred_fallthru
      _
    // Predicated region
    $region22: #{window_attention_pseudo3d.1} parent=1 // pred_check
      _
    $region23: #{window_attention_pseudo3d.1} parent=1 // pred_check_branch
      %25 = sbr.rel (0) target = $region25
    $region24: #{window_attention_pseudo3d.1} parent=1 // pred_region
      _
    $region25: #{window_attention_pseudo3d.1} parent=1 // pred_fallthru
      _
    // Predicated region
    $region26: #{window_attention_pseudo3d.1} parent=1 // pred_check
      _
    $region27: #{window_attention_pseudo3d.1} parent=1 // pred_check_branch
      %27 = sbr.rel (0) target = $region29
    $region28: #{window_attention_pseudo3d.1} parent=1 // pred_region
      %s29 = ssub.s32 16, 16
      %30 = vsyncadd [#allocation4], %s29
      %s32 = sshll.u32 %s6, 4
      %s33 = int_to_ptr.vmem [resolvable:$true] %s32
      %35 = dma.vmem_to_smem %s33, 16, [#allocation2], [#allocation4]
    $region29: #{window_attention_pseudo3d.1} parent=1 // pred_fallthru
      _
    // Predicated region
    $region30: #{window_attention_pseudo3d.1} parent=1 // pred_check
      _
    $region31: #{window_attention_pseudo3d.1} parent=1 // pred_check_branch
      %37 = sbr.rel (0) target = $region33
    $region32: #{window_attention_pseudo3d.1} parent=1 // pred_region
      %38 = dma.done [#allocation4], 16
    $region33: #{window_attention_pseudo3d.1} parent=1 // pred_fallthru
      _
    %39 = sfence
    %v41 = vld [vmem:[%s0] sm:$0xff]
    %v42 = vld [vmem:[%s0 + $0x8] sm:$0xff]
    %v43 = vld [vmem:[%s0 + $0x10] sm:$0xff]
    %v44 = vld [vmem:[%s0 + $0x18] sm:$0xff]
    %v45 = vld [vmem:[%s0 + $0x20] sm:$0xff]
    %v46 = vld [vmem:[%s0 + $0x28] sm:$0xff]
    %v47 = vld [vmem:[%s0 + $0x30] sm:$0xff]
    %v48 = vld [vmem:[%s0 + $0x38] sm:$0xff]
    %v49 = vpack.c.bf16 %v42, %v41
    %v50 = vpack.c.bf16 %v44, %v43
    %v51 = vpack.c.bf16 %v46, %v45
    %v52 = vpack.c.bf16 %v48, %v47
    %v53 = vld [vmem:[%s1] sm:$0xf]
    %v54 = vld [vmem:[%s1 + $0x4] sm:$0xf]
    %v55 = vld [vmem:[%s1 + $0x8] sm:$0xf]
    %v56 = vld [vmem:[%s1 + $0xc] sm:$0xf]
    %v57 = vld [vmem:[%s2] sm:$0x1]
    %v59 = vlaneseq
    %v60 = vshrl.u32 %v59, 7
    %v61 = vsub.s32 0, %v60
    %v62 = vrot.slane %v57, %v61
    %v68 = vunpack.c.l.b16 %v53
    %v69 = vunpack.c.l.b16 %v54
    %v70 = vunpack.c.l.b16 %v55
    %v71 = vunpack.c.l.b16 %v56
    %v72 = vpack.c.b16 %v69, %v68
    %v73 = vpack.c.b16 %v71, %v70
    %vm76 = vcmask 261120
    %v78 = vsel %vm76, %v49, 0
    %v81 = vsel %vm76, %v50, 0
    %v84 = vsel %vm76, %v51, 0
    %v87 = vsel %vm76, %v52, 0
    %89 = vmatprep.subr.bf16.mxu0 0
    %90 = vmatpush1.bf16.msra.mxu0 0
    %91 = vmatprep.subr.bf16.mxu0 0
    %92 = vmatpush1.bf16.msra.mxu0 0
    %93 = vmatprep.subr.bf16.mxu0 0
    %94 = vmatpush1.bf16.msra.mxu0 0
    %95 = vmatprep.subr.bf16.mxu0 0
    %96 = vmatpush1.bf16.msra.mxu0 0
    %97 = vmatprep.subr.bf16.mxu0 0
    %98 = vmatpush1.bf16.msra.mxu0 0
    %99 = vmatprep.subr.bf16.mxu0 0
    %100 = vmatpush1.bf16.msra.mxu0 0
    %101 = vmatprep.subr.bf16.mxu0 0
    %102 = vmatpush1.bf16.msra.mxu0 %v73
    %103 = vmatprep.subr.bf16.mxu0 0
    %104 = vmatpush1.bf16.msra.mxu0 %v72
    %105 = vmatprep.subr.bf16.mxu0 0
    %106 = vmatpush2.bf16.msra.mxu0 0
    %107 = vmatprep.subr.bf16.mxu0 0
    %108 = vmatpush2.bf16.msra.mxu0 0
    %109 = vmatprep.subr.bf16.mxu0 0
    %110 = vmatpush2.bf16.msra.mxu0 0
    %111 = vmatprep.subr.bf16.mxu0 0
    %112 = vmatpush2.bf16.msra.mxu0 0
    %113 = vmatprep.subr.bf16.mxu0 0
    %114 = vmatpush2.bf16.msra.mxu0 0
    %115 = vmatprep.subr.bf16.mxu0 0
    %116 = vmatpush2.bf16.msra.mxu0 0
    %117 = vmatprep.subr.bf16.mxu0 0
    %118 = vmatpush2.bf16.msra.mxu0 0
    %119 = vmatprep.subr.bf16.mxu0 0
    %120 = vmatpush2.bf16.msra.mxu0 0
    %121 = vmatprep.mubr.bf16.mxu0 0
    %122 = vmatmul.mubr.bf16.gmra.mxu0 %v78
    %v123 = vpop.f32.mrf.mxu0
    %v124 = vadd.f32 %v62, %v123
    %v125 = vpop.f32.mrf.mxu0
    %v126 = vpop.f32.mrf.mxu0
    %v127 = vadd.f32 %v62, %v126
    %v128 = vpop.f32.mrf.mxu0
    %129 = vmatprep.mubr.bf16.mxu0 0
    %130 = vmatmul.mubr.bf16.gmra.mxu0 %v81
    %v131 = vpop.f32.mrf.mxu0
    %v132 = vadd.f32 %v62, %v131
    %v133 = vpop.f32.mrf.mxu0
    %v134 = vpop.f32.mrf.mxu0
    %v135 = vadd.f32 %v62, %v134
    %v136 = vpop.f32.mrf.mxu0
    %137 = vmatprep.mubr.bf16.mxu0 0
    %138 = vmatmul.mubr.bf16.gmra.mxu0 %v84
    %v139 = vpop.f32.mrf.mxu0
    %v140 = vadd.f32 %v62, %v139
    %v141 = vpop.f32.mrf.mxu0
    %v142 = vpop.f32.mrf.mxu0
    %v143 = vadd.f32 %v62, %v142
    %v144 = vpop.f32.mrf.mxu0
    %145 = vmatprep.mubr.bf16.mxu0 0
    %146 = vmatmul.mubr.bf16.gmra.mxu0 %v87
    %v147 = vpop.f32.mrf.mxu0
    %v148 = vadd.f32 %v62, %v147
    %v149 = vpop.f32.mrf.mxu0
    %v150 = vpop.f32.mrf.mxu0
    %v151 = vadd.f32 %v62, %v150
    %v152 = vpop.f32.mrf.mxu0
    %153 = vdwg.mxu0
    %v154 = vmul.f32 %v124, %v124
    %v155 = vmul.f32 %v127, %v127
    %v156 = vmul.f32 %v132, %v132
    %v157 = vmul.f32 %v135, %v135
    %v158 = vmul.f32 %v140, %v140
    %v159 = vmul.f32 %v143, %v143
    %v160 = vmul.f32 %v148, %v148
    %v161 = vmul.f32 %v151, %v151
    %vm162 = vcmask 64512
    %v163 = vsel %vm162, %v154, 0.0
    %164 = vadd.xlane.f32.xlu0 %v163
    %v165 = vpop.xlane.xlu0 %164
    %v166 = vsel %vm162, %v155, 0.0
    %167 = vadd.xlane.f32.xlu0 %v166
    %v168 = vpop.xlane.xlu0 %167
    %v169 = vsel %vm162, %v156, 0.0
    %170 = vadd.xlane.f32.xlu0 %v169
    %v171 = vpop.xlane.xlu0 %170
    %v172 = vsel %vm162, %v157, 0.0
    %173 = vadd.xlane.f32.xlu0 %v172
    %v174 = vpop.xlane.xlu0 %173
    %v175 = vsel %vm162, %v158, 0.0
    %176 = vadd.xlane.f32.xlu0 %v175
    %v177 = vpop.xlane.xlu0 %176
    %v178 = vsel %vm162, %v159, 0.0
    %179 = vadd.xlane.f32.xlu0 %v178
    %v180 = vpop.xlane.xlu0 %179
    %v181 = vsel %vm162, %v160, 0.0
    %182 = vadd.xlane.f32.xlu0 %v181
    %v183 = vpop.xlane.xlu0 %182
    %v184 = vsel %vm162, %v161, 0.0
    %185 = vadd.xlane.f32.xlu0 %v184
    %v186 = vpop.xlane.xlu0 %185
    %v187 = vmax.f32 %v165, 1e-24
    %v188 = vmax.f32 %v168, 1e-24
    %v189 = vmax.f32 %v171, 1e-24
    %v190 = vmax.f32 %v174, 1e-24
    %v191 = vmax.f32 %v177, 1e-24
    %v192 = vmax.f32 %v180, 1e-24
    %v193 = vmax.f32 %v183, 1e-24
    %v194 = vmax.f32 %v186, 1e-24
    %v195 = vrsqrt.pop %v187
    %v196 = vrsqrt.pop %v188
    %v197 = vrsqrt.pop %v189
    %v198 = vrsqrt.pop %v190
    %v199 = vrsqrt.pop %v191
    %v200 = vrsqrt.pop %v192
    %v201 = vrsqrt.pop %v193
    %v202 = vrsqrt.pop %v194
    %v203 = vmul.f32 %v124, %v195
    %v204 = vmul.f32 %v127, %v196
    %v205 = vmul.f32 %v132, %v197
    %v206 = vmul.f32 %v135, %v198
    %v207 = vmul.f32 %v140, %v199
    %v208 = vmul.f32 %v143, %v200
    %v209 = vmul.f32 %v148, %v201
    %v210 = vmul.f32 %v151, %v202
    %219 = vrot.lane.b32.xlu0 %v154, 96
    %v220 = vpop.permute.xlu0 %219
    %221 = vrot.lane.b32.xlu0 %v155, 96
    %v222 = vpop.permute.xlu0 %221
    %223 = vrot.lane.b32.xlu0 %v156, 96
    %v224 = vpop.permute.xlu0 %223
    %225 = vrot.lane.b32.xlu0 %v157, 96
    %v226 = vpop.permute.xlu0 %225
    %227 = vrot.lane.b32.xlu0 %v158, 96
    %v228 = vpop.permute.xlu0 %227
    %229 = vrot.lane.b32.xlu0 %v159, 96
    %v230 = vpop.permute.xlu0 %229
    %231 = vrot.lane.b32.xlu0 %v160, 96
    %v232 = vpop.permute.xlu0 %231
    %233 = vrot.lane.b32.xlu0 %v161, 96
    %v234 = vpop.permute.xlu0 %233
    %v243 = vsel %vm162, %v220, 0.0
    %244 = vadd.xlane.f32.xlu0 %v243
    %v245 = vpop.xlane.xlu0 %244
    %v246 = vsel %vm162, %v222, 0.0
    %247 = vadd.xlane.f32.xlu0 %v246
    %v248 = vpop.xlane.xlu0 %247
    %v249 = vsel %vm162, %v224, 0.0
    %250 = vadd.xlane.f32.xlu0 %v249
    %v251 = vpop.xlane.xlu0 %250
    %v252 = vsel %vm162, %v226, 0.0
    %253 = vadd.xlane.f32.xlu0 %v252
    %v254 = vpop.xlane.xlu0 %253
    %v255 = vsel %vm162, %v228, 0.0
    %256 = vadd.xlane.f32.xlu0 %v255
    %v257 = vpop.xlane.xlu0 %256
    %v258 = vsel %vm162, %v230, 0.0
    %259 = vadd.xlane.f32.xlu0 %v258
    %v260 = vpop.xlane.xlu0 %259
    %v261 = vsel %vm162, %v232, 0.0
    %262 = vadd.xlane.f32.xlu0 %v261
    %v263 = vpop.xlane.xlu0 %262
    %v264 = vsel %vm162, %v234, 0.0
    %265 = vadd.xlane.f32.xlu0 %v264
    %v266 = vpop.xlane.xlu0 %265
    %v267 = vmax.f32 %v245, 1e-24
    %v268 = vmax.f32 %v248, 1e-24
    %v269 = vmax.f32 %v251, 1e-24
    %v270 = vmax.f32 %v254, 1e-24
    %v271 = vmax.f32 %v257, 1e-24
    %v272 = vmax.f32 %v260, 1e-24
    %v273 = vmax.f32 %v263, 1e-24
    %v274 = vmax.f32 %v266, 1e-24
    %v275 = vrsqrt.pop %v267
    %v276 = vrsqrt.pop %v268
    %v277 = vrsqrt.pop %v269
    %v278 = vrsqrt.pop %v270
    %v279 = vrsqrt.pop %v271
    %v280 = vrsqrt.pop %v272
    %v281 = vrsqrt.pop %v273
    %v282 = vrsqrt.pop %v274
    %v283 = vmul.f32 %v124, %v275
    %v284 = vmul.f32 %v127, %v276
    %v285 = vmul.f32 %v132, %v277
    %v286 = vmul.f32 %v135, %v278
    %v287 = vmul.f32 %v140, %v279
    %v288 = vmul.f32 %v143, %v280
    %v289 = vmul.f32 %v148, %v281
    %v290 = vmul.f32 %v151, %v282
    %295 = vrot.lane.b32.xlu0 %v283, 96
    %v296 = vpop.permute.xlu0 %295
    %297 = vrot.lane.b32.xlu0 %v284, 96
    %v298 = vpop.permute.xlu0 %297
    %299 = vrot.lane.b32.xlu0 %v285, 96
    %v300 = vpop.permute.xlu0 %299
    %301 = vrot.lane.b32.xlu0 %v286, 96
    %v302 = vpop.permute.xlu0 %301
    %v304 = vsel %vm162, %v203, 0
    %v307 = vsel %vm162, %v204, 0
    %v310 = vsel %vm162, %v205, 0
    %v313 = vsel %vm162, %v206, 0
    %v315 = vsel %vm162, %v296, 0
    %v317 = vsel %vm162, %v298, 0
    %v319 = vsel %vm162, %v300, 0
    %v321 = vsel %vm162, %v302, 0
    %323 = vmatprep.subr.mxu0 0.0
    %324 = vmatpush1.xpose.msra.mxu0 0.0
    %325 = vmatprep.subr.mxu0 0.0
    %326 = vmatpush1.xpose.msra.mxu0 0.0
    %327 = vmatprep.subr.mxu0 0.0
    %328 = vmatpush1.xpose.msra.mxu0 0.0
    %329 = vmatprep.subr.mxu0 0.0
    %330 = vmatpush1.xpose.msra.mxu0 0.0
    %331 = vmatprep.subr.mxu0 0.0
    %332 = vmatpush1.xpose.msra.mxu0 0.0
    %333 = vmatprep.subr.mxu0 0.0
    %334 = vmatpush1.xpose.msra.mxu0 0.0
    %335 = vmatprep.subr.mxu0 0.0
    %336 = vmatpush1.xpose.msra.mxu0 0.0
    %337 = vmatprep.subr.mxu0 0.0
    %338 = vmatpush1.xpose.msra.mxu0 0.0
    %339 = vmatprep.subr.mxu0 0.0
    %340 = vmatpush1.xpose.msra.mxu0 0.0
    %341 = vmatprep.subr.mxu0 0.0
    %342 = vmatpush1.xpose.msra.mxu0 0.0
    %343 = vmatprep.subr.mxu0 0.0
    %344 = vmatpush1.xpose.msra.mxu0 0.0
    %345 = vmatprep.subr.mxu0 0.0
    %346 = vmatpush1.xpose.msra.mxu0 0.0
    %347 = vmatprep.subr.mxu0 0.0
    %348 = vmatpush1.xpose.msra.mxu0 %v321
    %349 = vmatprep.subr.mxu0 0.0
    %350 = vmatpush1.xpose.msra.mxu0 %v319
    %351 = vmatprep.subr.mxu0 0.0
    %352 = vmatpush1.xpose.msra.mxu0 %v317
    %353 = vmatprep.subr.mxu0 0.0
    %354 = vmatpush1.xpose.msra.mxu0 %v315
    %355 = vmatprep.subr.mxu0 0.0
    %356 = vmatpush2.xpose.msra.mxu0 0.0
    %357 = vmatprep.subr.mxu0 0.0
    %358 = vmatpush2.xpose.msra.mxu0 0.0
    %359 = vmatprep.subr.mxu0 0.0
    %360 = vmatpush2.xpose.msra.mxu0 0.0
    %361 = vmatprep.subr.mxu0 0.0
    %362 = vmatpush2.xpose.msra.mxu0 0.0
    %363 = vmatprep.subr.mxu0 0.0
    %364 = vmatpush2.xpose.msra.mxu0 0.0
    %365 = vmatprep.subr.mxu0 0.0
    %366 = vmatpush2.xpose.msra.mxu0 0.0
    %367 = vmatprep.subr.mxu0 0.0
    %368 = vmatpush2.xpose.msra.mxu0 0.0
    %369 = vmatprep.subr.mxu0 0.0
    %370 = vmatpush2.xpose.msra.mxu0 0.0
    %371 = vmatprep.subr.mxu0 0.0
    %372 = vmatpush2.xpose.msra.mxu0 0.0
    %373 = vmatprep.subr.mxu0 0.0
    %374 = vmatpush2.xpose.msra.mxu0 0.0
    %375 = vmatprep.subr.mxu0 0.0
    %376 = vmatpush2.xpose.msra.mxu0 0.0
    %377 = vmatprep.subr.mxu0 0.0
    %378 = vmatpush2.xpose.msra.mxu0 0.0
    %379 = vmatprep.subr.mxu0 0.0
    %380 = vmatpush2.xpose.msra.mxu0 0.0
    %381 = vmatprep.subr.mxu0 0.0
    %382 = vmatpush2.xpose.msra.mxu0 0.0
    %383 = vmatprep.subr.mxu0 0.0
    %384 = vmatpush2.xpose.msra.mxu0 0.0
    %385 = vmatprep.subr.mxu0 0.0
    %386 = vmatpush2.xpose.msra.mxu0 0.0
    %387 = vmatprep.mubr.f32.mxu0 0.0
    %388 = vmatmul.mubr.f32.gmra.mxu0 %v304
    %v389 = vpop.f32.mrf.mxu0
    %v390 = vadd.f32 0.0, %v389
    %v391 = vpop.f32.mrf.mxu0
    %392 = vmatprep.mubr.f32.mxu0 0.0
    %393 = vmatmul.mubr.f32.gmra.mxu0 %v307
    %v394 = vpop.f32.mrf.mxu0
    %v395 = vadd.f32 0.0, %v394
    %v396 = vpop.f32.mrf.mxu0
    %397 = vmatprep.mubr.f32.mxu0 0.0
    %398 = vmatmul.mubr.f32.gmra.mxu0 %v310
    %v399 = vpop.f32.mrf.mxu0
    %v400 = vadd.f32 0.0, %v399
    %v401 = vpop.f32.mrf.mxu0
    %402 = vmatprep.mubr.f32.mxu0 0.0
    %403 = vmatmul.mubr.f32.gmra.mxu0 %v313
    %v404 = vpop.f32.mrf.mxu0
    %v405 = vadd.f32 0.0, %v404
    %v406 = vpop.f32.mrf.mxu0
    %407 = vdwg.mxu0
    %412 = vrot.lane.b32.xlu0 %v287, 96
    %v413 = vpop.permute.xlu0 %412
    %414 = vrot.lane.b32.xlu0 %v288, 96
    %v415 = vpop.permute.xlu0 %414
    %416 = vrot.lane.b32.xlu0 %v289, 96
    %v417 = vpop.permute.xlu0 %416
    %418 = vrot.lane.b32.xlu0 %v290, 96
    %v419 = vpop.permute.xlu0 %418
    %v421 = vsel %vm162, %v207, 0
    %v424 = vsel %vm162, %v208, 0
    %v427 = vsel %vm162, %v209, 0
    %v430 = vsel %vm162, %v210, 0
    %v432 = vsel %vm162, %v413, 0
    %v434 = vsel %vm162, %v415, 0
    %v436 = vsel %vm162, %v417, 0
    %v438 = vsel %vm162, %v419, 0
    %440 = vmatprep.subr.mxu0 0.0
    %441 = vmatpush1.xpose.msra.mxu0 0.0
    %442 = vmatprep.subr.mxu0 0.0
    %443 = vmatpush1.xpose.msra.mxu0 0.0
    %444 = vmatprep.subr.mxu0 0.0
    %445 = vmatpush1.xpose.msra.mxu0 0.0
    %446 = vmatprep.subr.mxu0 0.0
    %447 = vmatpush1.xpose.msra.mxu0 0.0
    %448 = vmatprep.subr.mxu0 0.0
    %449 = vmatpush1.xpose.msra.mxu0 0.0
    %450 = vmatprep.subr.mxu0 0.0
    %451 = vmatpush1.xpose.msra.mxu0 0.0
    %452 = vmatprep.subr.mxu0 0.0
    %453 = vmatpush1.xpose.msra.mxu0 0.0
    %454 = vmatprep.subr.mxu0 0.0
    %455 = vmatpush1.xpose.msra.mxu0 0.0
    %456 = vmatprep.subr.mxu0 0.0
    %457 = vmatpush1.xpose.msra.mxu0 0.0
    %458 = vmatprep.subr.mxu0 0.0
    %459 = vmatpush1.xpose.msra.mxu0 0.0
    %460 = vmatprep.subr.mxu0 0.0
    %461 = vmatpush1.xpose.msra.mxu0 0.0
    %462 = vmatprep.subr.mxu0 0.0
    %463 = vmatpush1.xpose.msra.mxu0 0.0
    %464 = vmatprep.subr.mxu0 0.0
    %465 = vmatpush1.xpose.msra.mxu0 %v438
    %466 = vmatprep.subr.mxu0 0.0
    %467 = vmatpush1.xpose.msra.mxu0 %v436
    %468 = vmatprep.subr.mxu0 0.0
    %469 = vmatpush1.xpose.msra.mxu0 %v434
    %470 = vmatprep.subr.mxu0 0.0
    %471 = vmatpush1.xpose.msra.mxu0 %v432
    %472 = vmatprep.subr.mxu0 0.0
    %473 = vmatpush2.xpose.msra.mxu0 0.0
    %474 = vmatprep.subr.mxu0 0.0
    %475 = vmatpush2.xpose.msra.mxu0 0.0
    %476 = vmatprep.subr.mxu0 0.0
    %477 = vmatpush2.xpose.msra.mxu0 0.0
    %478 = vmatprep.subr.mxu0 0.0
    %479 = vmatpush2.xpose.msra.mxu0 0.0
    %480 = vmatprep.subr.mxu0 0.0
    %481 = vmatpush2.xpose.msra.mxu0 0.0
    %482 = vmatprep.subr.mxu0 0.0
    %483 = vmatpush2.xpose.msra.mxu0 0.0
    %484 = vmatprep.subr.mxu0 0.0
    %485 = vmatpush2.xpose.msra.mxu0 0.0
    %486 = vmatprep.subr.mxu0 0.0
    %487 = vmatpush2.xpose.msra.mxu0 0.0
    %488 = vmatprep.subr.mxu0 0.0
    %489 = vmatpush2.xpose.msra.mxu0 0.0
    %490 = vmatprep.subr.mxu0 0.0
    %491 = vmatpush2.xpose.msra.mxu0 0.0
    %492 = vmatprep.subr.mxu0 0.0
    %493 = vmatpush2.xpose.msra.mxu0 0.0
    %494 = vmatprep.subr.mxu0 0.0
    %495 = vmatpush2.xpose.msra.mxu0 0.0
    %496 = vmatprep.subr.mxu0 0.0
    %497 = vmatpush2.xpose.msra.mxu0 0.0
    %498 = vmatprep.subr.mxu0 0.0
    %499 = vmatpush2.xpose.msra.mxu0 0.0
    %500 = vmatprep.subr.mxu0 0.0
    %501 = vmatpush2.xpose.msra.mxu0 0.0
    %502 = vmatprep.subr.mxu0 0.0
    %503 = vmatpush2.xpose.msra.mxu0 0.0
    %504 = vmatprep.mubr.f32.mxu0 0.0
    %505 = vmatmul.mubr.f32.gmra.mxu0 %v421
    %v506 = vpop.f32.mrf.mxu0
    %v507 = vadd.f32 0.0, %v506
    %v508 = vpop.f32.mrf.mxu0
    %509 = vmatprep.mubr.f32.mxu0 0.0
    %510 = vmatmul.mubr.f32.gmra.mxu0 %v424
    %v511 = vpop.f32.mrf.mxu0
    %v512 = vadd.f32 0.0, %v511
    %v513 = vpop.f32.mrf.mxu0
    %514 = vmatprep.mubr.f32.mxu0 0.0
    %515 = vmatmul.mubr.f32.gmra.mxu0 %v427
    %v516 = vpop.f32.mrf.mxu0
    %v517 = vadd.f32 0.0, %v516
    %v518 = vpop.f32.mrf.mxu0
    %519 = vmatprep.mubr.f32.mxu0 0.0
    %520 = vmatmul.mubr.f32.gmra.mxu0 %v430
    %v521 = vpop.f32.mrf.mxu0
    %v522 = vadd.f32 0.0, %v521
    %v523 = vpop.f32.mrf.mxu0
    %524 = vdwg.mxu0
    %s525 = sld [smem:[#allocation2]]
    %v526 = vstv %s525
    %v527 = vmul.f32 %v390, %v526
    %v528 = vmul.f32 %v395, %v526
    %v529 = vmul.f32 %v400, %v526
    %v530 = vmul.f32 %v405, %v526
    %v531 = vmul.f32 %v507, %v526
    %v532 = vmul.f32 %v512, %v526
    %v533 = vmul.f32 %v517, %v526
    %v534 = vmul.f32 %v522, %v526
    %v535 = vld [vmem:[%s5] sm:$0xff]
    %v536 = vld [vmem:[%s5 + $0x8] sm:$0xff]
    %v537 = vld [vmem:[%s5 + $0x10] sm:$0xff]
    %v538 = vld [vmem:[%s5 + $0x18] sm:$0xff]
    %v539 = vadd.f32 %v527, %v535
    %v540 = vadd.f32 %v528, %v536
    %v541 = vadd.f32 %v529, %v537
    %v542 = vadd.f32 %v530, %v538
    %v543 = vadd.f32 %v531, %v535
    %v544 = vadd.f32 %v532, %v536
    %v545 = vadd.f32 %v533, %v537
    %v546 = vadd.f32 %v534, %v538
    %v547 = vsel %vm76, %v539, -inf
    %548 = vmax.xlane.f32.xlu0 %v547
    %v549 = vpop.xlane.xlu0 %548
    %v550 = vsel %vm76, %v540, -inf
    %551 = vmax.xlane.f32.xlu0 %v550
    %v552 = vpop.xlane.xlu0 %551
    %v553 = vsel %vm76, %v541, -inf
    %554 = vmax.xlane.f32.xlu0 %v553
    %v555 = vpop.xlane.xlu0 %554
    %v556 = vsel %vm76, %v542, -inf
    %557 = vmax.xlane.f32.xlu0 %v556
    %v558 = vpop.xlane.xlu0 %557
    %v559 = vsel %vm76, %v543, -inf
    %560 = vmax.xlane.f32.xlu0 %v559
    %v561 = vpop.xlane.xlu0 %560
    %v562 = vsel %vm76, %v544, -inf
    %563 = vmax.xlane.f32.xlu0 %v562
    %v564 = vpop.xlane.xlu0 %563
    %v565 = vsel %vm76, %v545, -inf
    %566 = vmax.xlane.f32.xlu0 %v565
    %v567 = vpop.xlane.xlu0 %566
    %v568 = vsel %vm76, %v546, -inf
    %569 = vmax.xlane.f32.xlu0 %v568
    %v570 = vpop.xlane.xlu0 %569
    %v571 = vsub.f32 %v539, %v549
    %v572 = vsub.f32 %v540, %v552
    %v573 = vsub.f32 %v541, %v555
    %v574 = vsub.f32 %v542, %v558
    %v575 = vsub.f32 %v543, %v561
    %v576 = vsub.f32 %v544, %v564
    %v577 = vsub.f32 %v545, %v567
    %v578 = vsub.f32 %v546, %v570
    %v579 = vmul.f32 %v571, 1.442695
    %v580 = vpow.pop %v579
    %v581 = vmul.f32 %v572, 1.442695
    %v582 = vpow.pop %v581
    %v583 = vmul.f32 %v573, 1.442695
    %v584 = vpow.pop %v583
    %v585 = vmul.f32 %v574, 1.442695
    %v586 = vpow.pop %v585
    %v587 = vmul.f32 %v575, 1.442695
    %v588 = vpow.pop %v587
    %v589 = vmul.f32 %v576, 1.442695
    %v590 = vpow.pop %v589
    %v591 = vmul.f32 %v577, 1.442695
    %v592 = vpow.pop %v591
    %v593 = vmul.f32 %v578, 1.442695
    %v594 = vpow.pop %v593
    %v595 = vsel %vm76, %v580, 0.0
    %596 = vadd.xlane.f32.xlu0 %v595
    %v597 = vpop.xlane.xlu0 %596
    %v598 = vsel %vm76, %v582, 0.0
    %599 = vadd.xlane.f32.xlu0 %v598
    %v600 = vpop.xlane.xlu0 %599
    %v601 = vsel %vm76, %v584, 0.0
    %602 = vadd.xlane.f32.xlu0 %v601
    %v603 = vpop.xlane.xlu0 %602
    %v604 = vsel %vm76, %v586, 0.0
    %605 = vadd.xlane.f32.xlu0 %v604
    %v606 = vpop.xlane.xlu0 %605
    %v607 = vsel %vm76, %v588, 0.0
    %608 = vadd.xlane.f32.xlu0 %v607
    %v609 = vpop.xlane.xlu0 %608
    %v610 = vsel %vm76, %v590, 0.0
    %611 = vadd.xlane.f32.xlu0 %v610
    %v612 = vpop.xlane.xlu0 %611
    %v613 = vsel %vm76, %v592, 0.0
    %614 = vadd.xlane.f32.xlu0 %v613
    %v615 = vpop.xlane.xlu0 %614
    %v616 = vsel %vm76, %v594, 0.0
    %617 = vadd.xlane.f32.xlu0 %v616
    %v618 = vpop.xlane.xlu0 %617
    %v619 = vrcp.pop %v597
    %v620 = vrcp.pop %v600
    %v621 = vrcp.pop %v603
    %v622 = vrcp.pop %v606
    %v623 = vrcp.pop %v609
    %v624 = vrcp.pop %v612
    %v625 = vrcp.pop %v615
    %v626 = vrcp.pop %v618
    %v627 = vmul.f32 %v580, %v619
    %v628 = vmul.f32 %v582, %v620
    %v629 = vmul.f32 %v584, %v621
    %v630 = vmul.f32 %v586, %v622
    %v631 = vmul.f32 %v588, %v623
    %v632 = vmul.f32 %v590, %v624
    %v633 = vmul.f32 %v592, %v625
    %v634 = vmul.f32 %v594, %v626
    %v635 = vpack.c.bf16 %v628, %v627
    %v636 = vpack.c.bf16 %v630, %v629
    %v637 = vpack.c.bf16 %v632, %v631
    %v638 = vpack.c.bf16 %v634, %v633
    %v639 = vpack.c.bf16 %v127, %v124
    %v640 = vpack.c.bf16 %v135, %v132
    %v641 = vpack.c.bf16 %v143, %v140
    %v642 = vpack.c.bf16 %v151, %v148
    %645 = vrot.lane.b32.xlu0 %v639, 64
    %v646 = vpop.permute.xlu0 %645
    %647 = vrot.lane.b32.xlu0 %v640, 64
    %v648 = vpop.permute.xlu0 %647
    %v652 = vsel %vm76, %v635, 0
    %v655 = vsel %vm76, %v636, 0
    %657 = vmatprep.subr.bf16.mxu0 0
    %658 = vmatpush1.bf16.msra.mxu0 0
    %659 = vmatprep.subr.bf16.mxu0 0
    %660 = vmatpush1.bf16.msra.mxu0 0
    %661 = vmatprep.subr.bf16.mxu0 0
    %662 = vmatpush1.bf16.msra.mxu0 0
    %663 = vmatprep.subr.bf16.mxu0 0
    %664 = vmatpush1.bf16.msra.mxu0 0
    %665 = vmatprep.subr.bf16.mxu0 0
    %666 = vmatpush1.bf16.msra.mxu0 0
    %667 = vmatprep.subr.bf16.mxu0 0
    %668 = vmatpush1.bf16.msra.mxu0 0
    %669 = vmatprep.subr.bf16.mxu0 0
    %670 = vmatpush1.bf16.msra.mxu0 %v648
    %671 = vmatprep.subr.bf16.mxu0 0
    %672 = vmatpush1.bf16.msra.mxu0 %v646
    %673 = vmatprep.subr.bf16.mxu0 0
    %674 = vmatpush2.bf16.msra.mxu0 0
    %675 = vmatprep.subr.bf16.mxu0 0
    %676 = vmatpush2.bf16.msra.mxu0 0
    %677 = vmatprep.subr.bf16.mxu0 0
    %678 = vmatpush2.bf16.msra.mxu0 0
    %679 = vmatprep.subr.bf16.mxu0 0
    %680 = vmatpush2.bf16.msra.mxu0 0
    %681 = vmatprep.subr.bf16.mxu0 0
    %682 = vmatpush2.bf16.msra.mxu0 0
    %683 = vmatprep.subr.bf16.mxu0 0
    %684 = vmatpush2.bf16.msra.mxu0 0
    %685 = vmatprep.subr.bf16.mxu0 0
    %686 = vmatpush2.bf16.msra.mxu0 0
    %687 = vmatprep.subr.bf16.mxu0 0
    %688 = vmatpush2.bf16.msra.mxu0 0
    %689 = vmatprep.mubr.bf16.mxu0 0
    %690 = vmatmul.mubr.bf16.gmra.mxu0 %v652
    %v691 = vpop.f32.mrf.mxu0
    %v692 = vadd.f32 0.0, %v691
    %v693 = vpop.f32.mrf.mxu0
    %v694 = vpop.f32.mrf.mxu0
    %v695 = vadd.f32 0.0, %v694
    %v696 = vpop.f32.mrf.mxu0
    %697 = vmatprep.mubr.bf16.mxu0 0
    %698 = vmatmul.mubr.bf16.gmra.mxu0 %v655
    %v699 = vpop.f32.mrf.mxu0
    %v700 = vadd.f32 0.0, %v699
    %v701 = vpop.f32.mrf.mxu0
    %v702 = vpop.f32.mrf.mxu0
    %v703 = vadd.f32 0.0, %v702
    %v704 = vpop.f32.mrf.mxu0
    %705 = vdwg.mxu0
    %708 = vrot.lane.b32.xlu0 %v641, 64
    %v709 = vpop.permute.xlu0 %708
    %710 = vrot.lane.b32.xlu0 %v642, 64
    %v711 = vpop.permute.xlu0 %710
    %v715 = vsel %vm76, %v637, 0
    %v718 = vsel %vm76, %v638, 0
    %720 = vmatprep.subr.bf16.mxu0 0
    %721 = vmatpush1.bf16.msra.mxu0 0
    %722 = vmatprep.subr.bf16.mxu0 0
    %723 = vmatpush1.bf16.msra.mxu0 0
    %724 = vmatprep.subr.bf16.mxu0 0
    %725 = vmatpush1.bf16.msra.mxu0 0
    %726 = vmatprep.subr.bf16.mxu0 0
    %727 = vmatpush1.bf16.msra.mxu0 0
    %728 = vmatprep.subr.bf16.mxu0 0
    %729 = vmatpush1.bf16.msra.mxu0 0
    %730 = vmatprep.subr.bf16.mxu0 0
    %731 = vmatpush1.bf16.msra.mxu0 0
    %732 = vmatprep.subr.bf16.mxu0 0
    %733 = vmatpush1.bf16.msra.mxu0 %v711
    %734 = vmatprep.subr.bf16.mxu0 0
    %735 = vmatpush1.bf16.msra.mxu0 %v709
    %736 = vmatprep.subr.bf16.mxu0 0
    %737 = vmatpush2.bf16.msra.mxu0 0
    %738 = vmatprep.subr.bf16.mxu0 0
    %739 = vmatpush2.bf16.msra.mxu0 0
    %740 = vmatprep.subr.bf16.mxu0 0
    %741 = vmatpush2.bf16.msra.mxu0 0
    %742 = vmatprep.subr.bf16.mxu0 0
    %743 = vmatpush2.bf16.msra.mxu0 0
    %744 = vmatprep.subr.bf16.mxu0 0
    %745 = vmatpush2.bf16.msra.mxu0 0
    %746 = vmatprep.subr.bf16.mxu0 0
    %747 = vmatpush2.bf16.msra.mxu0 0
    %748 = vmatprep.subr.bf16.mxu0 0
    %749 = vmatpush2.bf16.msra.mxu0 0
    %750 = vmatprep.subr.bf16.mxu0 0
    %751 = vmatpush2.bf16.msra.mxu0 0
    %752 = vmatprep.mubr.bf16.mxu0 0
    %753 = vmatmul.mubr.bf16.gmra.mxu0 %v715
    %v754 = vpop.f32.mrf.mxu0
    %v755 = vadd.f32 0.0, %v754
    %v756 = vpop.f32.mrf.mxu0
    %v757 = vpop.f32.mrf.mxu0
    %v758 = vadd.f32 0.0, %v757
    %v759 = vpop.f32.mrf.mxu0
    %760 = vmatprep.mubr.bf16.mxu0 0
    %761 = vmatmul.mubr.bf16.gmra.mxu0 %v718
    %v762 = vpop.f32.mrf.mxu0
    %v763 = vadd.f32 0.0, %v762
    %v764 = vpop.f32.mrf.mxu0
    %v765 = vpop.f32.mrf.mxu0
    %v766 = vadd.f32 0.0, %v765
    %v767 = vpop.f32.mrf.mxu0
    %768 = vdwg.mxu0
    %769 = vrot.lane.b32.xlu0 %v154, 120
    %v770 = vpop.permute.xlu0 %769
    %771 = vrot.lane.b32.xlu0 %v155, 120
    %v772 = vpop.permute.xlu0 %771
    %773 = vrot.lane.b32.xlu0 %v156, 120
    %v774 = vpop.permute.xlu0 %773
    %775 = vrot.lane.b32.xlu0 %v157, 120
    %v776 = vpop.permute.xlu0 %775
    %777 = vrot.lane.b32.xlu0 %v158, 120
    %v778 = vpop.permute.xlu0 %777
    %779 = vrot.lane.b32.xlu0 %v159, 120
    %v780 = vpop.permute.xlu0 %779
    %781 = vrot.lane.b32.xlu0 %v160, 120
    %v782 = vpop.permute.xlu0 %781
    %783 = vrot.lane.b32.xlu0 %v161, 120
    %v784 = vpop.permute.xlu0 %783
    %v793 = vsel %vm162, %v770, 0.0
    %794 = vadd.xlane.f32.xlu0 %v793
    %v795 = vpop.xlane.xlu0 %794
    %v796 = vsel %vm162, %v772, 0.0
    %797 = vadd.xlane.f32.xlu0 %v796
    %v798 = vpop.xlane.xlu0 %797
    %v799 = vsel %vm162, %v774, 0.0
    %800 = vadd.xlane.f32.xlu0 %v799
    %v801 = vpop.xlane.xlu0 %800
    %v802 = vsel %vm162, %v776, 0.0
    %803 = vadd.xlane.f32.xlu0 %v802
    %v804 = vpop.xlane.xlu0 %803
    %v805 = vsel %vm162, %v778, 0.0
    %806 = vadd.xlane.f32.xlu0 %v805
    %v807 = vpop.xlane.xlu0 %806
    %v808 = vsel %vm162, %v780, 0.0
    %809 = vadd.xlane.f32.xlu0 %v808
    %v810 = vpop.xlane.xlu0 %809
    %v811 = vsel %vm162, %v782, 0.0
    %812 = vadd.xlane.f32.xlu0 %v811
    %v813 = vpop.xlane.xlu0 %812
    %v814 = vsel %vm162, %v784, 0.0
    %815 = vadd.xlane.f32.xlu0 %v814
    %v816 = vpop.xlane.xlu0 %815
    %v817 = vmax.f32 %v795, 1e-24
    %v818 = vmax.f32 %v798, 1e-24
    %v819 = vmax.f32 %v801, 1e-24
    %v820 = vmax.f32 %v804, 1e-24
    %v821 = vmax.f32 %v807, 1e-24
    %v822 = vmax.f32 %v810, 1e-24
    %v823 = vmax.f32 %v813, 1e-24
    %v824 = vmax.f32 %v816, 1e-24
    %v825 = vrsqrt.pop %v817
    %v826 = vrsqrt.pop %v818
    %v827 = vrsqrt.pop %v819
    %v828 = vrsqrt.pop %v820
    %v829 = vrsqrt.pop %v821
    %v830 = vrsqrt.pop %v822
    %v831 = vrsqrt.pop %v823
    %v832 = vrsqrt.pop %v824
    %v833 = vmul.f32 %v124, %v825
    %v834 = vmul.f32 %v127, %v826
    %v835 = vmul.f32 %v132, %v827
    %v836 = vmul.f32 %v135, %v828
    %v837 = vmul.f32 %v140, %v829
    %v838 = vmul.f32 %v143, %v830
    %v839 = vmul.f32 %v148, %v831
    %v840 = vmul.f32 %v151, %v832
    %841 = vrot.lane.b32.xlu0 %v154, 88
    %v842 = vpop.permute.xlu0 %841
    %843 = vrot.lane.b32.xlu0 %v155, 88
    %v844 = vpop.permute.xlu0 %843
    %845 = vrot.lane.b32.xlu0 %v156, 88
    %v846 = vpop.permute.xlu0 %845
    %847 = vrot.lane.b32.xlu0 %v157, 88
    %v848 = vpop.permute.xlu0 %847
    %849 = vrot.lane.b32.xlu0 %v158, 88
    %v850 = vpop.permute.xlu0 %849
    %851 = vrot.lane.b32.xlu0 %v159, 88
    %v852 = vpop.permute.xlu0 %851
    %853 = vrot.lane.b32.xlu0 %v160, 88
    %v854 = vpop.permute.xlu0 %853
    %855 = vrot.lane.b32.xlu0 %v161, 88
    %v856 = vpop.permute.xlu0 %855
    %v865 = vsel %vm162, %v842, 0.0
    %866 = vadd.xlane.f32.xlu0 %v865
    %v867 = vpop.xlane.xlu0 %866
    %v868 = vsel %vm162, %v844, 0.0
    %869 = vadd.xlane.f32.xlu0 %v868
    %v870 = vpop.xlane.xlu0 %869
    %v871 = vsel %vm162, %v846, 0.0
    %872 = vadd.xlane.f32.xlu0 %v871
    %v873 = vpop.xlane.xlu0 %872
    %v874 = vsel %vm162, %v848, 0.0
    %875 = vadd.xlane.f32.xlu0 %v874
    %v876 = vpop.xlane.xlu0 %875
    %v877 = vsel %vm162, %v850, 0.0
    %878 = vadd.xlane.f32.xlu0 %v877
    %v879 = vpop.xlane.xlu0 %878
    %v880 = vsel %vm162, %v852, 0.0
    %881 = vadd.xlane.f32.xlu0 %v880
    %v882 = vpop.xlane.xlu0 %881
    %v883 = vsel %vm162, %v854, 0.0
    %884 = vadd.xlane.f32.xlu0 %v883
    %v885 = vpop.xlane.xlu0 %884
    %v886 = vsel %vm162, %v856, 0.0
    %887 = vadd.xlane.f32.xlu0 %v886
    %v888 = vpop.xlane.xlu0 %887
    %v889 = vmax.f32 %v867, 1e-24
    %v890 = vmax.f32 %v870, 1e-24
    %v891 = vmax.f32 %v873, 1e-24
    %v892 = vmax.f32 %v876, 1e-24
    %v893 = vmax.f32 %v879, 1e-24
    %v894 = vmax.f32 %v882, 1e-24
    %v895 = vmax.f32 %v885, 1e-24
    %v896 = vmax.f32 %v888, 1e-24
    %v897 = vrsqrt.pop %v889
    %v898 = vrsqrt.pop %v890
    %v899 = vrsqrt.pop %v891
    %v900 = vrsqrt.pop %v892
    %v901 = vrsqrt.pop %v893
    %v902 = vrsqrt.pop %v894
    %v903 = vrsqrt.pop %v895
    %v904 = vrsqrt.pop %v896
    %v905 = vmul.f32 %v124, %v897
    %v906 = vmul.f32 %v127, %v898
    %v907 = vmul.f32 %v132, %v899
    %v908 = vmul.f32 %v135, %v900
    %v909 = vmul.f32 %v140, %v901
    %v910 = vmul.f32 %v143, %v902
    %v911 = vmul.f32 %v148, %v903
    %v912 = vmul.f32 %v151, %v904
    %917 = vrot.lane.b32.xlu0 %v833, 120
    %v918 = vpop.permute.xlu0 %917
    %919 = vrot.lane.b32.xlu0 %v834, 120
    %v920 = vpop.permute.xlu0 %919
    %921 = vrot.lane.b32.xlu0 %v835, 120
    %v922 = vpop.permute.xlu0 %921
    %923 = vrot.lane.b32.xlu0 %v836, 120
    %v924 = vpop.permute.xlu0 %923
    %929 = vrot.lane.b32.xlu0 %v905, 88
    %v930 = vpop.permute.xlu0 %929
    %931 = vrot.lane.b32.xlu0 %v906, 88
    %v932 = vpop.permute.xlu0 %931
    %933 = vrot.lane.b32.xlu0 %v907, 88
    %v934 = vpop.permute.xlu0 %933
    %935 = vrot.lane.b32.xlu0 %v908, 88
    %v936 = vpop.permute.xlu0 %935
    %v937 = vsel %vm162, %v918, 0
    %v939 = vsel %vm162, %v920, 0
    %v941 = vsel %vm162, %v922, 0
    %v943 = vsel %vm162, %v924, 0
    %v945 = vsel %vm162, %v930, 0
    %v947 = vsel %vm162, %v932, 0
    %v949 = vsel %vm162, %v934, 0
    %v951 = vsel %vm162, %v936, 0
    %953 = vmatprep.subr.mxu0 0.0
    %954 = vmatpush1.xpose.msra.mxu0 0.0
    %955 = vmatprep.subr.mxu0 0.0
    %956 = vmatpush1.xpose.msra.mxu0 0.0
    %957 = vmatprep.subr.mxu0 0.0
    %958 = vmatpush1.xpose.msra.mxu0 0.0
    %959 = vmatprep.subr.mxu0 0.0
    %960 = vmatpush1.xpose.msra.mxu0 0.0
    %961 = vmatprep.subr.mxu0 0.0
    %962 = vmatpush1.xpose.msra.mxu0 0.0
    %963 = vmatprep.subr.mxu0 0.0
    %964 = vmatpush1.xpose.msra.mxu0 0.0
    %965 = vmatprep.subr.mxu0 0.0
    %966 = vmatpush1.xpose.msra.mxu0 0.0
    %967 = vmatprep.subr.mxu0 0.0
    %968 = vmatpush1.xpose.msra.mxu0 0.0
    %969 = vmatprep.subr.mxu0 0.0
    %970 = vmatpush1.xpose.msra.mxu0 0.0
    %971 = vmatprep.subr.mxu0 0.0
    %972 = vmatpush1.xpose.msra.mxu0 0.0
    %973 = vmatprep.subr.mxu0 0.0
    %974 = vmatpush1.xpose.msra.mxu0 0.0
    %975 = vmatprep.subr.mxu0 0.0
    %976 = vmatpush1.xpose.msra.mxu0 0.0
    %977 = vmatprep.subr.mxu0 0.0
    %978 = vmatpush1.xpose.msra.mxu0 %v951
    %979 = vmatprep.subr.mxu0 0.0
    %980 = vmatpush1.xpose.msra.mxu0 %v949
    %981 = vmatprep.subr.mxu0 0.0
    %982 = vmatpush1.xpose.msra.mxu0 %v947
    %983 = vmatprep.subr.mxu0 0.0
    %984 = vmatpush1.xpose.msra.mxu0 %v945
    %985 = vmatprep.subr.mxu0 0.0
    %986 = vmatpush2.xpose.msra.mxu0 0.0
    %987 = vmatprep.subr.mxu0 0.0
    %988 = vmatpush2.xpose.msra.mxu0 0.0
    %989 = vmatprep.subr.mxu0 0.0
    %990 = vmatpush2.xpose.msra.mxu0 0.0
    %991 = vmatprep.subr.mxu0 0.0
    %992 = vmatpush2.xpose.msra.mxu0 0.0
    %993 = vmatprep.subr.mxu0 0.0
    %994 = vmatpush2.xpose.msra.mxu0 0.0
    %995 = vmatprep.subr.mxu0 0.0
    %996 = vmatpush2.xpose.msra.mxu0 0.0
    %997 = vmatprep.subr.mxu0 0.0
    %998 = vmatpush2.xpose.msra.mxu0 0.0
    %999 = vmatprep.subr.mxu0 0.0
    %1000 = vmatpush2.xpose.msra.mxu0 0.0
    %1001 = vmatprep.subr.mxu0 0.0
    %1002 = vmatpush2.xpose.msra.mxu0 0.0
    %1003 = vmatprep.subr.mxu0 0.0
    %1004 = vmatpush2.xpose.msra.mxu0 0.0
    %1005 = vmatprep.subr.mxu0 0.0
    %1006 = vmatpush2.xpose.msra.mxu0 0.0
    %1007 = vmatprep.subr.mxu0 0.0
    %1008 = vmatpush2.xpose.msra.mxu0 0.0
    %1009 = vmatprep.subr.mxu0 0.0
    %1010 = vmatpush2.xpose.msra.mxu0 0.0
    %1011 = vmatprep.subr.mxu0 0.0
    %1012 = vmatpush2.xpose.msra.mxu0 0.0
    %1013 = vmatprep.subr.mxu0 0.0
    %1014 = vmatpush2.xpose.msra.mxu0 0.0
    %1015 = vmatprep.subr.mxu0 0.0
    %1016 = vmatpush2.xpose.msra.mxu0 0.0
    %1017 = vmatprep.mubr.f32.mxu0 0.0
    %1018 = vmatmul.mubr.f32.gmra.mxu0 %v937
    %v1019 = vpop.f32.mrf.mxu0
    %v1020 = vadd.f32 0.0, %v1019
    %v1021 = vpop.f32.mrf.mxu0
    %1022 = vmatprep.mubr.f32.mxu0 0.0
    %1023 = vmatmul.mubr.f32.gmra.mxu0 %v939
    %v1024 = vpop.f32.mrf.mxu0
    %v1025 = vadd.f32 0.0, %v1024
    %v1026 = vpop.f32.mrf.mxu0
    %1027 = vmatprep.mubr.f32.mxu0 0.0
    %1028 = vmatmul.mubr.f32.gmra.mxu0 %v941
    %v1029 = vpop.f32.mrf.mxu0
    %v1030 = vadd.f32 0.0, %v1029
    %v1031 = vpop.f32.mrf.mxu0
    %1032 = vmatprep.mubr.f32.mxu0 0.0
    %1033 = vmatmul.mubr.f32.gmra.mxu0 %v943
    %v1034 = vpop.f32.mrf.mxu0
    %v1035 = vadd.f32 0.0, %v1034
    %v1036 = vpop.f32.mrf.mxu0
    %1037 = vdwg.mxu0
    %1042 = vrot.lane.b32.xlu0 %v837, 120
    %v1043 = vpop.permute.xlu0 %1042
    %1044 = vrot.lane.b32.xlu0 %v838, 120
    %v1045 = vpop.permute.xlu0 %1044
    %1046 = vrot.lane.b32.xlu0 %v839, 120
    %v1047 = vpop.permute.xlu0 %1046
    %1048 = vrot.lane.b32.xlu0 %v840, 120
    %v1049 = vpop.permute.xlu0 %1048
    %1054 = vrot.lane.b32.xlu0 %v909, 88
    %v1055 = vpop.permute.xlu0 %1054
    %1056 = vrot.lane.b32.xlu0 %v910, 88
    %v1057 = vpop.permute.xlu0 %1056
    %1058 = vrot.lane.b32.xlu0 %v911, 88
    %v1059 = vpop.permute.xlu0 %1058
    %1060 = vrot.lane.b32.xlu0 %v912, 88
    %v1061 = vpop.permute.xlu0 %1060
    %v1062 = vsel %vm162, %v1043, 0
    %v1064 = vsel %vm162, %v1045, 0
    %v1066 = vsel %vm162, %v1047, 0
    %v1068 = vsel %vm162, %v1049, 0
    %v1070 = vsel %vm162, %v1055, 0
    %v1072 = vsel %vm162, %v1057, 0
    %v1074 = vsel %vm162, %v1059, 0
    %v1076 = vsel %vm162, %v1061, 0
    %1078 = vmatprep.subr.mxu0 0.0
    %1079 = vmatpush1.xpose.msra.mxu0 0.0
    %1080 = vmatprep.subr.mxu0 0.0
    %1081 = vmatpush1.xpose.msra.mxu0 0.0
    %1082 = vmatprep.subr.mxu0 0.0
    %1083 = vmatpush1.xpose.msra.mxu0 0.0
    %1084 = vmatprep.subr.mxu0 0.0
    %1085 = vmatpush1.xpose.msra.mxu0 0.0
    %1086 = vmatprep.subr.mxu0 0.0
    %1087 = vmatpush1.xpose.msra.mxu0 0.0
    %1088 = vmatprep.subr.mxu0 0.0
    %1089 = vmatpush1.xpose.msra.mxu0 0.0
    %1090 = vmatprep.subr.mxu0 0.0
    %1091 = vmatpush1.xpose.msra.mxu0 0.0
    %1092 = vmatprep.subr.mxu0 0.0
    %1093 = vmatpush1.xpose.msra.mxu0 0.0
    %1094 = vmatprep.subr.mxu0 0.0
    %1095 = vmatpush1.xpose.msra.mxu0 0.0
    %1096 = vmatprep.subr.mxu0 0.0
    %1097 = vmatpush1.xpose.msra.mxu0 0.0
    %1098 = vmatprep.subr.mxu0 0.0
    %1099 = vmatpush1.xpose.msra.mxu0 0.0
    %1100 = vmatprep.subr.mxu0 0.0
    %1101 = vmatpush1.xpose.msra.mxu0 0.0
    %1102 = vmatprep.subr.mxu0 0.0
    %1103 = vmatpush1.xpose.msra.mxu0 %v1076
    %1104 = vmatprep.subr.mxu0 0.0
    %1105 = vmatpush1.xpose.msra.mxu0 %v1074
    %1106 = vmatprep.subr.mxu0 0.0
    %1107 = vmatpush1.xpose.msra.mxu0 %v1072
    %1108 = vmatprep.subr.mxu0 0.0
    %1109 = vmatpush1.xpose.msra.mxu0 %v1070
    %1110 = vmatprep.subr.mxu0 0.0
    %1111 = vmatpush2.xpose.msra.mxu0 0.0
    %1112 = vmatprep.subr.mxu0 0.0
    %1113 = vmatpush2.xpose.msra.mxu0 0.0
    %1114 = vmatprep.subr.mxu0 0.0
    %1115 = vmatpush2.xpose.msra.mxu0 0.0
    %1116 = vmatprep.subr.mxu0 0.0
    %1117 = vmatpush2.xpose.msra.mxu0 0.0
    %1118 = vmatprep.subr.mxu0 0.0
    %1119 = vmatpush2.xpose.msra.mxu0 0.0
    %1120 = vmatprep.subr.mxu0 0.0
    %1121 = vmatpush2.xpose.msra.mxu0 0.0
    %1122 = vmatprep.subr.mxu0 0.0
    %1123 = vmatpush2.xpose.msra.mxu0 0.0
    %1124 = vmatprep.subr.mxu0 0.0
    %1125 = vmatpush2.xpose.msra.mxu0 0.0
    %1126 = vmatprep.subr.mxu0 0.0
    %1127 = vmatpush2.xpose.msra.mxu0 0.0
    %1128 = vmatprep.subr.mxu0 0.0
    %1129 = vmatpush2.xpose.msra.mxu0 0.0
    %1130 = vmatprep.subr.mxu0 0.0
    %1131 = vmatpush2.xpose.msra.mxu0 0.0
    %1132 = vmatprep.subr.mxu0 0.0
    %1133 = vmatpush2.xpose.msra.mxu0 0.0
    %1134 = vmatprep.subr.mxu0 0.0
    %1135 = vmatpush2.xpose.msra.mxu0 0.0
    %1136 = vmatprep.subr.mxu0 0.0
    %1137 = vmatpush2.xpose.msra.mxu0 0.0
    %1138 = vmatprep.subr.mxu0 0.0
    %1139 = vmatpush2.xpose.msra.mxu0 0.0
    %1140 = vmatprep.subr.mxu0 0.0
    %1141 = vmatpush2.xpose.msra.mxu0 0.0
    %1142 = vmatprep.mubr.f32.mxu0 0.0
    %1143 = vmatmul.mubr.f32.gmra.mxu0 %v1062
    %v1144 = vpop.f32.mrf.mxu0
    %v1145 = vadd.f32 0.0, %v1144
    %v1146 = vpop.f32.mrf.mxu0
    %1147 = vmatprep.mubr.f32.mxu0 0.0
    %1148 = vmatmul.mubr.f32.gmra.mxu0 %v1064
    %v1149 = vpop.f32.mrf.mxu0
    %v1150 = vadd.f32 0.0, %v1149
    %v1151 = vpop.f32.mrf.mxu0
    %1152 = vmatprep.mubr.f32.mxu0 0.0
    %1153 = vmatmul.mubr.f32.gmra.mxu0 %v1066
    %v1154 = vpop.f32.mrf.mxu0
    %v1155 = vadd.f32 0.0, %v1154
    %v1156 = vpop.f32.mrf.mxu0
    %1157 = vmatprep.mubr.f32.mxu0 0.0
    %1158 = vmatmul.mubr.f32.gmra.mxu0 %v1068
    %v1159 = vpop.f32.mrf.mxu0
    %v1160 = vadd.f32 0.0, %v1159
    %v1161 = vpop.f32.mrf.mxu0
    %1162 = vdwg.mxu0
    %s1163 = sld [smem:[#allocation2 + $0x1]]
    %v1164 = vstv %s1163
    %v1165 = vmul.f32 %v1020, %v1164
    %v1166 = vmul.f32 %v1025, %v1164
    %v1167 = vmul.f32 %v1030, %v1164
    %v1168 = vmul.f32 %v1035, %v1164
    %v1169 = vmul.f32 %v1145, %v1164
    %v1170 = vmul.f32 %v1150, %v1164
    %v1171 = vmul.f32 %v1155, %v1164
    %v1172 = vmul.f32 %v1160, %v1164
    %s1173 = scalar_lea.vmem %s5, 32
    %v1174 = vld [vmem:[%s1173] sm:$0xff]
    %v1175 = vld [vmem:[%s1173 + $0x8] sm:$0xff]
    %v1176 = vld [vmem:[%s1173 + $0x10] sm:$0xff]
    %v1177 = vld [vmem:[%s1173 + $0x18] sm:$0xff]
    %v1178 = vadd.f32 %v1165, %v1174
    %v1179 = vadd.f32 %v1166, %v1175
    %v1180 = vadd.f32 %v1167, %v1176
    %v1181 = vadd.f32 %v1168, %v1177
    %v1182 = vadd.f32 %v1169, %v1174
    %v1183 = vadd.f32 %v1170, %v1175
    %v1184 = vadd.f32 %v1171, %v1176
    %v1185 = vadd.f32 %v1172, %v1177
    %v1186 = vsel %vm76, %v1178, -inf
    %1187 = vmax.xlane.f32.xlu0 %v1186
    %v1188 = vpop.xlane.xlu0 %1187
    %v1189 = vsel %vm76, %v1179, -inf
    %1190 = vmax.xlane.f32.xlu0 %v1189
    %v1191 = vpop.xlane.xlu0 %1190
    %v1192 = vsel %vm76, %v1180, -inf
    %1193 = vmax.xlane.f32.xlu0 %v1192
    %v1194 = vpop.xlane.xlu0 %1193
    %v1195 = vsel %vm76, %v1181, -inf
    %1196 = vmax.xlane.f32.xlu0 %v1195
    %v1197 = vpop.xlane.xlu0 %1196
    %v1198 = vsel %vm76, %v1182, -inf
    %1199 = vmax.xlane.f32.xlu0 %v1198
    %v1200 = vpop.xlane.xlu0 %1199
    %v1201 = vsel %vm76, %v1183, -inf
    %1202 = vmax.xlane.f32.xlu0 %v1201
    %v1203 = vpop.xlane.xlu0 %1202
    %v1204 = vsel %vm76, %v1184, -inf
    %1205 = vmax.xlane.f32.xlu0 %v1204
    %v1206 = vpop.xlane.xlu0 %1205
    %v1207 = vsel %vm76, %v1185, -inf
    %1208 = vmax.xlane.f32.xlu0 %v1207
    %v1209 = vpop.xlane.xlu0 %1208
    %v1210 = vsub.f32 %v1178, %v1188
    %v1211 = vsub.f32 %v1179, %v1191
    %v1212 = vsub.f32 %v1180, %v1194
    %v1213 = vsub.f32 %v1181, %v1197
    %v1214 = vsub.f32 %v1182, %v1200
    %v1215 = vsub.f32 %v1183, %v1203
    %v1216 = vsub.f32 %v1184, %v1206
    %v1217 = vsub.f32 %v1185, %v1209
    %v1218 = vmul.f32 %v1210, 1.442695
    %v1219 = vpow.pop %v1218
    %v1220 = vmul.f32 %v1211, 1.442695
    %v1221 = vpow.pop %v1220
    %v1222 = vmul.f32 %v1212, 1.442695
    %v1223 = vpow.pop %v1222
    %v1224 = vmul.f32 %v1213, 1.442695
    %v1225 = vpow.pop %v1224
    %v1226 = vmul.f32 %v1214, 1.442695
    %v1227 = vpow.pop %v1226
    %v1228 = vmul.f32 %v1215, 1.442695
    %v1229 = vpow.pop %v1228
    %v1230 = vmul.f32 %v1216, 1.442695
    %v1231 = vpow.pop %v1230
    %v1232 = vmul.f32 %v1217, 1.442695
    %v1233 = vpow.pop %v1232
    %v1234 = vsel %vm76, %v1219, 0.0
    %1235 = vadd.xlane.f32.xlu0 %v1234
    %v1236 = vpop.xlane.xlu0 %1235
    %v1237 = vsel %vm76, %v1221, 0.0
    %1238 = vadd.xlane.f32.xlu0 %v1237
    %v1239 = vpop.xlane.xlu0 %1238
    %v1240 = vsel %vm76, %v1223, 0.0
    %1241 = vadd.xlane.f32.xlu0 %v1240
    %v1242 = vpop.xlane.xlu0 %1241
    %v1243 = vsel %vm76, %v1225, 0.0
    %1244 = vadd.xlane.f32.xlu0 %v1243
    %v1245 = vpop.xlane.xlu0 %1244
    %v1246 = vsel %vm76, %v1227, 0.0
    %1247 = vadd.xlane.f32.xlu0 %v1246
    %v1248 = vpop.xlane.xlu0 %1247
    %v1249 = vsel %vm76, %v1229, 0.0
    %1250 = vadd.xlane.f32.xlu0 %v1249
    %v1251 = vpop.xlane.xlu0 %1250
    %v1252 = vsel %vm76, %v1231, 0.0
    %1253 = vadd.xlane.f32.xlu0 %v1252
    %v1254 = vpop.xlane.xlu0 %1253
    %v1255 = vsel %vm76, %v1233, 0.0
    %1256 = vadd.xlane.f32.xlu0 %v1255
    %v1257 = vpop.xlane.xlu0 %1256
    %v1258 = vrcp.pop %v1236
    %v1259 = vrcp.pop %v1239
    %v1260 = vrcp.pop %v1242
    %v1261 = vrcp.pop %v1245
    %v1262 = vrcp.pop %v1248
    %v1263 = vrcp.pop %v1251
    %v1264 = vrcp.pop %v1254
    %v1265 = vrcp.pop %v1257
    %v1266 = vmul.f32 %v1219, %v1258
    %v1267 = vmul.f32 %v1221, %v1259
    %v1268 = vmul.f32 %v1223, %v1260
    %v1269 = vmul.f32 %v1225, %v1261
    %v1270 = vmul.f32 %v1227, %v1262
    %v1271 = vmul.f32 %v1229, %v1263
    %v1272 = vmul.f32 %v1231, %v1264
    %v1273 = vmul.f32 %v1233, %v1265
    %v1274 = vpack.c.bf16 %v1267, %v1266
    %v1275 = vpack.c.bf16 %v1269, %v1268
    %v1276 = vpack.c.bf16 %v1271, %v1270
    %v1277 = vpack.c.bf16 %v1273, %v1272
    %1278 = vrot.lane.b32.xlu0 %v639, 56
    %v1279 = vpop.permute.xlu0 %1278
    %1280 = vrot.lane.b32.xlu0 %v640, 56
    %v1281 = vpop.permute.xlu0 %1280
    %v1285 = vsel %vm76, %v1274, 0
    %v1288 = vsel %vm76, %v1275, 0
    %1290 = vmatprep.subr.bf16.mxu0 0
    %1291 = vmatpush1.bf16.msra.mxu0 0
    %1292 = vmatprep.subr.bf16.mxu0 0
    %1293 = vmatpush1.bf16.msra.mxu0 0
    %1294 = vmatprep.subr.bf16.mxu0 0
    %1295 = vmatpush1.bf16.msra.mxu0 0
    %1296 = vmatprep.subr.bf16.mxu0 0
    %1297 = vmatpush1.bf16.msra.mxu0 0
    %1298 = vmatprep.subr.bf16.mxu0 0
    %1299 = vmatpush1.bf16.msra.mxu0 0
    %1300 = vmatprep.subr.bf16.mxu0 0
    %1301 = vmatpush1.bf16.msra.mxu0 0
    %1302 = vmatprep.subr.bf16.mxu0 0
    %1303 = vmatpush1.bf16.msra.mxu0 %v1281
    %1304 = vmatprep.subr.bf16.mxu0 0
    %1305 = vmatpush1.bf16.msra.mxu0 %v1279
    %1306 = vmatprep.subr.bf16.mxu0 0
    %1307 = vmatpush2.bf16.msra.mxu0 0
    %1308 = vmatprep.subr.bf16.mxu0 0
    %1309 = vmatpush2.bf16.msra.mxu0 0
    %1310 = vmatprep.subr.bf16.mxu0 0
    %1311 = vmatpush2.bf16.msra.mxu0 0
    %1312 = vmatprep.subr.bf16.mxu0 0
    %1313 = vmatpush2.bf16.msra.mxu0 0
    %1314 = vmatprep.subr.bf16.mxu0 0
    %1315 = vmatpush2.bf16.msra.mxu0 0
    %1316 = vmatprep.subr.bf16.mxu0 0
    %1317 = vmatpush2.bf16.msra.mxu0 0
    %1318 = vmatprep.subr.bf16.mxu0 0
    %1319 = vmatpush2.bf16.msra.mxu0 0
    %1320 = vmatprep.subr.bf16.mxu0 0
    %1321 = vmatpush2.bf16.msra.mxu0 0
    %1322 = vmatprep.mubr.bf16.mxu0 0
    %1323 = vmatmul.mubr.bf16.gmra.mxu0 %v1285
    %v1324 = vpop.f32.mrf.mxu0
    %v1325 = vadd.f32 0.0, %v1324
    %v1326 = vpop.f32.mrf.mxu0
    %v1327 = vpop.f32.mrf.mxu0
    %v1328 = vadd.f32 0.0, %v1327
    %v1329 = vpop.f32.mrf.mxu0
    %1330 = vmatprep.mubr.bf16.mxu0 0
    %1331 = vmatmul.mubr.bf16.gmra.mxu0 %v1288
    %v1332 = vpop.f32.mrf.mxu0
    %v1333 = vadd.f32 0.0, %v1332
    %v1334 = vpop.f32.mrf.mxu0
    %v1335 = vpop.f32.mrf.mxu0
    %v1336 = vadd.f32 0.0, %v1335
    %v1337 = vpop.f32.mrf.mxu0
    %1338 = vdwg.mxu0
    %1339 = vrot.lane.b32.xlu0 %v641, 56
    %v1340 = vpop.permute.xlu0 %1339
    %1341 = vrot.lane.b32.xlu0 %v642, 56
    %v1342 = vpop.permute.xlu0 %1341
    %v1346 = vsel %vm76, %v1276, 0
    %v1349 = vsel %vm76, %v1277, 0
    %1351 = vmatprep.subr.bf16.mxu0 0
    %1352 = vmatpush1.bf16.msra.mxu0 0
    %1353 = vmatprep.subr.bf16.mxu0 0
    %1354 = vmatpush1.bf16.msra.mxu0 0
    %1355 = vmatprep.subr.bf16.mxu0 0
    %1356 = vmatpush1.bf16.msra.mxu0 0
    %1357 = vmatprep.subr.bf16.mxu0 0
    %1358 = vmatpush1.bf16.msra.mxu0 0
    %1359 = vmatprep.subr.bf16.mxu0 0
    %1360 = vmatpush1.bf16.msra.mxu0 0
    %1361 = vmatprep.subr.bf16.mxu0 0
    %1362 = vmatpush1.bf16.msra.mxu0 0
    %1363 = vmatprep.subr.bf16.mxu0 0
    %1364 = vmatpush1.bf16.msra.mxu0 %v1342
    %1365 = vmatprep.subr.bf16.mxu0 0
    %1366 = vmatpush1.bf16.msra.mxu0 %v1340
    %1367 = vmatprep.subr.bf16.mxu0 0
    %1368 = vmatpush2.bf16.msra.mxu0 0
    %1369 = vmatprep.subr.bf16.mxu0 0
    %1370 = vmatpush2.bf16.msra.mxu0 0
    %1371 = vmatprep.subr.bf16.mxu0 0
    %1372 = vmatpush2.bf16.msra.mxu0 0
    %1373 = vmatprep.subr.bf16.mxu0 0
    %1374 = vmatpush2.bf16.msra.mxu0 0
    %1375 = vmatprep.subr.bf16.mxu0 0
    %1376 = vmatpush2.bf16.msra.mxu0 0
    %1377 = vmatprep.subr.bf16.mxu0 0
    %1378 = vmatpush2.bf16.msra.mxu0 0
    %1379 = vmatprep.subr.bf16.mxu0 0
    %1380 = vmatpush2.bf16.msra.mxu0 0
    %1381 = vmatprep.subr.bf16.mxu0 0
    %1382 = vmatpush2.bf16.msra.mxu0 0
    %1383 = vmatprep.mubr.bf16.mxu0 0
    %1384 = vmatmul.mubr.bf16.gmra.mxu0 %v1346
    %v1385 = vpop.f32.mrf.mxu0
    %v1386 = vadd.f32 0.0, %v1385
    %v1387 = vpop.f32.mrf.mxu0
    %v1388 = vpop.f32.mrf.mxu0
    %v1389 = vadd.f32 0.0, %v1388
    %v1390 = vpop.f32.mrf.mxu0
    %1391 = vmatprep.mubr.bf16.mxu0 0
    %1392 = vmatmul.mubr.bf16.gmra.mxu0 %v1349
    %v1393 = vpop.f32.mrf.mxu0
    %v1394 = vadd.f32 0.0, %v1393
    %v1395 = vpop.f32.mrf.mxu0
    %v1396 = vpop.f32.mrf.mxu0
    %v1397 = vadd.f32 0.0, %v1396
    %v1398 = vpop.f32.mrf.mxu0
    %1399 = vdwg.mxu0
    %1400 = vrot.lane.b32.xlu0 %v154, 112
    %v1401 = vpop.permute.xlu0 %1400
    %1402 = vrot.lane.b32.xlu0 %v155, 112
    %v1403 = vpop.permute.xlu0 %1402
    %1404 = vrot.lane.b32.xlu0 %v156, 112
    %v1405 = vpop.permute.xlu0 %1404
    %1406 = vrot.lane.b32.xlu0 %v157, 112
    %v1407 = vpop.permute.xlu0 %1406
    %1408 = vrot.lane.b32.xlu0 %v158, 112
    %v1409 = vpop.permute.xlu0 %1408
    %1410 = vrot.lane.b32.xlu0 %v159, 112
    %v1411 = vpop.permute.xlu0 %1410
    %1412 = vrot.lane.b32.xlu0 %v160, 112
    %v1413 = vpop.permute.xlu0 %1412
    %1414 = vrot.lane.b32.xlu0 %v161, 112
    %v1415 = vpop.permute.xlu0 %1414
    %v1424 = vsel %vm162, %v1401, 0.0
    %1425 = vadd.xlane.f32.xlu0 %v1424
    %v1426 = vpop.xlane.xlu0 %1425
    %v1427 = vsel %vm162, %v1403, 0.0
    %1428 = vadd.xlane.f32.xlu0 %v1427
    %v1429 = vpop.xlane.xlu0 %1428
    %v1430 = vsel %vm162, %v1405, 0.0
    %1431 = vadd.xlane.f32.xlu0 %v1430
    %v1432 = vpop.xlane.xlu0 %1431
    %v1433 = vsel %vm162, %v1407, 0.0
    %1434 = vadd.xlane.f32.xlu0 %v1433
    %v1435 = vpop.xlane.xlu0 %1434
    %v1436 = vsel %vm162, %v1409, 0.0
    %1437 = vadd.xlane.f32.xlu0 %v1436
    %v1438 = vpop.xlane.xlu0 %1437
    %v1439 = vsel %vm162, %v1411, 0.0
    %1440 = vadd.xlane.f32.xlu0 %v1439
    %v1441 = vpop.xlane.xlu0 %1440
    %v1442 = vsel %vm162, %v1413, 0.0
    %1443 = vadd.xlane.f32.xlu0 %v1442
    %v1444 = vpop.xlane.xlu0 %1443
    %v1445 = vsel %vm162, %v1415, 0.0
    %1446 = vadd.xlane.f32.xlu0 %v1445
    %v1447 = vpop.xlane.xlu0 %1446
    %v1448 = vmax.f32 %v1426, 1e-24
    %v1449 = vmax.f32 %v1429, 1e-24
    %v1450 = vmax.f32 %v1432, 1e-24
    %v1451 = vmax.f32 %v1435, 1e-24
    %v1452 = vmax.f32 %v1438, 1e-24
    %v1453 = vmax.f32 %v1441, 1e-24
    %v1454 = vmax.f32 %v1444, 1e-24
    %v1455 = vmax.f32 %v1447, 1e-24
    %v1456 = vrsqrt.pop %v1448
    %v1457 = vrsqrt.pop %v1449
    %v1458 = vrsqrt.pop %v1450
    %v1459 = vrsqrt.pop %v1451
    %v1460 = vrsqrt.pop %v1452
    %v1461 = vrsqrt.pop %v1453
    %v1462 = vrsqrt.pop %v1454
    %v1463 = vrsqrt.pop %v1455
    %v1464 = vmul.f32 %v124, %v1456
    %v1465 = vmul.f32 %v127, %v1457
    %v1466 = vmul.f32 %v132, %v1458
    %v1467 = vmul.f32 %v135, %v1459
    %v1468 = vmul.f32 %v140, %v1460
    %v1469 = vmul.f32 %v143, %v1461
    %v1470 = vmul.f32 %v148, %v1462
    %v1471 = vmul.f32 %v151, %v1463
    %1472 = vrot.lane.b32.xlu0 %v154, 80
    %v1473 = vpop.permute.xlu0 %1472
    %1474 = vrot.lane.b32.xlu0 %v155, 80
    %v1475 = vpop.permute.xlu0 %1474
    %1476 = vrot.lane.b32.xlu0 %v156, 80
    %v1477 = vpop.permute.xlu0 %1476
    %1478 = vrot.lane.b32.xlu0 %v157, 80
    %v1479 = vpop.permute.xlu0 %1478
    %1480 = vrot.lane.b32.xlu0 %v158, 80
    %v1481 = vpop.permute.xlu0 %1480
    %1482 = vrot.lane.b32.xlu0 %v159, 80
    %v1483 = vpop.permute.xlu0 %1482
    %1484 = vrot.lane.b32.xlu0 %v160, 80
    %v1485 = vpop.permute.xlu0 %1484
    %1486 = vrot.lane.b32.xlu0 %v161, 80
    %v1487 = vpop.permute.xlu0 %1486
    %v1496 = vsel %vm162, %v1473, 0.0
    %1497 = vadd.xlane.f32.xlu0 %v1496
    %v1498 = vpop.xlane.xlu0 %1497
    %v1499 = vsel %vm162, %v1475, 0.0
    %1500 = vadd.xlane.f32.xlu0 %v1499
    %v1501 = vpop.xlane.xlu0 %1500
    %v1502 = vsel %vm162, %v1477, 0.0
    %1503 = vadd.xlane.f32.xlu0 %v1502
    %v1504 = vpop.xlane.xlu0 %1503
    %v1505 = vsel %vm162, %v1479, 0.0
    %1506 = vadd.xlane.f32.xlu0 %v1505
    %v1507 = vpop.xlane.xlu0 %1506
    %v1508 = vsel %vm162, %v1481, 0.0
    %1509 = vadd.xlane.f32.xlu0 %v1508
    %v1510 = vpop.xlane.xlu0 %1509
    %v1511 = vsel %vm162, %v1483, 0.0
    %1512 = vadd.xlane.f32.xlu0 %v1511
    %v1513 = vpop.xlane.xlu0 %1512
    %v1514 = vsel %vm162, %v1485, 0.0
    %1515 = vadd.xlane.f32.xlu0 %v1514
    %v1516 = vpop.xlane.xlu0 %1515
    %v1517 = vsel %vm162, %v1487, 0.0
    %1518 = vadd.xlane.f32.xlu0 %v1517
    %v1519 = vpop.xlane.xlu0 %1518
    %v1520 = vmax.f32 %v1498, 1e-24
    %v1521 = vmax.f32 %v1501, 1e-24
    %v1522 = vmax.f32 %v1504, 1e-24
    %v1523 = vmax.f32 %v1507, 1e-24
    %v1524 = vmax.f32 %v1510, 1e-24
    %v1525 = vmax.f32 %v1513, 1e-24
    %v1526 = vmax.f32 %v1516, 1e-24
    %v1527 = vmax.f32 %v1519, 1e-24
    %v1528 = vrsqrt.pop %v1520
    %v1529 = vrsqrt.pop %v1521
    %v1530 = vrsqrt.pop %v1522
    %v1531 = vrsqrt.pop %v1523
    %v1532 = vrsqrt.pop %v1524
    %v1533 = vrsqrt.pop %v1525
    %v1534 = vrsqrt.pop %v1526
    %v1535 = vrsqrt.pop %v1527
    %v1536 = vmul.f32 %v124, %v1528
    %v1537 = vmul.f32 %v127, %v1529
    %v1538 = vmul.f32 %v132, %v1530
    %v1539 = vmul.f32 %v135, %v1531
    %v1540 = vmul.f32 %v140, %v1532
    %v1541 = vmul.f32 %v143, %v1533
    %v1542 = vmul.f32 %v148, %v1534
    %v1543 = vmul.f32 %v151, %v1535
    %1548 = vrot.lane.b32.xlu0 %v1464, 112
    %v1549 = vpop.permute.xlu0 %1548
    %1550 = vrot.lane.b32.xlu0 %v1465, 112
    %v1551 = vpop.permute.xlu0 %1550
    %1552 = vrot.lane.b32.xlu0 %v1466, 112
    %v1553 = vpop.permute.xlu0 %1552
    %1554 = vrot.lane.b32.xlu0 %v1467, 112
    %v1555 = vpop.permute.xlu0 %1554
    %1560 = vrot.lane.b32.xlu0 %v1536, 80
    %v1561 = vpop.permute.xlu0 %1560
    %1562 = vrot.lane.b32.xlu0 %v1537, 80
    %v1563 = vpop.permute.xlu0 %1562
    %1564 = vrot.lane.b32.xlu0 %v1538, 80
    %v1565 = vpop.permute.xlu0 %1564
    %1566 = vrot.lane.b32.xlu0 %v1539, 80
    %v1567 = vpop.permute.xlu0 %1566
    %v1568 = vsel %vm162, %v1549, 0
    %v1570 = vsel %vm162, %v1551, 0
    %v1572 = vsel %vm162, %v1553, 0
    %v1574 = vsel %vm162, %v1555, 0
    %v1576 = vsel %vm162, %v1561, 0
    %v1578 = vsel %vm162, %v1563, 0
    %v1580 = vsel %vm162, %v1565, 0
    %v1582 = vsel %vm162, %v1567, 0
    %1584 = vmatprep.subr.mxu0 0.0
    %1585 = vmatpush1.xpose.msra.mxu0 0.0
    %1586 = vmatprep.subr.mxu0 0.0
    %1587 = vmatpush1.xpose.msra.mxu0 0.0
    %1588 = vmatprep.subr.mxu0 0.0
    %1589 = vmatpush1.xpose.msra.mxu0 0.0
    %1590 = vmatprep.subr.mxu0 0.0
    %1591 = vmatpush1.xpose.msra.mxu0 0.0
    %1592 = vmatprep.subr.mxu0 0.0
    %1593 = vmatpush1.xpose.msra.mxu0 0.0
    %1594 = vmatprep.subr.mxu0 0.0
    %1595 = vmatpush1.xpose.msra.mxu0 0.0
    %1596 = vmatprep.subr.mxu0 0.0
    %1597 = vmatpush1.xpose.msra.mxu0 0.0
    %1598 = vmatprep.subr.mxu0 0.0
    %1599 = vmatpush1.xpose.msra.mxu0 0.0
    %1600 = vmatprep.subr.mxu0 0.0
    %1601 = vmatpush1.xpose.msra.mxu0 0.0
    %1602 = vmatprep.subr.mxu0 0.0
    %1603 = vmatpush1.xpose.msra.mxu0 0.0
    %1604 = vmatprep.subr.mxu0 0.0
    %1605 = vmatpush1.xpose.msra.mxu0 0.0
    %1606 = vmatprep.subr.mxu0 0.0
    %1607 = vmatpush1.xpose.msra.mxu0 0.0
    %1608 = vmatprep.subr.mxu0 0.0
    %1609 = vmatpush1.xpose.msra.mxu0 %v1582
    %1610 = vmatprep.subr.mxu0 0.0
    %1611 = vmatpush1.xpose.msra.mxu0 %v1580
    %1612 = vmatprep.subr.mxu0 0.0
    %1613 = vmatpush1.xpose.msra.mxu0 %v1578
    %1614 = vmatprep.subr.mxu0 0.0
    %1615 = vmatpush1.xpose.msra.mxu0 %v1576
    %1616 = vmatprep.subr.mxu0 0.0
    %1617 = vmatpush2.xpose.msra.mxu0 0.0
    %1618 = vmatprep.subr.mxu0 0.0
    %1619 = vmatpush2.xpose.msra.mxu0 0.0
    %1620 = vmatprep.subr.mxu0 0.0
    %1621 = vmatpush2.xpose.msra.mxu0 0.0
    %1622 = vmatprep.subr.mxu0 0.0
    %1623 = vmatpush2.xpose.msra.mxu0 0.0
    %1624 = vmatprep.subr.mxu0 0.0
    %1625 = vmatpush2.xpose.msra.mxu0 0.0
    %1626 = vmatprep.subr.mxu0 0.0
    %1627 = vmatpush2.xpose.msra.mxu0 0.0
    %1628 = vmatprep.subr.mxu0 0.0
    %1629 = vmatpush2.xpose.msra.mxu0 0.0
    %1630 = vmatprep.subr.mxu0 0.0
    %1631 = vmatpush2.xpose.msra.mxu0 0.0
    %1632 = vmatprep.subr.mxu0 0.0
    %1633 = vmatpush2.xpose.msra.mxu0 0.0
    %1634 = vmatprep.subr.mxu0 0.0
    %1635 = vmatpush2.xpose.msra.mxu0 0.0
    %1636 = vmatprep.subr.mxu0 0.0
    %1637 = vmatpush2.xpose.msra.mxu0 0.0
    %1638 = vmatprep.subr.mxu0 0.0
    %1639 = vmatpush2.xpose.msra.mxu0 0.0
    %1640 = vmatprep.subr.mxu0 0.0
    %1641 = vmatpush2.xpose.msra.mxu0 0.0
    %1642 = vmatprep.subr.mxu0 0.0
    %1643 = vmatpush2.xpose.msra.mxu0 0.0
    %1644 = vmatprep.subr.mxu0 0.0
    %1645 = vmatpush2.xpose.msra.mxu0 0.0
    %1646 = vmatprep.subr.mxu0 0.0
    %1647 = vmatpush2.xpose.msra.mxu0 0.0
    %1648 = vmatprep.mubr.f32.mxu0 0.0
    %1649 = vmatmul.mubr.f32.gmra.mxu0 %v1568
    %v1650 = vpop.f32.mrf.mxu0
    %v1651 = vadd.f32 0.0, %v1650
    %v1652 = vpop.f32.mrf.mxu0
    %1653 = vmatprep.mubr.f32.mxu0 0.0
    %1654 = vmatmul.mubr.f32.gmra.mxu0 %v1570
    %v1655 = vpop.f32.mrf.mxu0
    %v1656 = vadd.f32 0.0, %v1655
    %v1657 = vpop.f32.mrf.mxu0
    %1658 = vmatprep.mubr.f32.mxu0 0.0
    %1659 = vmatmul.mubr.f32.gmra.mxu0 %v1572
    %v1660 = vpop.f32.mrf.mxu0
    %v1661 = vadd.f32 0.0, %v1660
    %v1662 = vpop.f32.mrf.mxu0
    %1663 = vmatprep.mubr.f32.mxu0 0.0
    %1664 = vmatmul.mubr.f32.gmra.mxu0 %v1574
    %v1665 = vpop.f32.mrf.mxu0
    %v1666 = vadd.f32 0.0, %v1665
    %v1667 = vpop.f32.mrf.mxu0
    %1668 = vdwg.mxu0
    %1673 = vrot.lane.b32.xlu0 %v1468, 112
    %v1674 = vpop.permute.xlu0 %1673
    %1675 = vrot.lane.b32.xlu0 %v1469, 112
    %v1676 = vpop.permute.xlu0 %1675
    %1677 = vrot.lane.b32.xlu0 %v1470, 112
    %v1678 = vpop.permute.xlu0 %1677
    %1679 = vrot.lane.b32.xlu0 %v1471, 112
    %v1680 = vpop.permute.xlu0 %1679
    %1685 = vrot.lane.b32.xlu0 %v1540, 80
    %v1686 = vpop.permute.xlu0 %1685
    %1687 = vrot.lane.b32.xlu0 %v1541, 80
    %v1688 = vpop.permute.xlu0 %1687
    %1689 = vrot.lane.b32.xlu0 %v1542, 80
    %v1690 = vpop.permute.xlu0 %1689
    %1691 = vrot.lane.b32.xlu0 %v1543, 80
    %v1692 = vpop.permute.xlu0 %1691
    %v1693 = vsel %vm162, %v1674, 0
    %v1695 = vsel %vm162, %v1676, 0
    %v1697 = vsel %vm162, %v1678, 0
    %v1699 = vsel %vm162, %v1680, 0
    %v1701 = vsel %vm162, %v1686, 0
    %v1703 = vsel %vm162, %v1688, 0
    %v1705 = vsel %vm162, %v1690, 0
    %v1707 = vsel %vm162, %v1692, 0
    %1709 = vmatprep.subr.mxu0 0.0
    %1710 = vmatpush1.xpose.msra.mxu0 0.0
    %1711 = vmatprep.subr.mxu0 0.0
    %1712 = vmatpush1.xpose.msra.mxu0 0.0
    %1713 = vmatprep.subr.mxu0 0.0
    %1714 = vmatpush1.xpose.msra.mxu0 0.0
    %1715 = vmatprep.subr.mxu0 0.0
    %1716 = vmatpush1.xpose.msra.mxu0 0.0
    %1717 = vmatprep.subr.mxu0 0.0
    %1718 = vmatpush1.xpose.msra.mxu0 0.0
    %1719 = vmatprep.subr.mxu0 0.0
    %1720 = vmatpush1.xpose.msra.mxu0 0.0
    %1721 = vmatprep.subr.mxu0 0.0
    %1722 = vmatpush1.xpose.msra.mxu0 0.0
    %1723 = vmatprep.subr.mxu0 0.0
    %1724 = vmatpush1.xpose.msra.mxu0 0.0
    %1725 = vmatprep.subr.mxu0 0.0
    %1726 = vmatpush1.xpose.msra.mxu0 0.0
    %1727 = vmatprep.subr.mxu0 0.0
    %1728 = vmatpush1.xpose.msra.mxu0 0.0
    %1729 = vmatprep.subr.mxu0 0.0
    %1730 = vmatpush1.xpose.msra.mxu0 0.0
    %1731 = vmatprep.subr.mxu0 0.0
    %1732 = vmatpush1.xpose.msra.mxu0 0.0
    %1733 = vmatprep.subr.mxu0 0.0
    %1734 = vmatpush1.xpose.msra.mxu0 %v1707
    %1735 = vmatprep.subr.mxu0 0.0
    %1736 = vmatpush1.xpose.msra.mxu0 %v1705
    %1737 = vmatprep.subr.mxu0 0.0
    %1738 = vmatpush1.xpose.msra.mxu0 %v1703
    %1739 = vmatprep.subr.mxu0 0.0
    %1740 = vmatpush1.xpose.msra.mxu0 %v1701
    %1741 = vmatprep.subr.mxu0 0.0
    %1742 = vmatpush2.xpose.msra.mxu0 0.0
    %1743 = vmatprep.subr.mxu0 0.0
    %1744 = vmatpush2.xpose.msra.mxu0 0.0
    %1745 = vmatprep.subr.mxu0 0.0
    %1746 = vmatpush2.xpose.msra.mxu0 0.0
    %1747 = vmatprep.subr.mxu0 0.0
    %1748 = vmatpush2.xpose.msra.mxu0 0.0
    %1749 = vmatprep.subr.mxu0 0.0
    %1750 = vmatpush2.xpose.msra.mxu0 0.0
    %1751 = vmatprep.subr.mxu0 0.0
    %1752 = vmatpush2.xpose.msra.mxu0 0.0
    %1753 = vmatprep.subr.mxu0 0.0
    %1754 = vmatpush2.xpose.msra.mxu0 0.0
    %1755 = vmatprep.subr.mxu0 0.0
    %1756 = vmatpush2.xpose.msra.mxu0 0.0
    %1757 = vmatprep.subr.mxu0 0.0
    %1758 = vmatpush2.xpose.msra.mxu0 0.0
    %1759 = vmatprep.subr.mxu0 0.0
    %1760 = vmatpush2.xpose.msra.mxu0 0.0
    %1761 = vmatprep.subr.mxu0 0.0
    %1762 = vmatpush2.xpose.msra.mxu0 0.0
    %1763 = vmatprep.subr.mxu0 0.0
    %1764 = vmatpush2.xpose.msra.mxu0 0.0
    %1765 = vmatprep.subr.mxu0 0.0
    %1766 = vmatpush2.xpose.msra.mxu0 0.0
    %1767 = vmatprep.subr.mxu0 0.0
    %1768 = vmatpush2.xpose.msra.mxu0 0.0
    %1769 = vmatprep.subr.mxu0 0.0
    %1770 = vmatpush2.xpose.msra.mxu0 0.0
    %1771 = vmatprep.subr.mxu0 0.0
    %1772 = vmatpush2.xpose.msra.mxu0 0.0
    %1773 = vmatprep.mubr.f32.mxu0 0.0
    %1774 = vmatmul.mubr.f32.gmra.mxu0 %v1693
    %v1775 = vpop.f32.mrf.mxu0
    %v1776 = vadd.f32 0.0, %v1775
    %v1777 = vpop.f32.mrf.mxu0
    %1778 = vmatprep.mubr.f32.mxu0 0.0
    %1779 = vmatmul.mubr.f32.gmra.mxu0 %v1695
    %v1780 = vpop.f32.mrf.mxu0
    %v1781 = vadd.f32 0.0, %v1780
    %v1782 = vpop.f32.mrf.mxu0
    %1783 = vmatprep.mubr.f32.mxu0 0.0
    %1784 = vmatmul.mubr.f32.gmra.mxu0 %v1697
    %v1785 = vpop.f32.mrf.mxu0
    %v1786 = vadd.f32 0.0, %v1785
    %v1787 = vpop.f32.mrf.mxu0
    %1788 = vmatprep.mubr.f32.mxu0 0.0
    %1789 = vmatmul.mubr.f32.gmra.mxu0 %v1699
    %v1790 = vpop.f32.mrf.mxu0
    %v1791 = vadd.f32 0.0, %v1790
    %v1792 = vpop.f32.mrf.mxu0
    %1793 = vdwg.mxu0
    %s1794 = sld [smem:[#allocation2 + $0x2]]
    %v1795 = vstv %s1794
    %v1796 = vmul.f32 %v1651, %v1795
    %v1797 = vmul.f32 %v1656, %v1795
    %v1798 = vmul.f32 %v1661, %v1795
    %v1799 = vmul.f32 %v1666, %v1795
    %v1800 = vmul.f32 %v1776, %v1795
    %v1801 = vmul.f32 %v1781, %v1795
    %v1802 = vmul.f32 %v1786, %v1795
    %v1803 = vmul.f32 %v1791, %v1795
    %s1804 = scalar_lea.vmem %s5, 64
    %v1805 = vld [vmem:[%s1804] sm:$0xff]
    %v1806 = vld [vmem:[%s1804 + $0x8] sm:$0xff]
    %v1807 = vld [vmem:[%s1804 + $0x10] sm:$0xff]
    %v1808 = vld [vmem:[%s1804 + $0x18] sm:$0xff]
    %v1809 = vadd.f32 %v1796, %v1805
    %v1810 = vadd.f32 %v1797, %v1806
    %v1811 = vadd.f32 %v1798, %v1807
    %v1812 = vadd.f32 %v1799, %v1808
    %v1813 = vadd.f32 %v1800, %v1805
    %v1814 = vadd.f32 %v1801, %v1806
    %v1815 = vadd.f32 %v1802, %v1807
    %v1816 = vadd.f32 %v1803, %v1808
    %v1817 = vsel %vm76, %v1809, -inf
    %1818 = vmax.xlane.f32.xlu0 %v1817
    %v1819 = vpop.xlane.xlu0 %1818
    %v1820 = vsel %vm76, %v1810, -inf
    %1821 = vmax.xlane.f32.xlu0 %v1820
    %v1822 = vpop.xlane.xlu0 %1821
    %v1823 = vsel %vm76, %v1811, -inf
    %1824 = vmax.xlane.f32.xlu0 %v1823
    %v1825 = vpop.xlane.xlu0 %1824
    %v1826 = vsel %vm76, %v1812, -inf
    %1827 = vmax.xlane.f32.xlu0 %v1826
    %v1828 = vpop.xlane.xlu0 %1827
    %v1829 = vsel %vm76, %v1813, -inf
    %1830 = vmax.xlane.f32.xlu0 %v1829
    %v1831 = vpop.xlane.xlu0 %1830
    %v1832 = vsel %vm76, %v1814, -inf
    %1833 = vmax.xlane.f32.xlu0 %v1832
    %v1834 = vpop.xlane.xlu0 %1833
    %v1835 = vsel %vm76, %v1815, -inf
    %1836 = vmax.xlane.f32.xlu0 %v1835
    %v1837 = vpop.xlane.xlu0 %1836
    %v1838 = vsel %vm76, %v1816, -inf
    %1839 = vmax.xlane.f32.xlu0 %v1838
    %v1840 = vpop.xlane.xlu0 %1839
    %v1841 = vsub.f32 %v1809, %v1819
    %v1842 = vsub.f32 %v1810, %v1822
    %v1843 = vsub.f32 %v1811, %v1825
    %v1844 = vsub.f32 %v1812, %v1828
    %v1845 = vsub.f32 %v1813, %v1831
    %v1846 = vsub.f32 %v1814, %v1834
    %v1847 = vsub.f32 %v1815, %v1837
    %v1848 = vsub.f32 %v1816, %v1840
    %v1849 = vmul.f32 %v1841, 1.442695
    %v1850 = vpow.pop %v1849
    %v1851 = vmul.f32 %v1842, 1.442695
    %v1852 = vpow.pop %v1851
    %v1853 = vmul.f32 %v1843, 1.442695
    %v1854 = vpow.pop %v1853
    %v1855 = vmul.f32 %v1844, 1.442695
    %v1856 = vpow.pop %v1855
    %v1857 = vmul.f32 %v1845, 1.442695
    %v1858 = vpow.pop %v1857
    %v1859 = vmul.f32 %v1846, 1.442695
    %v1860 = vpow.pop %v1859
    %v1861 = vmul.f32 %v1847, 1.442695
    %v1862 = vpow.pop %v1861
    %v1863 = vmul.f32 %v1848, 1.442695
    %v1864 = vpow.pop %v1863
    %v1865 = vsel %vm76, %v1850, 0.0
    %1866 = vadd.xlane.f32.xlu0 %v1865
    %v1867 = vpop.xlane.xlu0 %1866
    %v1868 = vsel %vm76, %v1852, 0.0
    %1869 = vadd.xlane.f32.xlu0 %v1868
    %v1870 = vpop.xlane.xlu0 %1869
    %v1871 = vsel %vm76, %v1854, 0.0
    %1872 = vadd.xlane.f32.xlu0 %v1871
    %v1873 = vpop.xlane.xlu0 %1872
    %v1874 = vsel %vm76, %v1856, 0.0
    %1875 = vadd.xlane.f32.xlu0 %v1874
    %v1876 = vpop.xlane.xlu0 %1875
    %v1877 = vsel %vm76, %v1858, 0.0
    %1878 = vadd.xlane.f32.xlu0 %v1877
    %v1879 = vpop.xlane.xlu0 %1878
    %v1880 = vsel %vm76, %v1860, 0.0
    %1881 = vadd.xlane.f32.xlu0 %v1880
    %v1882 = vpop.xlane.xlu0 %1881
    %v1883 = vsel %vm76, %v1862, 0.0
    %1884 = vadd.xlane.f32.xlu0 %v1883
    %v1885 = vpop.xlane.xlu0 %1884
    %v1886 = vsel %vm76, %v1864, 0.0
    %1887 = vadd.xlane.f32.xlu0 %v1886
    %v1888 = vpop.xlane.xlu0 %1887
    %v1889 = vrcp.pop %v1867
    %v1890 = vrcp.pop %v1870
    %v1891 = vrcp.pop %v1873
    %v1892 = vrcp.pop %v1876
    %v1893 = vrcp.pop %v1879
    %v1894 = vrcp.pop %v1882
    %v1895 = vrcp.pop %v1885
    %v1896 = vrcp.pop %v1888
    %v1897 = vmul.f32 %v1850, %v1889
    %v1898 = vmul.f32 %v1852, %v1890
    %v1899 = vmul.f32 %v1854, %v1891
    %v1900 = vmul.f32 %v1856, %v1892
    %v1901 = vmul.f32 %v1858, %v1893
    %v1902 = vmul.f32 %v1860, %v1894
    %v1903 = vmul.f32 %v1862, %v1895
    %v1904 = vmul.f32 %v1864, %v1896
    %v1905 = vpack.c.bf16 %v1898, %v1897
    %v1906 = vpack.c.bf16 %v1900, %v1899
    %v1907 = vpack.c.bf16 %v1902, %v1901
    %v1908 = vpack.c.bf16 %v1904, %v1903
    %1909 = vrot.lane.b32.xlu0 %v639, 48
    %v1910 = vpop.permute.xlu0 %1909
    %1911 = vrot.lane.b32.xlu0 %v640, 48
    %v1912 = vpop.permute.xlu0 %1911
    %v1916 = vsel %vm76, %v1905, 0
    %v1919 = vsel %vm76, %v1906, 0
    %1921 = vmatprep.subr.bf16.mxu0 0
    %1922 = vmatpush1.bf16.msra.mxu0 0
    %1923 = vmatprep.subr.bf16.mxu0 0
    %1924 = vmatpush1.bf16.msra.mxu0 0
    %1925 = vmatprep.subr.bf16.mxu0 0
    %1926 = vmatpush1.bf16.msra.mxu0 0
    %1927 = vmatprep.subr.bf16.mxu0 0
    %1928 = vmatpush1.bf16.msra.mxu0 0
    %1929 = vmatprep.subr.bf16.mxu0 0
    %1930 = vmatpush1.bf16.msra.mxu0 0
    %1931 = vmatprep.subr.bf16.mxu0 0
    %1932 = vmatpush1.bf16.msra.mxu0 0
    %1933 = vmatprep.subr.bf16.mxu0 0
    %1934 = vmatpush1.bf16.msra.mxu0 %v1912
    %1935 = vmatprep.subr.bf16.mxu0 0
    %1936 = vmatpush1.bf16.msra.mxu0 %v1910
    %1937 = vmatprep.subr.bf16.mxu0 0
    %1938 = vmatpush2.bf16.msra.mxu0 0
    %1939 = vmatprep.subr.bf16.mxu0 0
    %1940 = vmatpush2.bf16.msra.mxu0 0
    %1941 = vmatprep.subr.bf16.mxu0 0
    %1942 = vmatpush2.bf16.msra.mxu0 0
    %1943 = vmatprep.subr.bf16.mxu0 0
    %1944 = vmatpush2.bf16.msra.mxu0 0
    %1945 = vmatprep.subr.bf16.mxu0 0
    %1946 = vmatpush2.bf16.msra.mxu0 0
    %1947 = vmatprep.subr.bf16.mxu0 0
    %1948 = vmatpush2.bf16.msra.mxu0 0
    %1949 = vmatprep.subr.bf16.mxu0 0
    %1950 = vmatpush2.bf16.msra.mxu0 0
    %1951 = vmatprep.subr.bf16.mxu0 0
    %1952 = vmatpush2.bf16.msra.mxu0 0
    %1953 = vmatprep.mubr.bf16.mxu0 0
    %1954 = vmatmul.mubr.bf16.gmra.mxu0 %v1916
    %v1955 = vpop.f32.mrf.mxu0
    %v1956 = vadd.f32 0.0, %v1955
    %v1957 = vpop.f32.mrf.mxu0
    %v1958 = vpop.f32.mrf.mxu0
    %v1959 = vadd.f32 0.0, %v1958
    %v1960 = vpop.f32.mrf.mxu0
    %1961 = vmatprep.mubr.bf16.mxu0 0
    %1962 = vmatmul.mubr.bf16.gmra.mxu0 %v1919
    %v1963 = vpop.f32.mrf.mxu0
    %v1964 = vadd.f32 0.0, %v1963
    %v1965 = vpop.f32.mrf.mxu0
    %v1966 = vpop.f32.mrf.mxu0
    %v1967 = vadd.f32 0.0, %v1966
    %v1968 = vpop.f32.mrf.mxu0
    %1969 = vdwg.mxu0
    %1970 = vrot.lane.b32.xlu0 %v641, 48
    %v1971 = vpop.permute.xlu0 %1970
    %1972 = vrot.lane.b32.xlu0 %v642, 48
    %v1973 = vpop.permute.xlu0 %1972
    %v1977 = vsel %vm76, %v1907, 0
    %v1980 = vsel %vm76, %v1908, 0
    %1982 = vmatprep.subr.bf16.mxu0 0
    %1983 = vmatpush1.bf16.msra.mxu0 0
    %1984 = vmatprep.subr.bf16.mxu0 0
    %1985 = vmatpush1.bf16.msra.mxu0 0
    %1986 = vmatprep.subr.bf16.mxu0 0
    %1987 = vmatpush1.bf16.msra.mxu0 0
    %1988 = vmatprep.subr.bf16.mxu0 0
    %1989 = vmatpush1.bf16.msra.mxu0 0
    %1990 = vmatprep.subr.bf16.mxu0 0
    %1991 = vmatpush1.bf16.msra.mxu0 0
    %1992 = vmatprep.subr.bf16.mxu0 0
    %1993 = vmatpush1.bf16.msra.mxu0 0
    %1994 = vmatprep.subr.bf16.mxu0 0
    %1995 = vmatpush1.bf16.msra.mxu0 %v1973
    %1996 = vmatprep.subr.bf16.mxu0 0
    %1997 = vmatpush1.bf16.msra.mxu0 %v1971
    %1998 = vmatprep.subr.bf16.mxu0 0
    %1999 = vmatpush2.bf16.msra.mxu0 0
    %2000 = vmatprep.subr.bf16.mxu0 0
    %2001 = vmatpush2.bf16.msra.mxu0 0
    %2002 = vmatprep.subr.bf16.mxu0 0
    %2003 = vmatpush2.bf16.msra.mxu0 0
    %2004 = vmatprep.subr.bf16.mxu0 0
    %2005 = vmatpush2.bf16.msra.mxu0 0
    %2006 = vmatprep.subr.bf16.mxu0 0
    %2007 = vmatpush2.bf16.msra.mxu0 0
    %2008 = vmatprep.subr.bf16.mxu0 0
    %2009 = vmatpush2.bf16.msra.mxu0 0
    %2010 = vmatprep.subr.bf16.mxu0 0
    %2011 = vmatpush2.bf16.msra.mxu0 0
    %2012 = vmatprep.subr.bf16.mxu0 0
    %2013 = vmatpush2.bf16.msra.mxu0 0
    %2014 = vmatprep.mubr.bf16.mxu0 0
    %2015 = vmatmul.mubr.bf16.gmra.mxu0 %v1977
    %v2016 = vpop.f32.mrf.mxu0
    %v2017 = vadd.f32 0.0, %v2016
    %v2018 = vpop.f32.mrf.mxu0
    %v2019 = vpop.f32.mrf.mxu0
    %v2020 = vadd.f32 0.0, %v2019
    %v2021 = vpop.f32.mrf.mxu0
    %2022 = vmatprep.mubr.bf16.mxu0 0
    %2023 = vmatmul.mubr.bf16.gmra.mxu0 %v1980
    %v2024 = vpop.f32.mrf.mxu0
    %v2025 = vadd.f32 0.0, %v2024
    %v2026 = vpop.f32.mrf.mxu0
    %v2027 = vpop.f32.mrf.mxu0
    %v2028 = vadd.f32 0.0, %v2027
    %v2029 = vpop.f32.mrf.mxu0
    %2030 = vdwg.mxu0
    %2031 = vrot.lane.b32.xlu0 %v154, 104
    %v2032 = vpop.permute.xlu0 %2031
    %2033 = vrot.lane.b32.xlu0 %v155, 104
    %v2034 = vpop.permute.xlu0 %2033
    %2035 = vrot.lane.b32.xlu0 %v156, 104
    %v2036 = vpop.permute.xlu0 %2035
    %2037 = vrot.lane.b32.xlu0 %v157, 104
    %v2038 = vpop.permute.xlu0 %2037
    %2039 = vrot.lane.b32.xlu0 %v158, 104
    %v2040 = vpop.permute.xlu0 %2039
    %2041 = vrot.lane.b32.xlu0 %v159, 104
    %v2042 = vpop.permute.xlu0 %2041
    %2043 = vrot.lane.b32.xlu0 %v160, 104
    %v2044 = vpop.permute.xlu0 %2043
    %2045 = vrot.lane.b32.xlu0 %v161, 104
    %v2046 = vpop.permute.xlu0 %2045
    %v2055 = vsel %vm162, %v2032, 0.0
    %2056 = vadd.xlane.f32.xlu0 %v2055
    %v2057 = vpop.xlane.xlu0 %2056
    %v2058 = vsel %vm162, %v2034, 0.0
    %2059 = vadd.xlane.f32.xlu0 %v2058
    %v2060 = vpop.xlane.xlu0 %2059
    %v2061 = vsel %vm162, %v2036, 0.0
    %2062 = vadd.xlane.f32.xlu0 %v2061
    %v2063 = vpop.xlane.xlu0 %2062
    %v2064 = vsel %vm162, %v2038, 0.0
    %2065 = vadd.xlane.f32.xlu0 %v2064
    %v2066 = vpop.xlane.xlu0 %2065
    %v2067 = vsel %vm162, %v2040, 0.0
    %2068 = vadd.xlane.f32.xlu0 %v2067
    %v2069 = vpop.xlane.xlu0 %2068
    %v2070 = vsel %vm162, %v2042, 0.0
    %2071 = vadd.xlane.f32.xlu0 %v2070
    %v2072 = vpop.xlane.xlu0 %2071
    %v2073 = vsel %vm162, %v2044, 0.0
    %2074 = vadd.xlane.f32.xlu0 %v2073
    %v2075 = vpop.xlane.xlu0 %2074
    %v2076 = vsel %vm162, %v2046, 0.0
    %2077 = vadd.xlane.f32.xlu0 %v2076
    %v2078 = vpop.xlane.xlu0 %2077
    %v2079 = vmax.f32 %v2057, 1e-24
    %v2080 = vmax.f32 %v2060, 1e-24
    %v2081 = vmax.f32 %v2063, 1e-24
    %v2082 = vmax.f32 %v2066, 1e-24
    %v2083 = vmax.f32 %v2069, 1e-24
    %v2084 = vmax.f32 %v2072, 1e-24
    %v2085 = vmax.f32 %v2075, 1e-24
    %v2086 = vmax.f32 %v2078, 1e-24
    %v2087 = vrsqrt.pop %v2079
    %v2088 = vrsqrt.pop %v2080
    %v2089 = vrsqrt.pop %v2081
    %v2090 = vrsqrt.pop %v2082
    %v2091 = vrsqrt.pop %v2083
    %v2092 = vrsqrt.pop %v2084
    %v2093 = vrsqrt.pop %v2085
    %v2094 = vrsqrt.pop %v2086
    %v2095 = vmul.f32 %v124, %v2087
    %v2096 = vmul.f32 %v127, %v2088
    %v2097 = vmul.f32 %v132, %v2089
    %v2098 = vmul.f32 %v135, %v2090
    %v2099 = vmul.f32 %v140, %v2091
    %v2100 = vmul.f32 %v143, %v2092
    %v2101 = vmul.f32 %v148, %v2093
    %v2102 = vmul.f32 %v151, %v2094
    %2103 = vrot.lane.b32.xlu0 %v154, 72
    %v2104 = vpop.permute.xlu0 %2103
    %2105 = vrot.lane.b32.xlu0 %v155, 72
    %v2106 = vpop.permute.xlu0 %2105
    %2107 = vrot.lane.b32.xlu0 %v156, 72
    %v2108 = vpop.permute.xlu0 %2107
    %2109 = vrot.lane.b32.xlu0 %v157, 72
    %v2110 = vpop.permute.xlu0 %2109
    %2111 = vrot.lane.b32.xlu0 %v158, 72
    %v2112 = vpop.permute.xlu0 %2111
    %2113 = vrot.lane.b32.xlu0 %v159, 72
    %v2114 = vpop.permute.xlu0 %2113
    %2115 = vrot.lane.b32.xlu0 %v160, 72
    %v2116 = vpop.permute.xlu0 %2115
    %2117 = vrot.lane.b32.xlu0 %v161, 72
    %v2118 = vpop.permute.xlu0 %2117
    %v2127 = vsel %vm162, %v2104, 0.0
    %2128 = vadd.xlane.f32.xlu0 %v2127
    %v2129 = vpop.xlane.xlu0 %2128
    %v2130 = vsel %vm162, %v2106, 0.0
    %2131 = vadd.xlane.f32.xlu0 %v2130
    %v2132 = vpop.xlane.xlu0 %2131
    %v2133 = vsel %vm162, %v2108, 0.0
    %2134 = vadd.xlane.f32.xlu0 %v2133
    %v2135 = vpop.xlane.xlu0 %2134
    %v2136 = vsel %vm162, %v2110, 0.0
    %2137 = vadd.xlane.f32.xlu0 %v2136
    %v2138 = vpop.xlane.xlu0 %2137
    %v2139 = vsel %vm162, %v2112, 0.0
    %2140 = vadd.xlane.f32.xlu0 %v2139
    %v2141 = vpop.xlane.xlu0 %2140
    %v2142 = vsel %vm162, %v2114, 0.0
    %2143 = vadd.xlane.f32.xlu0 %v2142
    %v2144 = vpop.xlane.xlu0 %2143
    %v2145 = vsel %vm162, %v2116, 0.0
    %2146 = vadd.xlane.f32.xlu0 %v2145
    %v2147 = vpop.xlane.xlu0 %2146
    %v2148 = vsel %vm162, %v2118, 0.0
    %2149 = vadd.xlane.f32.xlu0 %v2148
    %v2150 = vpop.xlane.xlu0 %2149
    %v2151 = vmax.f32 %v2129, 1e-24
    %v2152 = vmax.f32 %v2132, 1e-24
    %v2153 = vmax.f32 %v2135, 1e-24
    %v2154 = vmax.f32 %v2138, 1e-24
    %v2155 = vmax.f32 %v2141, 1e-24
    %v2156 = vmax.f32 %v2144, 1e-24
    %v2157 = vmax.f32 %v2147, 1e-24
    %v2158 = vmax.f32 %v2150, 1e-24
    %v2159 = vrsqrt.pop %v2151
    %v2160 = vrsqrt.pop %v2152
    %v2161 = vrsqrt.pop %v2153
    %v2162 = vrsqrt.pop %v2154
    %v2163 = vrsqrt.pop %v2155
    %v2164 = vrsqrt.pop %v2156
    %v2165 = vrsqrt.pop %v2157
    %v2166 = vrsqrt.pop %v2158
    %v2167 = vmul.f32 %v124, %v2159
    %v2168 = vmul.f32 %v127, %v2160
    %v2169 = vmul.f32 %v132, %v2161
    %v2170 = vmul.f32 %v135, %v2162
    %v2171 = vmul.f32 %v140, %v2163
    %v2172 = vmul.f32 %v143, %v2164
    %v2173 = vmul.f32 %v148, %v2165
    %v2174 = vmul.f32 %v151, %v2166
    %2179 = vrot.lane.b32.xlu0 %v2095, 104
    %v2180 = vpop.permute.xlu0 %2179
    %2181 = vrot.lane.b32.xlu0 %v2096, 104
    %v2182 = vpop.permute.xlu0 %2181
    %2183 = vrot.lane.b32.xlu0 %v2097, 104
    %v2184 = vpop.permute.xlu0 %2183
    %2185 = vrot.lane.b32.xlu0 %v2098, 104
    %v2186 = vpop.permute.xlu0 %2185
    %2191 = vrot.lane.b32.xlu0 %v2167, 72
    %v2192 = vpop.permute.xlu0 %2191
    %2193 = vrot.lane.b32.xlu0 %v2168, 72
    %v2194 = vpop.permute.xlu0 %2193
    %2195 = vrot.lane.b32.xlu0 %v2169, 72
    %v2196 = vpop.permute.xlu0 %2195
    %2197 = vrot.lane.b32.xlu0 %v2170, 72
    %v2198 = vpop.permute.xlu0 %2197
    %v2199 = vsel %vm162, %v2180, 0
    %v2201 = vsel %vm162, %v2182, 0
    %v2203 = vsel %vm162, %v2184, 0
    %v2205 = vsel %vm162, %v2186, 0
    %v2207 = vsel %vm162, %v2192, 0
    %v2209 = vsel %vm162, %v2194, 0
    %v2211 = vsel %vm162, %v2196, 0
    %v2213 = vsel %vm162, %v2198, 0
    %2215 = vmatprep.subr.mxu0 0.0
    %2216 = vmatpush1.xpose.msra.mxu0 0.0
    %2217 = vmatprep.subr.mxu0 0.0
    %2218 = vmatpush1.xpose.msra.mxu0 0.0
    %2219 = vmatprep.subr.mxu0 0.0
    %2220 = vmatpush1.xpose.msra.mxu0 0.0
    %2221 = vmatprep.subr.mxu0 0.0
    %2222 = vmatpush1.xpose.msra.mxu0 0.0
    %2223 = vmatprep.subr.mxu0 0.0
    %2224 = vmatpush1.xpose.msra.mxu0 0.0
    %2225 = vmatprep.subr.mxu0 0.0
    %2226 = vmatpush1.xpose.msra.mxu0 0.0
    %2227 = vmatprep.subr.mxu0 0.0
    %2228 = vmatpush1.xpose.msra.mxu0 0.0
    %2229 = vmatprep.subr.mxu0 0.0
    %2230 = vmatpush1.xpose.msra.mxu0 0.0
    %2231 = vmatprep.subr.mxu0 0.0
    %2232 = vmatpush1.xpose.msra.mxu0 0.0
    %2233 = vmatprep.subr.mxu0 0.0
    %2234 = vmatpush1.xpose.msra.mxu0 0.0
    %2235 = vmatprep.subr.mxu0 0.0
    %2236 = vmatpush1.xpose.msra.mxu0 0.0
    %2237 = vmatprep.subr.mxu0 0.0
    %2238 = vmatpush1.xpose.msra.mxu0 0.0
    %2239 = vmatprep.subr.mxu0 0.0
    %2240 = vmatpush1.xpose.msra.mxu0 %v2213
    %2241 = vmatprep.subr.mxu0 0.0
    %2242 = vmatpush1.xpose.msra.mxu0 %v2211
    %2243 = vmatprep.subr.mxu0 0.0
    %2244 = vmatpush1.xpose.msra.mxu0 %v2209
    %2245 = vmatprep.subr.mxu0 0.0
    %2246 = vmatpush1.xpose.msra.mxu0 %v2207
    %2247 = vmatprep.subr.mxu0 0.0
    %2248 = vmatpush2.xpose.msra.mxu0 0.0
    %2249 = vmatprep.subr.mxu0 0.0
    %2250 = vmatpush2.xpose.msra.mxu0 0.0
    %2251 = vmatprep.subr.mxu0 0.0
    %2252 = vmatpush2.xpose.msra.mxu0 0.0
    %2253 = vmatprep.subr.mxu0 0.0
    %2254 = vmatpush2.xpose.msra.mxu0 0.0
    %2255 = vmatprep.subr.mxu0 0.0
    %2256 = vmatpush2.xpose.msra.mxu0 0.0
    %2257 = vmatprep.subr.mxu0 0.0
    %2258 = vmatpush2.xpose.msra.mxu0 0.0
    %2259 = vmatprep.subr.mxu0 0.0
    %2260 = vmatpush2.xpose.msra.mxu0 0.0
    %2261 = vmatprep.subr.mxu0 0.0
    %2262 = vmatpush2.xpose.msra.mxu0 0.0
    %2263 = vmatprep.subr.mxu0 0.0
    %2264 = vmatpush2.xpose.msra.mxu0 0.0
    %2265 = vmatprep.subr.mxu0 0.0
    %2266 = vmatpush2.xpose.msra.mxu0 0.0
    %2267 = vmatprep.subr.mxu0 0.0
    %2268 = vmatpush2.xpose.msra.mxu0 0.0
    %2269 = vmatprep.subr.mxu0 0.0
    %2270 = vmatpush2.xpose.msra.mxu0 0.0
    %2271 = vmatprep.subr.mxu0 0.0
    %2272 = vmatpush2.xpose.msra.mxu0 0.0
    %2273 = vmatprep.subr.mxu0 0.0
    %2274 = vmatpush2.xpose.msra.mxu0 0.0
    %2275 = vmatprep.subr.mxu0 0.0
    %2276 = vmatpush2.xpose.msra.mxu0 0.0
    %2277 = vmatprep.subr.mxu0 0.0
    %2278 = vmatpush2.xpose.msra.mxu0 0.0
    %2279 = vmatprep.mubr.f32.mxu0 0.0
    %2280 = vmatmul.mubr.f32.gmra.mxu0 %v2199
    %v2281 = vpop.f32.mrf.mxu0
    %v2282 = vadd.f32 0.0, %v2281
    %v2283 = vpop.f32.mrf.mxu0
    %2284 = vmatprep.mubr.f32.mxu0 0.0
    %2285 = vmatmul.mubr.f32.gmra.mxu0 %v2201
    %v2286 = vpop.f32.mrf.mxu0
    %v2287 = vadd.f32 0.0, %v2286
    %v2288 = vpop.f32.mrf.mxu0
    %2289 = vmatprep.mubr.f32.mxu0 0.0
    %2290 = vmatmul.mubr.f32.gmra.mxu0 %v2203
    %v2291 = vpop.f32.mrf.mxu0
    %v2292 = vadd.f32 0.0, %v2291
    %v2293 = vpop.f32.mrf.mxu0
    %2294 = vmatprep.mubr.f32.mxu0 0.0
    %2295 = vmatmul.mubr.f32.gmra.mxu0 %v2205
    %v2296 = vpop.f32.mrf.mxu0
    %v2297 = vadd.f32 0.0, %v2296
    %v2298 = vpop.f32.mrf.mxu0
    %2299 = vdwg.mxu0
    %2304 = vrot.lane.b32.xlu0 %v2099, 104
    %v2305 = vpop.permute.xlu0 %2304
    %2306 = vrot.lane.b32.xlu0 %v2100, 104
    %v2307 = vpop.permute.xlu0 %2306
    %2308 = vrot.lane.b32.xlu0 %v2101, 104
    %v2309 = vpop.permute.xlu0 %2308
    %2310 = vrot.lane.b32.xlu0 %v2102, 104
    %v2311 = vpop.permute.xlu0 %2310
    %2316 = vrot.lane.b32.xlu0 %v2171, 72
    %v2317 = vpop.permute.xlu0 %2316
    %2318 = vrot.lane.b32.xlu0 %v2172, 72
    %v2319 = vpop.permute.xlu0 %2318
    %2320 = vrot.lane.b32.xlu0 %v2173, 72
    %v2321 = vpop.permute.xlu0 %2320
    %2322 = vrot.lane.b32.xlu0 %v2174, 72
    %v2323 = vpop.permute.xlu0 %2322
    %v2324 = vsel %vm162, %v2305, 0
    %v2326 = vsel %vm162, %v2307, 0
    %v2328 = vsel %vm162, %v2309, 0
    %v2330 = vsel %vm162, %v2311, 0
    %v2332 = vsel %vm162, %v2317, 0
    %v2334 = vsel %vm162, %v2319, 0
    %v2336 = vsel %vm162, %v2321, 0
    %v2338 = vsel %vm162, %v2323, 0
    %2340 = vmatprep.subr.mxu0 0.0
    %2341 = vmatpush1.xpose.msra.mxu0 0.0
    %2342 = vmatprep.subr.mxu0 0.0
    %2343 = vmatpush1.xpose.msra.mxu0 0.0
    %2344 = vmatprep.subr.mxu0 0.0
    %2345 = vmatpush1.xpose.msra.mxu0 0.0
    %2346 = vmatprep.subr.mxu0 0.0
    %2347 = vmatpush1.xpose.msra.mxu0 0.0
    %2348 = vmatprep.subr.mxu0 0.0
    %2349 = vmatpush1.xpose.msra.mxu0 0.0
    %2350 = vmatprep.subr.mxu0 0.0
    %2351 = vmatpush1.xpose.msra.mxu0 0.0
    %2352 = vmatprep.subr.mxu0 0.0
    %2353 = vmatpush1.xpose.msra.mxu0 0.0
    %2354 = vmatprep.subr.mxu0 0.0
    %2355 = vmatpush1.xpose.msra.mxu0 0.0
    %2356 = vmatprep.subr.mxu0 0.0
    %2357 = vmatpush1.xpose.msra.mxu0 0.0
    %2358 = vmatprep.subr.mxu0 0.0
    %2359 = vmatpush1.xpose.msra.mxu0 0.0
    %2360 = vmatprep.subr.mxu0 0.0
    %2361 = vmatpush1.xpose.msra.mxu0 0.0
    %2362 = vmatprep.subr.mxu0 0.0
    %2363 = vmatpush1.xpose.msra.mxu0 0.0
    %2364 = vmatprep.subr.mxu0 0.0
    %2365 = vmatpush1.xpose.msra.mxu0 %v2338
    %2366 = vmatprep.subr.mxu0 0.0
    %2367 = vmatpush1.xpose.msra.mxu0 %v2336
    %2368 = vmatprep.subr.mxu0 0.0
    %2369 = vmatpush1.xpose.msra.mxu0 %v2334
    %2370 = vmatprep.subr.mxu0 0.0
    %2371 = vmatpush1.xpose.msra.mxu0 %v2332
    %2372 = vmatprep.subr.mxu0 0.0
    %2373 = vmatpush2.xpose.msra.mxu0 0.0
    %2374 = vmatprep.subr.mxu0 0.0
    %2375 = vmatpush2.xpose.msra.mxu0 0.0
    %2376 = vmatprep.subr.mxu0 0.0
    %2377 = vmatpush2.xpose.msra.mxu0 0.0
    %2378 = vmatprep.subr.mxu0 0.0
    %2379 = vmatpush2.xpose.msra.mxu0 0.0
    %2380 = vmatprep.subr.mxu0 0.0
    %2381 = vmatpush2.xpose.msra.mxu0 0.0
    %2382 = vmatprep.subr.mxu0 0.0
    %2383 = vmatpush2.xpose.msra.mxu0 0.0
    %2384 = vmatprep.subr.mxu0 0.0
    %2385 = vmatpush2.xpose.msra.mxu0 0.0
    %2386 = vmatprep.subr.mxu0 0.0
    %2387 = vmatpush2.xpose.msra.mxu0 0.0
    %2388 = vmatprep.subr.mxu0 0.0
    %2389 = vmatpush2.xpose.msra.mxu0 0.0
    %2390 = vmatprep.subr.mxu0 0.0
    %2391 = vmatpush2.xpose.msra.mxu0 0.0
    %2392 = vmatprep.subr.mxu0 0.0
    %2393 = vmatpush2.xpose.msra.mxu0 0.0
    %2394 = vmatprep.subr.mxu0 0.0
    %2395 = vmatpush2.xpose.msra.mxu0 0.0
    %2396 = vmatprep.subr.mxu0 0.0
    %2397 = vmatpush2.xpose.msra.mxu0 0.0
    %2398 = vmatprep.subr.mxu0 0.0
    %2399 = vmatpush2.xpose.msra.mxu0 0.0
    %2400 = vmatprep.subr.mxu0 0.0
    %2401 = vmatpush2.xpose.msra.mxu0 0.0
    %2402 = vmatprep.subr.mxu0 0.0
    %2403 = vmatpush2.xpose.msra.mxu0 0.0
    %2404 = vmatprep.mubr.f32.mxu0 0.0
    %2405 = vmatmul.mubr.f32.gmra.mxu0 %v2324
    %v2406 = vpop.f32.mrf.mxu0
    %v2407 = vadd.f32 0.0, %v2406
    %v2408 = vpop.f32.mrf.mxu0
    %2409 = vmatprep.mubr.f32.mxu0 0.0
    %2410 = vmatmul.mubr.f32.gmra.mxu0 %v2326
    %v2411 = vpop.f32.mrf.mxu0
    %v2412 = vadd.f32 0.0, %v2411
    %v2413 = vpop.f32.mrf.mxu0
    %2414 = vmatprep.mubr.f32.mxu0 0.0
    %2415 = vmatmul.mubr.f32.gmra.mxu0 %v2328
    %v2416 = vpop.f32.mrf.mxu0
    %v2417 = vadd.f32 0.0, %v2416
    %v2418 = vpop.f32.mrf.mxu0
    %2419 = vmatprep.mubr.f32.mxu0 0.0
    %2420 = vmatmul.mubr.f32.gmra.mxu0 %v2330
    %v2421 = vpop.f32.mrf.mxu0
    %v2422 = vadd.f32 0.0, %v2421
    %v2423 = vpop.f32.mrf.mxu0
    %2424 = vdwg.mxu0
    %s2425 = sld [smem:[#allocation2 + $0x3]]
    %v2426 = vstv %s2425
    %v2427 = vmul.f32 %v2282, %v2426
    %v2428 = vmul.f32 %v2287, %v2426
    %v2429 = vmul.f32 %v2292, %v2426
    %v2430 = vmul.f32 %v2297, %v2426
    %v2431 = vmul.f32 %v2407, %v2426
    %v2432 = vmul.f32 %v2412, %v2426
    %v2433 = vmul.f32 %v2417, %v2426
    %v2434 = vmul.f32 %v2422, %v2426
    %s2435 = scalar_lea.vmem %s5, 96
    %v2436 = vld [vmem:[%s2435] sm:$0xff]
    %v2437 = vld [vmem:[%s2435 + $0x8] sm:$0xff]
    %v2438 = vld [vmem:[%s2435 + $0x10] sm:$0xff]
    %v2439 = vld [vmem:[%s2435 + $0x18] sm:$0xff]
    %v2440 = vadd.f32 %v2427, %v2436
    %v2441 = vadd.f32 %v2428, %v2437
    %v2442 = vadd.f32 %v2429, %v2438
    %v2443 = vadd.f32 %v2430, %v2439
    %v2444 = vadd.f32 %v2431, %v2436
    %v2445 = vadd.f32 %v2432, %v2437
    %v2446 = vadd.f32 %v2433, %v2438
    %v2447 = vadd.f32 %v2434, %v2439
    %v2448 = vsel %vm76, %v2440, -inf
    %2449 = vmax.xlane.f32.xlu0 %v2448
    %v2450 = vpop.xlane.xlu0 %2449
    %v2451 = vsel %vm76, %v2441, -inf
    %2452 = vmax.xlane.f32.xlu0 %v2451
    %v2453 = vpop.xlane.xlu0 %2452
    %v2454 = vsel %vm76, %v2442, -inf
    %2455 = vmax.xlane.f32.xlu0 %v2454
    %v2456 = vpop.xlane.xlu0 %2455
    %v2457 = vsel %vm76, %v2443, -inf
    %2458 = vmax.xlane.f32.xlu0 %v2457
    %v2459 = vpop.xlane.xlu0 %2458
    %v2460 = vsel %vm76, %v2444, -inf
    %2461 = vmax.xlane.f32.xlu0 %v2460
    %v2462 = vpop.xlane.xlu0 %2461
    %v2463 = vsel %vm76, %v2445, -inf
    %2464 = vmax.xlane.f32.xlu0 %v2463
    %v2465 = vpop.xlane.xlu0 %2464
    %v2466 = vsel %vm76, %v2446, -inf
    %2467 = vmax.xlane.f32.xlu0 %v2466
    %v2468 = vpop.xlane.xlu0 %2467
    %v2469 = vsel %vm76, %v2447, -inf
    %2470 = vmax.xlane.f32.xlu0 %v2469
    %v2471 = vpop.xlane.xlu0 %2470
    %v2472 = vsub.f32 %v2440, %v2450
    %v2473 = vsub.f32 %v2441, %v2453
    %v2474 = vsub.f32 %v2442, %v2456
    %v2475 = vsub.f32 %v2443, %v2459
    %v2476 = vsub.f32 %v2444, %v2462
    %v2477 = vsub.f32 %v2445, %v2465
    %v2478 = vsub.f32 %v2446, %v2468
    %v2479 = vsub.f32 %v2447, %v2471
    %v2480 = vmul.f32 %v2472, 1.442695
    %v2481 = vpow.pop %v2480
    %v2482 = vmul.f32 %v2473, 1.442695
    %v2483 = vpow.pop %v2482
    %v2484 = vmul.f32 %v2474, 1.442695
    %v2485 = vpow.pop %v2484
    %v2486 = vmul.f32 %v2475, 1.442695
    %v2487 = vpow.pop %v2486
    %v2488 = vmul.f32 %v2476, 1.442695
    %v2489 = vpow.pop %v2488
    %v2490 = vmul.f32 %v2477, 1.442695
    %v2491 = vpow.pop %v2490
    %v2492 = vmul.f32 %v2478, 1.442695
    %v2493 = vpow.pop %v2492
    %v2494 = vmul.f32 %v2479, 1.442695
    %v2495 = vpow.pop %v2494
    %v2496 = vsel %vm76, %v2481, 0.0
    %2497 = vadd.xlane.f32.xlu0 %v2496
    %v2498 = vpop.xlane.xlu0 %2497
    %v2499 = vsel %vm76, %v2483, 0.0
    %2500 = vadd.xlane.f32.xlu0 %v2499
    %v2501 = vpop.xlane.xlu0 %2500
    %v2502 = vsel %vm76, %v2485, 0.0
    %2503 = vadd.xlane.f32.xlu0 %v2502
    %v2504 = vpop.xlane.xlu0 %2503
    %v2505 = vsel %vm76, %v2487, 0.0
    %2506 = vadd.xlane.f32.xlu0 %v2505
    %v2507 = vpop.xlane.xlu0 %2506
    %v2508 = vsel %vm76, %v2489, 0.0
    %2509 = vadd.xlane.f32.xlu0 %v2508
    %v2510 = vpop.xlane.xlu0 %2509
    %v2511 = vsel %vm76, %v2491, 0.0
    %2512 = vadd.xlane.f32.xlu0 %v2511
    %v2513 = vpop.xlane.xlu0 %2512
    %v2514 = vsel %vm76, %v2493, 0.0
    %2515 = vadd.xlane.f32.xlu0 %v2514
    %v2516 = vpop.xlane.xlu0 %2515
    %v2517 = vsel %vm76, %v2495, 0.0
    %2518 = vadd.xlane.f32.xlu0 %v2517
    %v2519 = vpop.xlane.xlu0 %2518
    %v2520 = vrcp.pop %v2498
    %v2521 = vrcp.pop %v2501
    %v2522 = vrcp.pop %v2504
    %v2523 = vrcp.pop %v2507
    %v2524 = vrcp.pop %v2510
    %v2525 = vrcp.pop %v2513
    %v2526 = vrcp.pop %v2516
    %v2527 = vrcp.pop %v2519
    %v2528 = vmul.f32 %v2481, %v2520
    %v2529 = vmul.f32 %v2483, %v2521
    %v2530 = vmul.f32 %v2485, %v2522
    %v2531 = vmul.f32 %v2487, %v2523
    %v2532 = vmul.f32 %v2489, %v2524
    %v2533 = vmul.f32 %v2491, %v2525
    %v2534 = vmul.f32 %v2493, %v2526
    %v2535 = vmul.f32 %v2495, %v2527
    %v2536 = vpack.c.bf16 %v2529, %v2528
    %v2537 = vpack.c.bf16 %v2531, %v2530
    %v2538 = vpack.c.bf16 %v2533, %v2532
    %v2539 = vpack.c.bf16 %v2535, %v2534
    %2540 = vrot.lane.b32.xlu0 %v639, 40
    %v2541 = vpop.permute.xlu0 %2540
    %2542 = vrot.lane.b32.xlu0 %v640, 40
    %v2543 = vpop.permute.xlu0 %2542
    %v2547 = vsel %vm76, %v2536, 0
    %v2550 = vsel %vm76, %v2537, 0
    %2552 = vmatprep.subr.bf16.mxu0 0
    %2553 = vmatpush1.bf16.msra.mxu0 0
    %2554 = vmatprep.subr.bf16.mxu0 0
    %2555 = vmatpush1.bf16.msra.mxu0 0
    %2556 = vmatprep.subr.bf16.mxu0 0
    %2557 = vmatpush1.bf16.msra.mxu0 0
    %2558 = vmatprep.subr.bf16.mxu0 0
    %2559 = vmatpush1.bf16.msra.mxu0 0
    %2560 = vmatprep.subr.bf16.mxu0 0
    %2561 = vmatpush1.bf16.msra.mxu0 0
    %2562 = vmatprep.subr.bf16.mxu0 0
    %2563 = vmatpush1.bf16.msra.mxu0 0
    %2564 = vmatprep.subr.bf16.mxu0 0
    %2565 = vmatpush1.bf16.msra.mxu0 %v2543
    %2566 = vmatprep.subr.bf16.mxu0 0
    %2567 = vmatpush1.bf16.msra.mxu0 %v2541
    %2568 = vmatprep.subr.bf16.mxu0 0
    %2569 = vmatpush2.bf16.msra.mxu0 0
    %2570 = vmatprep.subr.bf16.mxu0 0
    %2571 = vmatpush2.bf16.msra.mxu0 0
    %2572 = vmatprep.subr.bf16.mxu0 0
    %2573 = vmatpush2.bf16.msra.mxu0 0
    %2574 = vmatprep.subr.bf16.mxu0 0
    %2575 = vmatpush2.bf16.msra.mxu0 0
    %2576 = vmatprep.subr.bf16.mxu0 0
    %2577 = vmatpush2.bf16.msra.mxu0 0
    %2578 = vmatprep.subr.bf16.mxu0 0
    %2579 = vmatpush2.bf16.msra.mxu0 0
    %2580 = vmatprep.subr.bf16.mxu0 0
    %2581 = vmatpush2.bf16.msra.mxu0 0
    %2582 = vmatprep.subr.bf16.mxu0 0
    %2583 = vmatpush2.bf16.msra.mxu0 0
    %2584 = vmatprep.mubr.bf16.mxu0 0
    %2585 = vmatmul.mubr.bf16.gmra.mxu0 %v2547
    %v2586 = vpop.f32.mrf.mxu0
    %v2587 = vadd.f32 0.0, %v2586
    %v2588 = vpop.f32.mrf.mxu0
    %v2589 = vpop.f32.mrf.mxu0
    %v2590 = vadd.f32 0.0, %v2589
    %v2591 = vpop.f32.mrf.mxu0
    %2592 = vmatprep.mubr.bf16.mxu0 0
    %2593 = vmatmul.mubr.bf16.gmra.mxu0 %v2550
    %v2594 = vpop.f32.mrf.mxu0
    %v2595 = vadd.f32 0.0, %v2594
    %v2596 = vpop.f32.mrf.mxu0
    %v2597 = vpop.f32.mrf.mxu0
    %v2598 = vadd.f32 0.0, %v2597
    %v2599 = vpop.f32.mrf.mxu0
    %2600 = vdwg.mxu0
    %2601 = vrot.lane.b32.xlu0 %v641, 40
    %v2602 = vpop.permute.xlu0 %2601
    %2603 = vrot.lane.b32.xlu0 %v642, 40
    %v2604 = vpop.permute.xlu0 %2603
    %v2608 = vsel %vm76, %v2538, 0
    %v2611 = vsel %vm76, %v2539, 0
    %2613 = vmatprep.subr.bf16.mxu0 0
    %2614 = vmatpush1.bf16.msra.mxu0 0
    %2615 = vmatprep.subr.bf16.mxu0 0
    %2616 = vmatpush1.bf16.msra.mxu0 0
    %2617 = vmatprep.subr.bf16.mxu0 0
    %2618 = vmatpush1.bf16.msra.mxu0 0
    %2619 = vmatprep.subr.bf16.mxu0 0
    %2620 = vmatpush1.bf16.msra.mxu0 0
    %2621 = vmatprep.subr.bf16.mxu0 0
    %2622 = vmatpush1.bf16.msra.mxu0 0
    %2623 = vmatprep.subr.bf16.mxu0 0
    %2624 = vmatpush1.bf16.msra.mxu0 0
    %2625 = vmatprep.subr.bf16.mxu0 0
    %2626 = vmatpush1.bf16.msra.mxu0 %v2604
    %2627 = vmatprep.subr.bf16.mxu0 0
    %2628 = vmatpush1.bf16.msra.mxu0 %v2602
    %2629 = vmatprep.subr.bf16.mxu0 0
    %2630 = vmatpush2.bf16.msra.mxu0 0
    %2631 = vmatprep.subr.bf16.mxu0 0
    %2632 = vmatpush2.bf16.msra.mxu0 0
    %2633 = vmatprep.subr.bf16.mxu0 0
    %2634 = vmatpush2.bf16.msra.mxu0 0
    %2635 = vmatprep.subr.bf16.mxu0 0
    %2636 = vmatpush2.bf16.msra.mxu0 0
    %2637 = vmatprep.subr.bf16.mxu0 0
    %2638 = vmatpush2.bf16.msra.mxu0 0
    %2639 = vmatprep.subr.bf16.mxu0 0
    %2640 = vmatpush2.bf16.msra.mxu0 0
    %2641 = vmatprep.subr.bf16.mxu0 0
    %2642 = vmatpush2.bf16.msra.mxu0 0
    %2643 = vmatprep.subr.bf16.mxu0 0
    %2644 = vmatpush2.bf16.msra.mxu0 0
    %2645 = vmatprep.mubr.bf16.mxu0 0
    %2646 = vmatmul.mubr.bf16.gmra.mxu0 %v2608
    %v2647 = vpop.f32.mrf.mxu0
    %v2648 = vadd.f32 0.0, %v2647
    %v2649 = vpop.f32.mrf.mxu0
    %v2650 = vpop.f32.mrf.mxu0
    %v2651 = vadd.f32 0.0, %v2650
    %v2652 = vpop.f32.mrf.mxu0
    %2653 = vmatprep.mubr.bf16.mxu0 0
    %2654 = vmatmul.mubr.bf16.gmra.mxu0 %v2611
    %v2655 = vpop.f32.mrf.mxu0
    %v2656 = vadd.f32 0.0, %v2655
    %v2657 = vpop.f32.mrf.mxu0
    %v2658 = vpop.f32.mrf.mxu0
    %v2659 = vadd.f32 0.0, %v2658
    %v2660 = vpop.f32.mrf.mxu0
    %2661 = vdwg.mxu0
    %2670 = vrot.lane.b32.xlu0 %v1325, 8
    %v2671 = vpop.permute.xlu0 %2670
    %2672 = vrot.lane.b32.xlu0 %v1328, 8
    %v2673 = vpop.permute.xlu0 %2672
    %2674 = vrot.lane.b32.xlu0 %v1333, 8
    %v2675 = vpop.permute.xlu0 %2674
    %2676 = vrot.lane.b32.xlu0 %v1336, 8
    %v2677 = vpop.permute.xlu0 %2676
    %2678 = vrot.lane.b32.xlu0 %v1386, 8
    %v2679 = vpop.permute.xlu0 %2678
    %2680 = vrot.lane.b32.xlu0 %v1389, 8
    %v2681 = vpop.permute.xlu0 %2680
    %2682 = vrot.lane.b32.xlu0 %v1394, 8
    %v2683 = vpop.permute.xlu0 %2682
    %2684 = vrot.lane.b32.xlu0 %v1397, 8
    %v2685 = vpop.permute.xlu0 %2684
    %2702 = vrot.lane.b32.xlu0 %v1956, 16
    %v2703 = vpop.permute.xlu0 %2702
    %2704 = vrot.lane.b32.xlu0 %v1959, 16
    %v2705 = vpop.permute.xlu0 %2704
    %2706 = vrot.lane.b32.xlu0 %v1964, 16
    %v2707 = vpop.permute.xlu0 %2706
    %2708 = vrot.lane.b32.xlu0 %v1967, 16
    %v2709 = vpop.permute.xlu0 %2708
    %2710 = vrot.lane.b32.xlu0 %v2017, 16
    %v2711 = vpop.permute.xlu0 %2710
    %2712 = vrot.lane.b32.xlu0 %v2020, 16
    %v2713 = vpop.permute.xlu0 %2712
    %2714 = vrot.lane.b32.xlu0 %v2025, 16
    %v2715 = vpop.permute.xlu0 %2714
    %2716 = vrot.lane.b32.xlu0 %v2028, 16
    %v2717 = vpop.permute.xlu0 %2716
    %2734 = vrot.lane.b32.xlu0 %v2587, 24
    %v2735 = vpop.permute.xlu0 %2734
    %2736 = vrot.lane.b32.xlu0 %v2590, 24
    %v2737 = vpop.permute.xlu0 %2736
    %2738 = vrot.lane.b32.xlu0 %v2595, 24
    %v2739 = vpop.permute.xlu0 %2738
    %2740 = vrot.lane.b32.xlu0 %v2598, 24
    %v2741 = vpop.permute.xlu0 %2740
    %2742 = vrot.lane.b32.xlu0 %v2648, 24
    %v2743 = vpop.permute.xlu0 %2742
    %2744 = vrot.lane.b32.xlu0 %v2651, 24
    %v2745 = vpop.permute.xlu0 %2744
    %2746 = vrot.lane.b32.xlu0 %v2656, 24
    %v2747 = vpop.permute.xlu0 %2746
    %2748 = vrot.lane.b32.xlu0 %v2659, 24
    %v2749 = vpop.permute.xlu0 %2748
    %v2758 = vsel %vm162, %v692, %v2671
    %v2759 = vsel %vm162, %v695, %v2673
    %v2760 = vsel %vm162, %v700, %v2675
    %v2761 = vsel %vm162, %v703, %v2677
    %v2762 = vsel %vm162, %v755, %v2679
    %v2763 = vsel %vm162, %v758, %v2681
    %v2764 = vsel %vm162, %v763, %v2683
    %v2765 = vsel %vm162, %v766, %v2685
    %vm2766 = vcmask 130048
    %v2767 = vsel %vm2766, %v2758, %v2703
    %v2768 = vsel %vm2766, %v2759, %v2705
    %v2769 = vsel %vm2766, %v2760, %v2707
    %v2770 = vsel %vm2766, %v2761, %v2709
    %v2771 = vsel %vm2766, %v2762, %v2711
    %v2772 = vsel %vm2766, %v2763, %v2713
    %v2773 = vsel %vm2766, %v2764, %v2715
    %v2774 = vsel %vm2766, %v2765, %v2717
    %vm2775 = vcmask 195584
    %v2776 = vsel %vm2775, %v2767, %v2735
    %v2777 = vsel %vm2775, %v2768, %v2737
    %v2778 = vsel %vm2775, %v2769, %v2739
    %v2779 = vsel %vm2775, %v2770, %v2741
    %v2780 = vsel %vm2775, %v2771, %v2743
    %v2781 = vsel %vm2775, %v2772, %v2745
    %v2782 = vsel %vm2775, %v2773, %v2747
    %v2783 = vsel %vm2775, %v2774, %v2749
    %v2784 = vpack.c.bf16 %v2777, %v2776
    %v2785 = vpack.c.bf16 %v2779, %v2778
    %v2786 = vpack.c.bf16 %v2781, %v2780
    %v2787 = vpack.c.bf16 %v2783, %v2782
    %v2788 = vld [vmem:[%s3] sm:$0xf]
    %v2789 = vld [vmem:[%s3 + $0x4] sm:$0xf]
    %v2790 = vld [vmem:[%s3 + $0x8] sm:$0xf]
    %v2791 = vld [vmem:[%s3 + $0xc] sm:$0xf]
    %v2792 = vld [vmem:[%s4] sm:$0x1]
    %v2794 = vlaneseq
    %v2795 = vshrl.u32 %v2794, 7
    %v2796 = vsub.s32 0, %v2795
    %v2797 = vrot.slane %v2792, %v2796
    %v2803 = vunpack.c.l.b16 %v2788
    %v2804 = vunpack.c.l.b16 %v2789
    %v2805 = vunpack.c.l.b16 %v2790
    %v2806 = vunpack.c.l.b16 %v2791
    %v2807 = vpack.c.b16 %v2804, %v2803
    %v2808 = vpack.c.b16 %v2806, %v2805
    %v2812 = vsel %vm76, %v2784, 0
    %v2815 = vsel %vm76, %v2785, 0
    %v2818 = vsel %vm76, %v2786, 0
    %v2821 = vsel %vm76, %v2787, 0
    %2823 = vmatprep.subr.bf16.mxu0 0
    %2824 = vmatpush1.bf16.msra.mxu0 0
    %2825 = vmatprep.subr.bf16.mxu0 0
    %2826 = vmatpush1.bf16.msra.mxu0 0
    %2827 = vmatprep.subr.bf16.mxu0 0
    %2828 = vmatpush1.bf16.msra.mxu0 0
    %2829 = vmatprep.subr.bf16.mxu0 0
    %2830 = vmatpush1.bf16.msra.mxu0 0
    %2831 = vmatprep.subr.bf16.mxu0 0
    %2832 = vmatpush1.bf16.msra.mxu0 0
    %2833 = vmatprep.subr.bf16.mxu0 0
    %2834 = vmatpush1.bf16.msra.mxu0 0
    %2835 = vmatprep.subr.bf16.mxu0 0
    %2836 = vmatpush1.bf16.msra.mxu0 %v2808
    %2837 = vmatprep.subr.bf16.mxu0 0
    %2838 = vmatpush1.bf16.msra.mxu0 %v2807
    %2839 = vmatprep.subr.bf16.mxu0 0
    %2840 = vmatpush2.bf16.msra.mxu0 0
    %2841 = vmatprep.subr.bf16.mxu0 0
    %2842 = vmatpush2.bf16.msra.mxu0 0
    %2843 = vmatprep.subr.bf16.mxu0 0
    %2844 = vmatpush2.bf16.msra.mxu0 0
    %2845 = vmatprep.subr.bf16.mxu0 0
    %2846 = vmatpush2.bf16.msra.mxu0 0
    %2847 = vmatprep.subr.bf16.mxu0 0
    %2848 = vmatpush2.bf16.msra.mxu0 0
    %2849 = vmatprep.subr.bf16.mxu0 0
    %2850 = vmatpush2.bf16.msra.mxu0 0
    %2851 = vmatprep.subr.bf16.mxu0 0
    %2852 = vmatpush2.bf16.msra.mxu0 0
    %2853 = vmatprep.subr.bf16.mxu0 0
    %2854 = vmatpush2.bf16.msra.mxu0 0
    %2855 = vmatprep.mubr.bf16.mxu0 0
    %2856 = vmatmul.mubr.bf16.gmra.mxu0 %v2812
    %v2857 = vpop.f32.mrf.mxu0
    %v2858 = vadd.f32 %v2797, %v2857
    %v2859 = vpop.f32.mrf.mxu0
    %v2860 = vpop.f32.mrf.mxu0
    %v2861 = vadd.f32 %v2797, %v2860
    %v2862 = vpop.f32.mrf.mxu0
    %2863 = vmatprep.mubr.bf16.mxu0 0
    %2864 = vmatmul.mubr.bf16.gmra.mxu0 %v2815
    %v2865 = vpop.f32.mrf.mxu0
    %v2866 = vadd.f32 %v2797, %v2865
    %v2867 = vpop.f32.mrf.mxu0
    %v2868 = vpop.f32.mrf.mxu0
    %v2869 = vadd.f32 %v2797, %v2868
    %v2870 = vpop.f32.mrf.mxu0
    %2871 = vmatprep.mubr.bf16.mxu0 0
    %2872 = vmatmul.mubr.bf16.gmra.mxu0 %v2818
    %v2873 = vpop.f32.mrf.mxu0
    %v2874 = vadd.f32 %v2797, %v2873
    %v2875 = vpop.f32.mrf.mxu0
    %v2876 = vpop.f32.mrf.mxu0
    %v2877 = vadd.f32 %v2797, %v2876
    %v2878 = vpop.f32.mrf.mxu0
    %2879 = vmatprep.mubr.bf16.mxu0 0
    %2880 = vmatmul.mubr.bf16.gmra.mxu0 %v2821
    %v2881 = vpop.f32.mrf.mxu0
    %v2882 = vadd.f32 %v2797, %v2881
    %v2883 = vpop.f32.mrf.mxu0
    %v2884 = vpop.f32.mrf.mxu0
    %v2885 = vadd.f32 %v2797, %v2884
    %v2886 = vpop.f32.mrf.mxu0
    %2887 = vdwg.mxu0
    %2888 = vst.msk [vmem:[#allocation5] sm:$0xff] %vm76, %v2858
    %2889 = vst.msk [vmem:[#allocation5 + $0x8] sm:$0xff] %vm76, %v2861
    %2890 = vst.msk [vmem:[#allocation5 + $0x10] sm:$0xff] %vm76, %v2866
    %2891 = vst.msk [vmem:[#allocation5 + $0x18] sm:$0xff] %vm76, %v2869
    %2892 = vst.msk [vmem:[#allocation5 + $0x20] sm:$0xff] %vm76, %v2874
    %2893 = vst.msk [vmem:[#allocation5 + $0x28] sm:$0xff] %vm76, %v2877
    %2894 = vst.msk [vmem:[#allocation5 + $0x30] sm:$0xff] %vm76, %v2882
    %2895 = vst.msk [vmem:[#allocation5 + $0x38] sm:$0xff] %vm76, %v2885
    // Predicated region
    $region34: #{window_attention_pseudo3d.1} parent=1 // pred_check
      _
    $region35: #{window_attention_pseudo3d.1} parent=1 // pred_check_branch
      %2897 = sbr.rel (0) target = $region37
    $region36: #{window_attention_pseudo3d.1} parent=1 // pred_region
      %s2899 = ssub.s32 1024, 1024
      %2900 = vsyncadd [#allocation3], %s2899
      %s2901 = sshll.u32 [#allocation5], 4
      %s2902 = int_to_ptr.vmem [resolvable:$true] %s2901
      %2907 = dma.vmem_to_hbm [thread:$0]  %s2902, 1024, %s7, [#allocation3], 128, 128, 8
    $region37: #{window_attention_pseudo3d.1} parent=1 // pred_fallthru
      _
    // Predicated region
    $region38: #{window_attention_pseudo3d.1} parent=1 // pred_check
      _
    $region39: #{window_attention_pseudo3d.1} parent=1 // pred_check_branch
      %2909 = sbr.rel (0) target = $region41
    $region40: #{window_attention_pseudo3d.1} parent=1 // pred_region
      %2910 = dma.done [#allocation3], 1024
    $region41: #{window_attention_pseudo3d.1} parent=1 // pred_fallthru
      _
    %2911 = vsyncpa [#allocation3], 1
    %2912 = vsyncpa [#allocation4], 1

</llo_original>
